<compile_context>
chip_gen: v7x
topology: tpu7x:2x2x1
jax: 0.10.0
libtpu: 0.0.40
codegen_flags: <defaults>
</compile_context>

<pallas_src>
import functools
import math

import jax
import jax.numpy as jnp
from jax import lax
from jax.experimental import pallas as pl
from jax.experimental.pallas import tpu as pltpu

SAMPLE_RATE = 16000
N_FFT = 512
HOP = N_FFT // 2              # torchaudio default hop_length = win_length // 2
N_FREQ = N_FFT // 2 + 1       # 257 (onesided)
N_FREQ_PAD = 384              # lane-dense padding (multiple of 128)
N_MELS = 96
N_MELS_PAD = 128              # lane-dense padding
N_CLASS = 50
N_CLASS_PAD = 128             # lane-dense padding for the final output store
F_MIN = 0.0
F_MAX = 8000.0
BN_EPS = 1e-5


# --------------------------------------------------------------------------------------
# Constant tables (hann window, fused real-DFT matrix split for bf16x3, HTK mel filterbank).
# All matrices are zero-padded to lane-dense widths; zero columns/rows contribute nothing.
# --------------------------------------------------------------------------------------
def _hann_window():
    n = jnp.arange(N_FFT, dtype=jnp.float32)
    return (0.5 - 0.5 * jnp.cos(2.0 * math.pi * n / N_FFT))[None, :]          # (1, n_fft)


def _trig_matrices():
    n = jnp.arange(N_FFT, dtype=jnp.float32)[:, None]
    k = jnp.arange(N_FREQ, dtype=jnp.float32)[None, :]
    ang = 2.0 * math.pi * n * k / N_FFT
    cos = jnp.pad(jnp.cos(ang), ((0, 0), (0, N_FREQ_PAD - N_FREQ)))
    sin = jnp.pad(jnp.sin(ang), ((0, 0), (0, N_FREQ_PAD - N_FREQ)))
    trig = jnp.concatenate([cos, sin], axis=1)                                # (n_fft, 2*384)
    hi = trig.astype(jnp.bfloat16)
    lo = (trig - hi.astype(jnp.float32)).astype(jnp.bfloat16)                 # bf16x3 split
    return hi, lo


def _mel_filterbank_padded():
    # torchaudio melscale_fbanks, mel_scale="htk", norm=None
    all_freqs = jnp.linspace(0.0, SAMPLE_RATE // 2, N_FREQ)
    hz_to_mel = lambda f: 2595.0 * jnp.log10(1.0 + f / 700.0)
    mel_to_hz = lambda m: 700.0 * (10.0 ** (m / 2595.0) - 1.0)
    m_pts = jnp.linspace(hz_to_mel(jnp.float32(F_MIN)), hz_to_mel(jnp.float32(F_MAX)),
                         N_MELS + 2)
    f_pts = mel_to_hz(m_pts)
    f_diff = f_pts[1:] - f_pts[:-1]
    slopes = f_pts[None, :] - all_freqs[:, None]                              # (n_freq, n_mels+2)
    down = -slopes[:, :-2] / f_diff[:-1]
    up = slopes[:, 2:] / f_diff[1:]
    fb = jnp.maximum(0.0, jnp.minimum(down, up)).astype(jnp.float32)          # (257, 96)
    return jnp.pad(fb, ((0, N_FREQ_PAD - N_FREQ), (0, N_MELS_PAD - N_MELS)))  # (384, 128)


# --------------------------------------------------------------------------------------
# Kernel 1: windowing + DFT power spectrum + mel projection + AmplitudeToDB + spec_bn.
# Lane-dense: freq padded to 384, mels padded to 128 (sliced back to 96 outside).
# --------------------------------------------------------------------------------------
def _spec_kernel(frames_ref, win_ref, thi_ref, tlo_ref, fb_ref, o_ref, *, bn_scale):
    f = frames_ref[...] * win_ref[...]                                        # (rb, n_fft) f32
    f_hi = f.astype(jnp.bfloat16)
    f_lo = (f - f_hi.astype(jnp.float32)).astype(jnp.bfloat16)
    t_hi = thi_ref[...]
    t_lo = tlo_ref[...]
    # bf16x3 split (numerically ~ Precision.HIGH): 3 native bf16 MXU passes instead of the
    # 6-pass HIGHEST f32 emulation used previously.
    spec = (jnp.dot(f_hi, t_hi, preferred_element_type=jnp.float32)
            + jnp.dot(f_lo, t_hi, preferred_element_type=jnp.float32)
            + jnp.dot(f_hi, t_lo, preferred_element_type=jnp.float32))        # (rb, 2*384)
    re = spec[:, :N_FREQ_PAD]
    im = spec[:, N_FREQ_PAD:]
    power = re * re + im * im                                                 # (rb, 384)
    # mel projection: all-positive operands, no cancellation -> single-pass MXU precision is ample
    mel = jnp.dot(power, fb_ref[...], preferred_element_type=jnp.float32)     # (rb, 128)
    # AmplitudeToDB (stype="power"): 10*log10(clamp(x, 1e-10)), ref=1.0, top_db=None
    db = jnp.log(jnp.maximum(mel, 1e-10)) * (10.0 / math.log(10.0))
    # spec_bn: BatchNorm2d(1) eval mode with default stats -> x / sqrt(1 + eps)
    o_ref[...] = db * bn_scale


def _row_block(r):
    # largest divisor of r that is a multiple of 8 and <= 256 (full r if none)
    for rb in (256, 240, 192, 160, 128, 120, 96, 80, 64, 56, 48, 40, 32, 24, 16, 8):
        if r % rb == 0:
            return rb
    return r


def mel_spec_db(frames, window, trig_hi, trig_lo, melfb):
    R = frames.shape[0]
    rb = _row_block(R)
    return pl.pallas_call(
        functools.partial(_spec_kernel, bn_scale=1.0 / math.sqrt(1.0 + BN_EPS)),
        out_shape=jax.ShapeDtypeStruct((R, N_MELS_PAD), jnp.float32),
        grid=(R // rb,),
        in_specs=[
            pl.BlockSpec((rb, N_FFT), lambda i: (i, 0)),
            pl.BlockSpec((1, N_FFT), lambda i: (0, 0)),
            pl.BlockSpec((N_FFT, 2 * N_FREQ_PAD), lambda i: (0, 0)),
            pl.BlockSpec((N_FFT, 2 * N_FREQ_PAD), lambda i: (0, 0)),
            pl.BlockSpec((N_FREQ_PAD, N_MELS_PAD), lambda i: (0, 0)),
        ],
        out_specs=pl.BlockSpec((rb, N_MELS_PAD), lambda i: (i, 0)),
        compiler_params=pltpu.CompilerParams(dimension_semantics=("parallel",)),
    )(frames, window, trig_hi, trig_lo, melfb)


# --------------------------------------------------------------------------------------
# Kernel 2: fused conv stack.  One grid step = one batch element; all four Conv_2d blocks
# plus Linear + Sigmoid run back-to-back with activations held in zero-halo VMEM scratch.
# --------------------------------------------------------------------------------------
def _conv_block(x_ref, w_ref, sb_ref, z_ref, y_ref, *, H, W, Cin, Cout, ph, pw):
    """Conv_2d block on an NHWC zero-halo input: 3x3 conv (pad 1) + folded BN + ReLU +
    MaxPool2d((ph, pw)) with floor semantics.

    x_ref : (H+2, W+2, Cin)    zero-halo NHWC input
    w_ref : (9*Cin, Cout)      HWIO weight flattened as (kh, kw, cin) x cout
    sb_ref: (2, Cout)          row 0 = folded BN scale, row 1 = folded bias
    z_ref : (W, Cout)          scratch used only for the strided W max-pool (None if Wo == 1)
    y_ref : (Ho+2, Wo+2, Cout) next layer's zero-halo buffer; None -> return the pooled row
    """
    del Cin
    Ho, Wo = H // ph, W // pw                   # MaxPool2d floor semantics
    scale = sb_ref[0:1, :]
    bias = sb_ref[1:2, :]
    zrow = jnp.zeros((1, Cout), jnp.float32)
    for ho in range(Ho):
        zh = None
        for r in range(ph):                     # running max over the H pool window
            h = ho * ph + r
            # im2col for one conv row, assembled fully in registers (no VMEM staging buffer).
            patch = jnp.concatenate(
                [x_ref[h + kh, pl.ds(kw, W), :] for kh in range(3) for kw in range(3)],
                axis=-1)                                                        # (W, 9*Cin)
            y = jnp.dot(patch, w_ref[...], preferred_element_type=jnp.float32)  # (W, Cout)
            y = jnp.maximum(y * scale + bias, 0.0)
            zh = y if zh is None else jnp.maximum(zh, y)
        if Wo == 1:                              # full-width pool: plain sublane reduction
            pooled = jnp.max(zh, axis=0, keepdims=True)                         # (1, Cout)
        else:                                    # W max-pool via strided sublane reads
            z_ref[...] = zh
            pooled = z_ref[pl.ds(0, Wo, pw), :]
            for pj in range(1, pw):
                pooled = jnp.maximum(pooled, z_ref[pl.ds(pj, Wo, pw), :])       # (Wo, Cout)
        if y_ref is None:                        # final block: returns the flattened features
            return pooled
        # full-row store with the left/right halo zeros fused in
        y_ref[1 + ho] = jnp.concatenate([zrow, pooled, zrow], axis=0)
    return None


def _fused_cnn_kernel(x0_ref, w1t_ref, w2_ref, w3_ref, w4_ref,
                      sb1_ref, sb2_ref, sb3_ref, sb4_ref, lw_ref, lb_ref,
                      o_ref, a1_ref, a2_ref, a3_ref, z1_ref, z2_ref, z3_ref, *, dims):
    d1, d2, d3, d4 = dims

    # Zero only the top/bottom halo rows of the inter-layer buffers; interior rows (with their
    # side halos) are fully rewritten below every grid step -> correct under megacore sharding.
    a1_ref[0] = jnp.zeros((d2["W"] + 2, d2["Cin"]), jnp.float32)
    a1_ref[d2["H"] + 1] = jnp.zeros((d2["W"] + 2, d2["Cin"]), jnp.float32)
    a2_ref[0] = jnp.zeros((d3["W"] + 2, d3["Cin"]), jnp.float32)
    a2_ref[d3["H"] + 1] = jnp.zeros((d3["W"] + 2, d3["Cin"]), jnp.float32)
    a3_ref[0] = jnp.zeros((d4["W"] + 2, d4["Cin"]), jnp.float32)
    a3_ref[d4["H"] + 1] = jnp.zeros((d4["W"] + 2, d4["Cin"]), jnp.float32)

    # ---- layer 1 (Cin = 1): channel-major conv so the lane-dense 2-D image feeds the MXU ----
    H1, W1, C1, ph1, pw1 = d1["H"], d1["W"], d1["Cout"], d1["ph"], d1["pw"]
    Ho1, Wo1 = H1 // ph1, W1 // pw1
    w1t = w1t_ref[...]                   # (C1, 9)
    s1 = sb1_ref[:, 0:1]                 # (C1, 1) folded BN scale
    b1 = sb1_ref[:, 1:2]                 # (C1, 1) folded bias
    zrow1 = jnp.zeros((1, C1), jnp.float32)

    def l1_pool_row(ho, carry):
        xr = x0_ref[pl.ds(ph1 * ho, ph1 + 2), :]               # (ph+2, W1+2) input slab
        zh = jnp.full((C1, W1), -jnp.inf, jnp.float32)
        for r in range(ph1):                                   # running max over the H pool
            patch_t = jnp.concatenate(
                [xr[r + kh:r + kh + 1, kw:kw + W1]
                 for kh in range(3) for kw in range(3)], axis=0)                 # (9, W1)
            y = jnp.dot(w1t, patch_t, preferred_element_type=jnp.float32)        # (C1, W1)
            zh = jnp.maximum(zh, jnp.maximum(y * s1 + b1, 0.0))
        z1_ref[...] = jnp.transpose(zh)                        # (W1, C1): back to NHWC rows
        pooled = z1_ref[pl.ds(0, Wo1, pw1), :]                 # strided W max-pool
        for pj in range(1, pw1):
            pooled = jnp.maximum(pooled, z1_ref[pl.ds(pj, Wo1, pw1), :])
        a1_ref[1 + ho] = jnp.concatenate([zrow1, pooled, zrow1], axis=0)
        return carry

    lax.fori_loop(0, Ho1, l1_pool_row, 0)

    # ---- layers 2..4: deep-K im2col dots with in-register patches ----------------------------
    _conv_block(a1_ref, w2_ref, sb2_ref, z2_ref, a2_ref, **d2)
    _conv_block(a2_ref, w3_ref, sb3_ref, z3_ref, a3_ref, **d3)
    feat = _conv_block(a3_ref, w4_ref, sb4_ref, None, None, **d4)               # (1, 64)

    # Linear(64 -> n_class, lane-padded to 128) + Sigmoid.
    logits = jnp.dot(feat, lw_ref[...], preferred_element_type=jnp.float32) + lb_ref[...]
    o_ref[...] = 1.0 / (1.0 + jnp.exp(-logits))


def fused_cnn(x0, params):
    """x0: (B, H0+2, W0+2) zero-halo dB mel-spectrogram image (mel = rows, time = lanes)."""
    B, Hp2, Wp2 = x0.shape
    H, W = Hp2 - 2, Wp2 - 2

    names = ("layer1", "layer2", "layer3", "layer4")
    dims, ws, sbs = [], [], []
    cin = 1
    for i, name in enumerate(names):
        p = params[name]
        ph, pw = p["pool"]
        w = p["w"]                                              # (3, 3, cin, cout) HWIO
        cout = w.shape[-1]
        if i == 0:
            ws.append(jnp.transpose(w.reshape(9, cout)))        # (cout, 9) channel-major layer 1
            sbs.append(jnp.stack([p["scale"], p["bias"]], axis=1))   # (cout, 2)
        else:
            ws.append(w.reshape(9 * cin, cout))                 # (9*cin, cout)
            sbs.append(jnp.stack([p["scale"], p["bias"]], axis=0))   # (2, cout)
        dims.append(dict(H=H, W=W, Cin=cin, Cout=cout, ph=ph, pw=pw))
        H, W, cin = H // ph, W // pw, cout
    assert (H, W) == (1, 1), (H, W)              # final spatial must be 1x1 (flatten -> (B, 64))

    lw = jnp.pad(params["linear_w"], ((0, 0), (0, N_CLASS_PAD - N_CLASS)))
    lb = jnp.pad(params["linear_b"], ((0, 0), (0, N_CLASS_PAD - N_CLASS)))

    d1, d2, d3, d4 = dims
    scratch = [
        pltpu.VMEM((d2["H"] + 2, d2["W"] + 2, d2["Cin"]), jnp.float32),   # a1: layer1 out (+halo)
        pltpu.VMEM((d3["H"] + 2, d3["W"] + 2, d3["Cin"]), jnp.float32),   # a2
        pltpu.VMEM((d4["H"] + 2, d4["W"] + 2, d4["Cin"]), jnp.float32),   # a3
        pltpu.VMEM((d1["W"], d1["Cout"]), jnp.float32),                   # z1: W-pool row buffer
        pltpu.VMEM((d2["W"], d2["Cout"]), jnp.float32),                   # z2
        pltpu.VMEM((d3["W"], d3["Cout"]), jnp.float32),                   # z3
    ]

    kernel = functools.partial(_fused_cnn_kernel, dims=tuple(dims))
    out = pl.pallas_call(
        kernel,
        out_shape=jax.ShapeDtypeStruct((B, 1, N_CLASS_PAD), jnp.float32),
        grid=(B,),
        in_specs=[
            pl.BlockSpec((None, Hp2, Wp2), lambda b: (b, 0, 0)),
            pl.BlockSpec(ws[0].shape, lambda b: (0, 0)),
            pl.BlockSpec(ws[1].shape, lambda b: (0, 0)),
            pl.BlockSpec(ws[2].shape, lambda b: (0, 0)),
            pl.BlockSpec(ws[3].shape, lambda b: (0, 0)),
            pl.BlockSpec(sbs[0].shape, lambda b: (0, 0)),
            pl.BlockSpec(sbs[1].shape, lambda b: (0, 0)),
            pl.BlockSpec(sbs[2].shape, lambda b: (0, 0)),
            pl.BlockSpec(sbs[3].shape, lambda b: (0, 0)),
            pl.BlockSpec(lw.shape, lambda b: (0, 0)),
            pl.BlockSpec(lb.shape, lambda b: (0, 0)),
        ],
        out_specs=pl.BlockSpec((None, 1, N_CLASS_PAD), lambda b: (b, 0, 0)),
        scratch_shapes=scratch,
        # total VMEM is now ~4-5 MiB, well under the default scoped limit on v5e/v6e/v7x,
        # so no vmem_limit_bytes override and default (double-buffered) weight pipelining.
        compiler_params=pltpu.CompilerParams(dimension_semantics=("parallel",)),
    )(x0, ws[0], ws[1], ws[2], ws[3], sbs[0], sbs[1], sbs[2], sbs[3], lw, lb)
    return out[:, 0, :N_CLASS]


# --------------------------------------------------------------------------------------
# Parameters (deterministic synthetic init) and forward pass glue.
# --------------------------------------------------------------------------------------
def init_params(key):
    params = {}
    layer_defs = [("layer1", 1, 64, (4, 4)),
                  ("layer2", 64, 128, (3, 3)),
                  ("layer3", 128, 128, (3, 3)),
                  ("layer4", 128, 64, (2, 5))]
    keys = jax.random.split(key, len(layer_defs) + 1)
    for (name, cin, cout, pool), k in zip(layer_defs, keys[:-1]):
        k1, k2, k3, k4 = jax.random.split(k, 4)
        w = jax.random.normal(k1, (3, 3, cin, cout), jnp.float32) * math.sqrt(2.0 / (9 * cin))
        conv_b = 0.01 * jax.random.normal(k2, (cout,), jnp.float32)
        gamma = 1.0 + 0.1 * jax.random.normal(k3, (cout,), jnp.float32)
        beta = 0.1 * jax.random.normal(k4, (cout,), jnp.float32)
        # eval-mode BN (running_mean=0, running_var=1) folded with conv bias
        scale = gamma / jnp.sqrt(1.0 + BN_EPS)
        bias = scale * conv_b + beta
        params[name] = dict(w=w, scale=scale, bias=bias, pool=pool)
    kl1, kl2 = jax.random.split(keys[-1])
    bound = 1.0 / math.sqrt(64.0)
    params["linear_w"] = jax.random.uniform(kl1, (64, N_CLASS), jnp.float32, -bound, bound)
    params["linear_b"] = jax.random.uniform(kl2, (1, N_CLASS), jnp.float32, -bound, bound)
    return params


def cnn2d_forward(x, params, consts):
    # x: (B, 1, L) waveform
    B = x.shape[0]
    wav = x[:, 0, :]
    L = wav.shape[1]
    T = 1 + L // HOP
    # torchaudio Spectrogram: center=True, reflect pad by n_fft//2, hop=n_fft//2
    padded = jnp.pad(wav, ((0, 0), (N_FFT // 2, N_FFT // 2)), mode="reflect")
    idx = jnp.arange(T)[:, None] * HOP + jnp.arange(N_FFT)[None, :]
    frames = padded[:, idx].reshape(B * T, N_FFT)

    db = mel_spec_db(frames, consts["window"], consts["trig_hi"], consts["trig_lo"],
                     consts["melfb"])                                          # (B*T, 128)
    # TODO(synk): this slice/transpose/pad glue (~0.3 MiB) could be fused into the spec kernel's
    #             out_spec; kept in XLA now that the 16x lane-padded x0 write it replaced is gone.
    spec_img = jnp.transpose(db[:, :N_MELS].reshape(B, T, N_MELS), (0, 2, 1))  # (B, 96, T)
    x0 = jnp.pad(spec_img, ((0, 0), (1, 1), (1, 1)))                           # zero conv halo

    return fused_cnn(x0, params)                                               # (B, n_class)


if __name__ == "__main__":
    key = jax.random.PRNGKey(0)
    kx, kp = jax.random.split(key)
    B = 2
    T_FRAMES = 180                        # smallest frame count giving 1x1 final spatial
    L = (T_FRAMES - 1) * HOP              # 45824 samples (~2.9 s at 16 kHz)
    x = jax.random.normal(kx, (B, 1, L), jnp.float32)

    params = init_params(kp)
    trig_hi, trig_lo = _trig_matrices()
    consts = dict(window=_hann_window(), trig_hi=trig_hi, trig_lo=trig_lo,
                  melfb=_mel_filterbank_padded())

    out = cnn2d_forward(x, params, consts)
    out = jax.block_until_ready(out)
    assert out.shape == (B, N_CLASS), out.shape
    assert bool(jnp.all(jnp.isfinite(out)))
    assert bool(jnp.all((out >= 0.0) & (out <= 1.0)))
    print("KERNEL_OK")
</pallas_src>

<mosaic_0001>
module attributes {stable_mosaic.version = 11 : i64} {
  func.func @_spec_kernel(%arg0: i32, %arg1: memref<120x512xf32, #tpu.memory_space<vmem>>, %arg2: memref<1x512xf32, #tpu.memory_space<vmem>>, %arg3: memref<512x768xbf16, #tpu.memory_space<vmem>>, %arg4: memref<512x768xbf16, #tpu.memory_space<vmem>>, %arg5: memref<384x128xf32, #tpu.memory_space<vmem>>, %arg6: memref<120x128xf32, #tpu.memory_space<vmem>>) attributes {dimension_semantics = [#tpu.dimension_semantics<parallel>], iteration_bounds = array<i64: 3>, scalar_prefetch = 0 : i64, scratch_operands = 0 : i64, tpu.core_type = #tpu.core_type<tc>, window_params = [{transform_indices = @transform_0, window_bounds = array<i64: 120, 512>}, {pipeline_mode = #tpu.pipeline_mode<synchronous>, transform_indices = @transform_1, window_bounds = array<i64: 1, 512>}, {pipeline_mode = #tpu.pipeline_mode<synchronous>, transform_indices = @transform_2, window_bounds = array<i64: 512, 768>}, {pipeline_mode = #tpu.pipeline_mode<synchronous>, transform_indices = @transform_3, window_bounds = array<i64: 512, 768>}, {pipeline_mode = #tpu.pipeline_mode<synchronous>, transform_indices = @transform_4, window_bounds = array<i64: 384, 128>}, {transform_indices = @transform_5, window_bounds = array<i64: 120, 128>}]} {
    %c0 = arith.constant 0 : index
    %c0_0 = arith.constant 0 : index
    %0 = vector.load %arg1[%c0, %c0_0] : memref<120x512xf32, #tpu.memory_space<vmem>>, vector<120x512xf32>
    %c0_1 = arith.constant 0 : index
    %c0_2 = arith.constant 0 : index
    %1 = vector.load %arg2[%c0_1, %c0_2] : memref<1x512xf32, #tpu.memory_space<vmem>>, vector<1x512xf32>
    %2 = vector.broadcast %1 : vector<1x512xf32> to vector<120x512xf32>
    %3 = arith.mulf %0, %2 : vector<120x512xf32>
    %4 = arith.truncf %3 : vector<120x512xf32> to vector<120x512xbf16>
    %5 = arith.extf %4 : vector<120x512xbf16> to vector<120x512xf32>
    %6 = arith.subf %3, %5 : vector<120x512xf32>
    %7 = arith.truncf %6 : vector<120x512xf32> to vector<120x512xbf16>
    %c0_3 = arith.constant 0 : index
    %c0_4 = arith.constant 0 : index
    %8 = vector.load %arg3[%c0_3, %c0_4] : memref<512x768xbf16, #tpu.memory_space<vmem>>, vector<512x768xbf16>
    %c0_5 = arith.constant 0 : index
    %c0_6 = arith.constant 0 : index
    %9 = vector.load %arg4[%c0_5, %c0_6] : memref<512x768xbf16, #tpu.memory_space<vmem>>, vector<512x768xbf16>
    %cst = arith.constant dense<0.000000e+00> : vector<120x768xf32>
    %10 = tpu.matmul %4, %8, %cst {dimension_numbers = #tpu.dot_dimension_numbers<[1], [0], [0], [1], [0, 0, 1, 1], [], []>} : vector<120x512xbf16>, vector<512x768xbf16>, vector<120x768xf32> -> vector<120x768xf32>
    %cst_7 = arith.constant dense<0.000000e+00> : vector<120x768xf32>
    %11 = tpu.matmul %7, %8, %cst_7 {dimension_numbers = #tpu.dot_dimension_numbers<[1], [0], [0], [1], [0, 0, 1, 1], [], []>} : vector<120x512xbf16>, vector<512x768xbf16>, vector<120x768xf32> -> vector<120x768xf32>
    %12 = arith.addf %10, %11 : vector<120x768xf32>
    %cst_8 = arith.constant dense<0.000000e+00> : vector<120x768xf32>
    %13 = tpu.matmul %4, %9, %cst_8 {dimension_numbers = #tpu.dot_dimension_numbers<[1], [0], [0], [1], [0, 0, 1, 1], [], []>} : vector<120x512xbf16>, vector<512x768xbf16>, vector<120x768xf32> -> vector<120x768xf32>
    %14 = arith.addf %12, %13 : vector<120x768xf32>
    %15 = vector.extract_strided_slice %14 {offsets = [0, 0], sizes = [120, 384], strides = [1, 1]} : vector<120x768xf32> to vector<120x384xf32>
    %16 = vector.extract_strided_slice %14 {offsets = [0, 384], sizes = [120, 384], strides = [1, 1]} : vector<120x768xf32> to vector<120x384xf32>
    %17 = arith.mulf %15, %15 : vector<120x384xf32>
    %18 = arith.mulf %16, %16 : vector<120x384xf32>
    %19 = arith.addf %17, %18 : vector<120x384xf32>
    %c0_9 = arith.constant 0 : index
    %c0_10 = arith.constant 0 : index
    %20 = vector.load %arg5[%c0_9, %c0_10] : memref<384x128xf32, #tpu.memory_space<vmem>>, vector<384x128xf32>
    %cst_11 = arith.constant dense<0.000000e+00> : vector<120x128xf32>
    %21 = tpu.matmul %19, %20, %cst_11 {dimension_numbers = #tpu.dot_dimension_numbers<[1], [0], [0], [1], [0, 0, 1, 1], [], []>} : vector<120x384xf32>, vector<384x128xf32>, vector<120x128xf32> -> vector<120x128xf32>
    %cst_12 = arith.constant 1.000000e-10 : f32
    %22 = vector.broadcast %cst_12 : f32 to vector<120x128xf32>
    %23 = arith.maximumf %21, %22 : vector<120x128xf32>
    %24 = math.log %23 : vector<120x128xf32>
    %cst_13 = arith.constant 4.34294462 : f32
    %25 = vector.broadcast %cst_13 : f32 to vector<120x128xf32>
    %26 = arith.mulf %24, %25 : vector<120x128xf32>
    %cst_14 = arith.constant 0.999994993 : f32
    %27 = vector.broadcast %cst_14 : f32 to vector<120x128xf32>
    %28 = arith.mulf %26, %27 : vector<120x128xf32>
    %c0_15 = arith.constant 0 : index
    %c0_16 = arith.constant 0 : index
    %29 = vector.load %arg6[%c0_15, %c0_16] : memref<120x128xf32, #tpu.memory_space<vmem>>, vector<120x128xf32>
    tpu.vector_store %arg6[%c0_15, %c0_16], %28 {strides = array<i32>} : memref<120x128xf32, #tpu.memory_space<vmem>>, vector<120x128xf32>,
    return
  }
  func.func @transform_0(%arg0: i32) -> (i32, i32) {
    %c0_i32 = arith.constant 0 : i32
    %c0_i32_0 = arith.constant 0 : i32
    return %arg0, %c0_i32 : i32, i32
  }
  func.func @transform_1(%arg0: i32) -> (i32, i32) {
    %c0_i32 = arith.constant 0 : i32
    %c0_i32_0 = arith.constant 0 : i32
    %c0_i32_1 = arith.constant 0 : i32
    return %c0_i32, %c0_i32_0 : i32, i32
  }
  func.func @transform_2(%arg0: i32) -> (i32, i32) {
    %c0_i32 = arith.constant 0 : i32
    %c0_i32_0 = arith.constant 0 : i32
    %c0_i32_1 = arith.constant 0 : i32
    return %c0_i32, %c0_i32_0 : i32, i32
  }
  func.func @transform_3(%arg0: i32) -> (i32, i32) {
    %c0_i32 = arith.constant 0 : i32
    %c0_i32_0 = arith.constant 0 : i32
    %c0_i32_1 = arith.constant 0 : i32
    return %c0_i32, %c0_i32_0 : i32, i32
  }
  func.func @transform_4(%arg0: i32) -> (i32, i32) {
    %c0_i32 = arith.constant 0 : i32
    %c0_i32_0 = arith.constant 0 : i32
    %c0_i32_1 = arith.constant 0 : i32
    return %c0_i32, %c0_i32_0 : i32, i32
  }
  func.func @transform_5(%arg0: i32) -> (i32, i32) {
    %c0_i32 = arith.constant 0 : i32
    %c0_i32_0 = arith.constant 0 : i32
    return %arg0, %c0_i32 : i32, i32
  }
}

</mosaic_0001>

<llo_original>
// kernel: tpu_custom_call.1
$region0: #{tpu_custom_call.1}
  #allocation0 [shape = 'u32[]', space=smem, size = 0x4, offset = 0x4, fixed_abs, tag = 'smem constant byte address 0x4 - core index']
  #allocation1 [shape = 'u32[144,128]{1,0:T(1,128)}', space=vmem, size = 0x12000, scoped, tag = 'internal scratch']
  %s0 = inlined_call_operand.hbm [shape: f32[360,512], index: 0, kind: input, shape index: {}]
  %s1 = inlined_call_operand.hbm [shape: f32[1,512], index: 1, kind: input, shape index: {}]
  %s2 = inlined_call_operand.hbm [shape: bf16[512,768], index: 2, kind: input, shape index: {}]
  %s3 = inlined_call_operand.hbm [shape: bf16[512,768], index: 3, kind: input, shape index: {}]
  %s4 = inlined_call_operand.hbm [shape: f32[384,128], index: 4, kind: input, shape index: {}]
  %s5 = inlined_call_operand.hbm [shape: f32[360,128], index: 5, kind: output, shape index: {}]
  %s6 = sld [smem:[#allocation0]]
  $region73: #{tpu_custom_call.1} parent=0
    _
  %s8 = ssub.s32 1, %s6
  %s9 = scalar_select 0, %s8, %s6
  $region1: #{tpu_custom_call.1} parent=0
    #allocation2 [shape = 'u8[491520]{0}', space=vmem, size = 0x78000, scoped, tag = 'input window, operand 0']
    #allocation3 [shape = 's32[2]{0}', space=sflag, size = 0x8, scoped, tag = 'scoped memory for tpu_custom_call.1']
    #allocation4 [shape = 's32[2]{0}', space=sflag, size = 0x8, scoped, tag = 'scoped memory for tpu_custom_call.1']
    #allocation5 [shape = 'u8[2048]{0}', space=vmem, size = 0x800, scoped, tag = 'input window, operand 1, single buffered']
    #allocation6 [shape = 's32[1]{0}', space=sflag, size = 0x4, scoped, tag = 'scoped memory for tpu_custom_call.1']
    #allocation7 [shape = 'u8[786432]{0}', space=vmem, size = 0xc0000, scoped, tag = 'input window, operand 2, single buffered']
    #allocation8 [shape = 'u8[786432]{0}', space=vmem, size = 0xc0000, scoped, tag = 'input window, operand 3, single buffered']
    #allocation9 [shape = 's32[1]{0}', space=sflag, size = 0x4, scoped, tag = 'scoped memory for tpu_custom_call.1']
    #allocation10 [shape = 'u8[196608]{0}', space=vmem, size = 0x30000, scoped, tag = 'input window, operand 4, single buffered']
    #allocation11 [shape = 'u8[122880]{0}', space=vmem, size = 0x1e000, scoped, tag = 'output window, operand 0']
    %10 = vsyncpa [#allocation3], 0
    %s11 = scalar_lea.sflag [#allocation3], 1
    %12 = vsyncpa %s11, 0
    %13 = vsyncpa [#allocation6], 0
    %14 = vsyncpa [#allocation9], 0
    %15 = vsyncpa [#allocation4], 0
    %s16 = scalar_lea.sflag [#allocation4], 1
    %17 = vsyncpa %s16, 0
    loop: start=0, step=1, limit=5
    $region2: #{tpu_custom_call.1} parent=1 // loop_pre_header
      _
    $region3: #{tpu_custom_call.1} parent=1 // loop_header
      %s19 = sphi 0, %s23
      %p20 = scmp.ge.s32.totalorder %s19, 5
      %s29 = sphi 0, %s31
      %s32 = sphi 0, %s29
      %s33 = sphi 0, %s32
      %s49 = sphi 0, %s33
      %s53 = sphi 0, %s53
      %s55 = sphi 0, %s53
      %s56 = sphi 0, %s55
      %s70 = sphi 0, %s56
      %s74 = sphi 0, %s74
      %s76 = sphi 0, %s74
      %s77 = sphi 0, %s76
      %s91 = sphi 0, %s77
      %s95 = sphi 0, %s95
      %s97 = sphi 0, %s95
      %s98 = sphi 0, %s97
      %s112 = sphi 0, %s98
      %s116 = sphi 0, %s116
      %s118 = sphi 0, %s116
      %s119 = sphi 0, %s118
      %s133 = sphi 0, %s119
      %s139 = sphi 0, %s141
      %s142 = sphi 0, %s139
      %s143 = sphi 0, %s142
      %s159 = sphi 0, %s143
    $region4: #{tpu_custom_call.1} parent=1 // loop_header_branch
      %22 = sbr.rel (%p20) target = $region8
    $region5: #{tpu_custom_call.1} parent=1 // loop_body
      %s24 = ssub.s32 %s19, 1
      %s25 = ssub.s32 %s19, 2
      %s26 = sadd.s32 %s19, 1
      %s27 = ssub.s32 %s19, %s26
      %p28 = scmp.eq.s32.totalorder %s27, 0
      %s30 = sadd.s32 %s29, 1
      %s31 = scalar_select %p28, %s29, %s30
      %p34 = pneg %p28
      %p35 = scmp.eq.s32.totalorder %s19, 2
      %p36 = por %p34, %p35
      %p37 = scmp.ne.s32.totalorder %s29, %s32
      %p38 = scmp.eq.s32.totalorder %s19, 0
      %p39 = por %p37, %p38
      %p40 = scmp.ne.s32.totalorder %s29, %s32
      %p41 = scmp.eq.s32.totalorder %s24, 2
      %p42 = por %p40, %p41
      %p43 = scmp.ne.s32.totalorder %s32, %s33
      %p44 = scmp.eq.s32.totalorder %s24, 0
      %p45 = por %p43, %p44
      %p46 = scmp.ne.s32.totalorder %s32, %s33
      %p47 = scmp.eq.s32.totalorder %s25, 2
      %p48 = por %p46, %p47
      %p50 = scmp.ne.s32.totalorder %s33, %s49
      %p51 = scmp.eq.s32.totalorder %s25, 0
      %p52 = por %p50, %p51
      %s54 = sadd.s32 %s53, 1
      %p57 = scmp.eq.s32.totalorder %s19, 2
      %p58 = scmp.ne.s32.totalorder %s53, %s55
      %p59 = scmp.eq.s32.totalorder %s19, 0
      %p60 = por %p58, %p59
      %p61 = scmp.ne.s32.totalorder %s53, %s55
      %p62 = scmp.eq.s32.totalorder %s24, 2
      %p63 = por %p61, %p62
      %p64 = scmp.ne.s32.totalorder %s55, %s56
      %p65 = scmp.eq.s32.totalorder %s24, 0
      %p66 = por %p64, %p65
      %p67 = scmp.ne.s32.totalorder %s55, %s56
      %p68 = scmp.eq.s32.totalorder %s25, 2
      %p69 = por %p67, %p68
      %p71 = scmp.ne.s32.totalorder %s56, %s70
      %p72 = scmp.eq.s32.totalorder %s25, 0
      %p73 = por %p71, %p72
      %s75 = sadd.s32 %s74, 1
      %p78 = scmp.eq.s32.totalorder %s19, 2
      %p79 = scmp.ne.s32.totalorder %s74, %s76
      %p80 = scmp.eq.s32.totalorder %s19, 0
      %p81 = por %p79, %p80
      %p82 = scmp.ne.s32.totalorder %s74, %s76
      %p83 = scmp.eq.s32.totalorder %s24, 2
      %p84 = por %p82, %p83
      %p85 = scmp.ne.s32.totalorder %s76, %s77
      %p86 = scmp.eq.s32.totalorder %s24, 0
      %p87 = por %p85, %p86
      %p88 = scmp.ne.s32.totalorder %s76, %s77
      %p89 = scmp.eq.s32.totalorder %s25, 2
      %p90 = por %p88, %p89
      %p92 = scmp.ne.s32.totalorder %s77, %s91
      %p93 = scmp.eq.s32.totalorder %s25, 0
      %p94 = por %p92, %p93
      %s96 = sadd.s32 %s95, 1
      %p99 = scmp.eq.s32.totalorder %s19, 2
      %p100 = scmp.ne.s32.totalorder %s95, %s97
      %p101 = scmp.eq.s32.totalorder %s19, 0
      %p102 = por %p100, %p101
      %p103 = scmp.ne.s32.totalorder %s95, %s97
      %p104 = scmp.eq.s32.totalorder %s24, 2
      %p105 = por %p103, %p104
      %p106 = scmp.ne.s32.totalorder %s97, %s98
      %p107 = scmp.eq.s32.totalorder %s24, 0
      %p108 = por %p106, %p107
      %p109 = scmp.ne.s32.totalorder %s97, %s98
      %p110 = scmp.eq.s32.totalorder %s25, 2
      %p111 = por %p109, %p110
      %p113 = scmp.ne.s32.totalorder %s98, %s112
      %p114 = scmp.eq.s32.totalorder %s25, 0
      %p115 = por %p113, %p114
      %s117 = sadd.s32 %s116, 1
      %p120 = scmp.eq.s32.totalorder %s19, 2
      %p121 = scmp.ne.s32.totalorder %s116, %s118
      %p122 = scmp.eq.s32.totalorder %s19, 0
      %p123 = por %p121, %p122
      %p124 = scmp.ne.s32.totalorder %s116, %s118
      %p125 = scmp.eq.s32.totalorder %s24, 2
      %p126 = por %p124, %p125
      %p127 = scmp.ne.s32.totalorder %s118, %s119
      %p128 = scmp.eq.s32.totalorder %s24, 0
      %p129 = por %p127, %p128
      %p130 = scmp.ne.s32.totalorder %s118, %s119
      %p131 = scmp.eq.s32.totalorder %s25, 2
      %p132 = por %p130, %p131
      %p134 = scmp.ne.s32.totalorder %s119, %s133
      %p135 = scmp.eq.s32.totalorder %s25, 0
      %p136 = por %p134, %p135
      %s137 = ssub.s32 %s19, %s26
      %p138 = scmp.eq.s32.totalorder %s137, 0
      %s140 = sadd.s32 %s139, 1
      %s141 = scalar_select %p138, %s139, %s140
      %p144 = pneg %p138
      %p145 = scmp.eq.s32.totalorder %s19, 2
      %p146 = por %p144, %p145
      %p147 = scmp.ne.s32.totalorder %s139, %s142
      %p148 = scmp.eq.s32.totalorder %s19, 0
      %p149 = por %p147, %p148
      %p150 = scmp.ne.s32.totalorder %s139, %s142
      %p151 = scmp.eq.s32.totalorder %s24, 2
      %p152 = por %p150, %p151
      %p153 = scmp.ne.s32.totalorder %s142, %s143
      %p154 = scmp.eq.s32.totalorder %s24, 0
      %p155 = por %p153, %p154
      %p156 = scmp.ne.s32.totalorder %s142, %s143
      %p157 = scmp.eq.s32.totalorder %s25, 2
      %p158 = por %p156, %p157
      %p160 = scmp.ne.s32.totalorder %s143, %s159
      %p161 = scmp.eq.s32.totalorder %s25, 0
      %p162 = por %p160, %p161
      %p163 = scmp.le.s32.totalorder 1, %s19
      %p164 = scmp.lt.s32.totalorder %s19, 4
      %p165 = pnand %p163, %p164
      %p166 = pneg %p165
      // Predicated region
      $region9: #{tpu_custom_call.1} parent=5 // pred_check
        _
      $region10: #{tpu_custom_call.1} parent=5 // pred_check_branch
        %168 = sbr.rel (%p165) target = $region12
      $region11: #{tpu_custom_call.1} parent=5 // pred_region
        %s169 = ssub.s32 %s19, 1
        // Predicated region
        $region13: #{tpu_custom_call.1} parent=11 // pred_check
          %p170 = pneg %p66
        $region14: #{tpu_custom_call.1} parent=11 // pred_check_branch
          %172 = sbr.rel (%p170) target = $region16
        $region15: #{tpu_custom_call.1} parent=11 // pred_region
          %s174 = ssub.s32 64, 64
          %175 = vsyncadd [#allocation6], %s174
          %s177 = sshll.u32 [#allocation5], 4
          %s178 = int_to_ptr.vmem [resolvable:$true] %s177
          %180 = dma.hbm_to_vmem [thread:$0]  %s1, 64, %s178, [#allocation6]
        $region16: #{tpu_custom_call.1} parent=11 // pred_fallthru
          _
        // Predicated region
        $region17: #{tpu_custom_call.1} parent=11 // pred_check
          %p181 = pneg %p87
        $region18: #{tpu_custom_call.1} parent=11 // pred_check_branch
          %183 = sbr.rel (%p181) target = $region20
        $region19: #{tpu_custom_call.1} parent=11 // pred_region
          %s185 = ssub.s32 24576, 24576
          %186 = vsyncadd [#allocation6], %s185
          %s187 = sshll.u32 [#allocation7], 4
          %s188 = int_to_ptr.vmem [resolvable:$true] %s187
          %193 = dma.hbm_to_vmem [thread:$0]  %s2, 24576, %s188, [#allocation6], 384, 384, 24
        $region20: #{tpu_custom_call.1} parent=11 // pred_fallthru
          _
        // Predicated region
        $region21: #{tpu_custom_call.1} parent=11 // pred_check
          %p194 = pneg %p108
        $region22: #{tpu_custom_call.1} parent=11 // pred_check_branch
          %196 = sbr.rel (%p194) target = $region24
        $region23: #{tpu_custom_call.1} parent=11 // pred_region
          %s198 = ssub.s32 24576, 24576
          %199 = vsyncadd [#allocation9], %s198
          %s200 = sshll.u32 [#allocation8], 4
          %s201 = int_to_ptr.vmem [resolvable:$true] %s200
          %206 = dma.hbm_to_vmem [thread:$0]  %s3, 24576, %s201, [#allocation9], 384, 384, 24
        $region24: #{tpu_custom_call.1} parent=11 // pred_fallthru
          _
        // Predicated region
        $region25: #{tpu_custom_call.1} parent=11 // pred_check
          %p207 = pneg %p129
        $region26: #{tpu_custom_call.1} parent=11 // pred_check_branch
          %209 = sbr.rel (%p207) target = $region28
        $region27: #{tpu_custom_call.1} parent=11 // pred_region
          %s211 = ssub.s32 6144, 6144
          %212 = vsyncadd [#allocation9], %s211
          %s213 = sshll.u32 [#allocation10], 4
          %s214 = int_to_ptr.vmem [resolvable:$true] %s213
          %219 = dma.hbm_to_vmem [thread:$0]  %s4, 6144, %s214, [#allocation9], 128, 128, 8
        $region28: #{tpu_custom_call.1} parent=11 // pred_fallthru
          _
      $region12: #{tpu_custom_call.1} parent=5 // pred_fallthru
        _
      %p220 = scmp.lt.s32.totalorder %s19, 3
      // Predicated region
      $region29: #{tpu_custom_call.1} parent=5 // pred_check
        %p221 = pneg %p220
      $region30: #{tpu_custom_call.1} parent=5 // pred_check_branch
        %223 = sbr.rel (%p221) target = $region32
      $region31: #{tpu_custom_call.1} parent=5 // pred_region
        // Predicated region
        $region33: #{tpu_custom_call.1} parent=31 // pred_check
          %p224 = pneg %p39
        $region34: #{tpu_custom_call.1} parent=31 // pred_check_branch
          %226 = sbr.rel (%p224) target = $region36
        $region35: #{tpu_custom_call.1} parent=31 // pred_region
          %s227 = sand.u32 %s29, 1
          %s228 = scalar_lea.sflag [#allocation3], %s227
          %s229 = sand.u32 %s29, 1
          %s230 = smul.addr %s229, 480
          %s231 = scalar_lea.vmem [#allocation2], %s230
          %s232 = smul.u32 15, %s19
          %s234 = ssub.s32 7680, 7680
          %235 = vsyncadd %s228, %s234
          %s236 = smul.addr %s232, 4
          %s237 = smul.addr %s236, 128
          %s238 = scalar_lea.hbm %s0, %s237
          %s239 = sshll.u32 %s231, 4
          %s240 = int_to_ptr.vmem [resolvable:$true] %s239
          %245 = dma.hbm_to_vmem [thread:$0]  %s238, 7680, %s240, %s228, 512, 512, 32
        $region36: #{tpu_custom_call.1} parent=31 // pred_fallthru
          _
      $region32: #{tpu_custom_call.1} parent=5 // pred_fallthru
        _
      %p246 = scmp.le.s32.totalorder 1, %s19
      %p247 = scmp.lt.s32.totalorder %s19, 4
      %p248 = pnand %p246, %p247
      %p249 = pneg %p248
      // Predicated region
      $region37: #{tpu_custom_call.1} parent=5 // pred_check
        _
      $region38: #{tpu_custom_call.1} parent=5 // pred_check_branch
        %251 = sbr.rel (%p248) target = $region40
      $region39: #{tpu_custom_call.1} parent=5 // pred_region
        %s252 = ssub.s32 %s19, 1
        %s253 = sand.u32 %s32, 1
        %s254 = scalar_lea.sflag [#allocation3], %s253
        %s255 = sand.u32 %s32, 1
        %s256 = smul.addr %s255, 480
        %s257 = scalar_lea.vmem [#allocation2], %s256
        // Predicated region
        $region41: #{tpu_custom_call.1} parent=39 // pred_check
          %p258 = pneg %p45
        $region42: #{tpu_custom_call.1} parent=39 // pred_check_branch
          %260 = sbr.rel (%p258) target = $region44
        $region43: #{tpu_custom_call.1} parent=39 // pred_region
          %261 = dma.done %s254, 7680
        $region44: #{tpu_custom_call.1} parent=39 // pred_fallthru
          _
        // Predicated region
        $region45: #{tpu_custom_call.1} parent=39 // pred_check
          %p262 = pneg %p66
        $region46: #{tpu_custom_call.1} parent=39 // pred_check_branch
          %264 = sbr.rel (%p262) target = $region48
        $region47: #{tpu_custom_call.1} parent=39 // pred_region
          %265 = dma.done [#allocation6], 64
        $region48: #{tpu_custom_call.1} parent=39 // pred_fallthru
          _
        // Predicated region
        $region49: #{tpu_custom_call.1} parent=39 // pred_check
          %p266 = pneg %p87
        $region50: #{tpu_custom_call.1} parent=39 // pred_check_branch
          %268 = sbr.rel (%p266) target = $region52
        $region51: #{tpu_custom_call.1} parent=39 // pred_region
          %269 = dma.done [#allocation6], 24576
        $region52: #{tpu_custom_call.1} parent=39 // pred_fallthru
          _
        // Predicated region
        $region53: #{tpu_custom_call.1} parent=39 // pred_check
          %p270 = pneg %p108
        $region54: #{tpu_custom_call.1} parent=39 // pred_check_branch
          %272 = sbr.rel (%p270) target = $region56
        $region55: #{tpu_custom_call.1} parent=39 // pred_region
          %273 = dma.done [#allocation9], 24576
        $region56: #{tpu_custom_call.1} parent=39 // pred_fallthru
          _
        // Predicated region
        $region57: #{tpu_custom_call.1} parent=39 // pred_check
          %p274 = pneg %p129
        $region58: #{tpu_custom_call.1} parent=39 // pred_check_branch
          %276 = sbr.rel (%p274) target = $region60
        $region59: #{tpu_custom_call.1} parent=39 // pred_region
          %277 = dma.done [#allocation9], 6144
        $region60: #{tpu_custom_call.1} parent=39 // pred_fallthru
          _
        %s278 = sand.u32 %s32, 1
        %s279 = scalar_lea.sflag [#allocation3], %s278
        %s280 = sand.u32 %s32, 1
        %s281 = smul.addr %s280, 480
        %s282 = scalar_lea.vmem [#allocation2], %s281
        %p283 = pneg %p45
        %p284 = pneg %p42
        %p285 = pneg %p66
        %p286 = pneg %p63
        %p287 = pneg %p87
        %p288 = pneg %p84
        %p289 = pneg %p108
        %p290 = pneg %p105
        %p291 = pneg %p129
        %p292 = pneg %p126
        %p293 = pneg %p155
        %p294 = pneg %p152
        %s295 = sand.u32 %s142, 1
        %s296 = scalar_lea.sflag [#allocation4], %s295
        %s297 = sand.u32 %s142, 1
        %s298 = smul.addr %s297, 120
        %s299 = scalar_lea.vmem [#allocation11], %s298
        %s300 = smul.u32 15, %s24
        %s301 = smul.u32 15, %s24
        %v302 = vld [vmem:[%s257] sm:$0xff]
        %v303 = vld [vmem:[%s257 + $0x8] sm:$0xff]
        %v304 = vld [vmem:[%s257 + $0x10] sm:$0xff]
        %v305 = vld [vmem:[%s257 + $0x18] sm:$0xff]
        %v306 = vld [vmem:[%s257 + $0x20] sm:$0xff]
        %v307 = vld [vmem:[%s257 + $0x28] sm:$0xff]
        %v308 = vld [vmem:[%s257 + $0x30] sm:$0xff]
        %v309 = vld [vmem:[%s257 + $0x38] sm:$0xff]
        %v310 = vld [vmem:[%s257 + $0x40] sm:$0xff]
        %v311 = vld [vmem:[%s257 + $0x48] sm:$0xff]
        %v312 = vld [vmem:[%s257 + $0x50] sm:$0xff]
        %v313 = vld [vmem:[%s257 + $0x58] sm:$0xff]
        %v314 = vld [vmem:[%s257 + $0x60] sm:$0xff]
        %v315 = vld [vmem:[%s257 + $0x68] sm:$0xff]
        %v316 = vld [vmem:[%s257 + $0x70] sm:$0xff]
        %v317 = vld [vmem:[%s257 + $0x78] sm:$0xff]
        %v318 = vld [vmem:[%s257 + $0x80] sm:$0xff]
        %v319 = vld [vmem:[%s257 + $0x88] sm:$0xff]
        %v320 = vld [vmem:[%s257 + $0x90] sm:$0xff]
        %v321 = vld [vmem:[%s257 + $0x98] sm:$0xff]
        %v322 = vld [vmem:[%s257 + $0xa0] sm:$0xff]
        %v323 = vld [vmem:[%s257 + $0xa8] sm:$0xff]
        %v324 = vld [vmem:[%s257 + $0xb0] sm:$0xff]
        %v325 = vld [vmem:[%s257 + $0xb8] sm:$0xff]
        %v326 = vld [vmem:[%s257 + $0xc0] sm:$0xff]
        %v327 = vld [vmem:[%s257 + $0xc8] sm:$0xff]
        %v328 = vld [vmem:[%s257 + $0xd0] sm:$0xff]
        %v329 = vld [vmem:[%s257 + $0xd8] sm:$0xff]
        %v330 = vld [vmem:[%s257 + $0xe0] sm:$0xff]
        %v331 = vld [vmem:[%s257 + $0xe8] sm:$0xff]
        %v332 = vld [vmem:[%s257 + $0xf0] sm:$0xff]
        %v333 = vld [vmem:[%s257 + $0xf8] sm:$0xff]
        %v334 = vld [vmem:[%s257 + $0x100] sm:$0xff]
        %v335 = vld [vmem:[%s257 + $0x108] sm:$0xff]
        %v336 = vld [vmem:[%s257 + $0x110] sm:$0xff]
        %v337 = vld [vmem:[%s257 + $0x118] sm:$0xff]
        %v338 = vld [vmem:[%s257 + $0x120] sm:$0xff]
        %v339 = vld [vmem:[%s257 + $0x128] sm:$0xff]
        %v340 = vld [vmem:[%s257 + $0x130] sm:$0xff]
        %v341 = vld [vmem:[%s257 + $0x138] sm:$0xff]
        %v342 = vld [vmem:[%s257 + $0x140] sm:$0xff]
        %v343 = vld [vmem:[%s257 + $0x148] sm:$0xff]
        %v344 = vld [vmem:[%s257 + $0x150] sm:$0xff]
        %v345 = vld [vmem:[%s257 + $0x158] sm:$0xff]
        %v346 = vld [vmem:[%s257 + $0x160] sm:$0xff]
        %v347 = vld [vmem:[%s257 + $0x168] sm:$0xff]
        %v348 = vld [vmem:[%s257 + $0x170] sm:$0xff]
        %v349 = vld [vmem:[%s257 + $0x178] sm:$0xff]
        %v350 = vld [vmem:[%s257 + $0x180] sm:$0xff]
        %v351 = vld [vmem:[%s257 + $0x188] sm:$0xff]
        %v352 = vld [vmem:[%s257 + $0x190] sm:$0xff]
        %v353 = vld [vmem:[%s257 + $0x198] sm:$0xff]
        %v354 = vld [vmem:[%s257 + $0x1a0] sm:$0xff]
        %v355 = vld [vmem:[%s257 + $0x1a8] sm:$0xff]
        %v356 = vld [vmem:[%s257 + $0x1b0] sm:$0xff]
        %v357 = vld [vmem:[%s257 + $0x1b8] sm:$0xff]
        %v358 = vld [vmem:[%s257 + $0x1c0] sm:$0xff]
        %v359 = vld [vmem:[%s257 + $0x1c8] sm:$0xff]
        %v360 = vld [vmem:[%s257 + $0x1d0] sm:$0xff]
        %v361 = vld [vmem:[%s257 + $0x1d8] sm:$0xff]
        %v362 = vld [vmem:[#allocation5] sm:$0xf]
        %v364 = vlaneseq
        %v365 = vshrl.u32 %v364, 7
        %v366 = vsub.s32 0, %v365
        %v367 = vrot.slane %v362, %v366
        %v368 = vlaneseq
        %v369 = vshrl.u32 %v368, 7
        %v370 = vsub.s32 1, %v369
        %v371 = vrot.slane %v362, %v370
        %v372 = vlaneseq
        %v373 = vshrl.u32 %v372, 7
        %v374 = vsub.s32 2, %v373
        %v375 = vrot.slane %v362, %v374
        %v376 = vlaneseq
        %v377 = vshrl.u32 %v376, 7
        %v378 = vsub.s32 3, %v377
        %v379 = vrot.slane %v362, %v378
        %v384 = vmul.f32 %v302, %v367
        %v385 = vmul.f32 %v303, %v371
        %v386 = vmul.f32 %v304, %v375
        %v387 = vmul.f32 %v305, %v379
        %v388 = vmul.f32 %v306, %v367
        %v389 = vmul.f32 %v307, %v371
        %v390 = vmul.f32 %v308, %v375
        %v391 = vmul.f32 %v309, %v379
        %v392 = vmul.f32 %v310, %v367
        %v393 = vmul.f32 %v311, %v371
        %v394 = vmul.f32 %v312, %v375
        %v395 = vmul.f32 %v313, %v379
        %v396 = vmul.f32 %v314, %v367
        %v397 = vmul.f32 %v315, %v371
        %v398 = vmul.f32 %v316, %v375
        %v399 = vmul.f32 %v317, %v379
        %v400 = vmul.f32 %v318, %v367
        %v401 = vmul.f32 %v319, %v371
        %v402 = vmul.f32 %v320, %v375
        %v403 = vmul.f32 %v321, %v379
        %v404 = vmul.f32 %v322, %v367
        %v405 = vmul.f32 %v323, %v371
        %v406 = vmul.f32 %v324, %v375
        %v407 = vmul.f32 %v325, %v379
        %v408 = vmul.f32 %v326, %v367
        %v409 = vmul.f32 %v327, %v371
        %v410 = vmul.f32 %v328, %v375
        %v411 = vmul.f32 %v329, %v379
        %v412 = vmul.f32 %v330, %v367
        %v413 = vmul.f32 %v331, %v371
        %v414 = vmul.f32 %v332, %v375
        %v415 = vmul.f32 %v333, %v379
        %v416 = vmul.f32 %v334, %v367
        %v417 = vmul.f32 %v335, %v371
        %v418 = vmul.f32 %v336, %v375
        %v419 = vmul.f32 %v337, %v379
        %v420 = vmul.f32 %v338, %v367
        %v421 = vmul.f32 %v339, %v371
        %v422 = vmul.f32 %v340, %v375
        %v423 = vmul.f32 %v341, %v379
        %v424 = vmul.f32 %v342, %v367
        %v425 = vmul.f32 %v343, %v371
        %v426 = vmul.f32 %v344, %v375
        %v427 = vmul.f32 %v345, %v379
        %v428 = vmul.f32 %v346, %v367
        %v429 = vmul.f32 %v347, %v371
        %v430 = vmul.f32 %v348, %v375
        %v431 = vmul.f32 %v349, %v379
        %v432 = vmul.f32 %v350, %v367
        %v433 = vmul.f32 %v351, %v371
        %v434 = vmul.f32 %v352, %v375
        %v435 = vmul.f32 %v353, %v379
        %v436 = vmul.f32 %v354, %v367
        %v437 = vmul.f32 %v355, %v371
        %v438 = vmul.f32 %v356, %v375
        %v439 = vmul.f32 %v357, %v379
        %v440 = vmul.f32 %v358, %v367
        %v441 = vmul.f32 %v359, %v371
        %v442 = vmul.f32 %v360, %v375
        %v443 = vmul.f32 %v361, %v379
        %v444 = vpack.c.bf16 %v388, %v384
        %v445 = vpack.c.bf16 %v389, %v385
        %v446 = vpack.c.bf16 %v390, %v386
        %v447 = vpack.c.bf16 %v391, %v387
        %v448 = vpack.c.bf16 %v396, %v392
        %v449 = vpack.c.bf16 %v397, %v393
        %v450 = vpack.c.bf16 %v398, %v394
        %v451 = vpack.c.bf16 %v399, %v395
        %v452 = vpack.c.bf16 %v404, %v400
        %v453 = vpack.c.bf16 %v405, %v401
        %v454 = vpack.c.bf16 %v406, %v402
        %v455 = vpack.c.bf16 %v407, %v403
        %v456 = vpack.c.bf16 %v412, %v408
        %v457 = vpack.c.bf16 %v413, %v409
        %v458 = vpack.c.bf16 %v414, %v410
        %v459 = vpack.c.bf16 %v415, %v411
        %v460 = vpack.c.bf16 %v420, %v416
        %v461 = vpack.c.bf16 %v421, %v417
        %v462 = vpack.c.bf16 %v422, %v418
        %v463 = vpack.c.bf16 %v423, %v419
        %v464 = vpack.c.bf16 %v428, %v424
        %v465 = vpack.c.bf16 %v429, %v425
        %v466 = vpack.c.bf16 %v430, %v426
        %v467 = vpack.c.bf16 %v431, %v427
        %v468 = vpack.c.bf16 %v436, %v432
        %v469 = vpack.c.bf16 %v437, %v433
        %v470 = vpack.c.bf16 %v438, %v434
        %v471 = vpack.c.bf16 %v439, %v435
        %v472 = vpack.c.bf16 %v440, %v440
        %v473 = vpack.c.bf16 %v441, %v441
        %v474 = vpack.c.bf16 %v442, %v442
        %v475 = vpack.c.bf16 %v443, %v443
        %v476 = vunpack.c.l.bf16 %v444
        %v477 = vunpack.c.l.bf16 %v445
        %v478 = vunpack.c.l.bf16 %v446
        %v479 = vunpack.c.l.bf16 %v447
        %v480 = vunpack.c.h.bf16 %v444
        %v481 = vunpack.c.h.bf16 %v445
        %v482 = vunpack.c.h.bf16 %v446
        %v483 = vunpack.c.h.bf16 %v447
        %v484 = vunpack.c.l.bf16 %v448
        %v485 = vunpack.c.l.bf16 %v449
        %v486 = vunpack.c.l.bf16 %v450
        %v487 = vunpack.c.l.bf16 %v451
        %v488 = vunpack.c.h.bf16 %v448
        %v489 = vunpack.c.h.bf16 %v449
        %v490 = vunpack.c.h.bf16 %v450
        %v491 = vunpack.c.h.bf16 %v451
        %v492 = vunpack.c.l.bf16 %v452
        %v493 = vunpack.c.l.bf16 %v453
        %v494 = vunpack.c.l.bf16 %v454
        %v495 = vunpack.c.l.bf16 %v455
        %v496 = vunpack.c.h.bf16 %v452
        %v497 = vunpack.c.h.bf16 %v453
        %v498 = vunpack.c.h.bf16 %v454
        %v499 = vunpack.c.h.bf16 %v455
        %v500 = vunpack.c.l.bf16 %v456
        %v501 = vunpack.c.l.bf16 %v457
        %v502 = vunpack.c.l.bf16 %v458
        %v503 = vunpack.c.l.bf16 %v459
        %v504 = vunpack.c.h.bf16 %v456
        %v505 = vunpack.c.h.bf16 %v457
        %v506 = vunpack.c.h.bf16 %v458
        %v507 = vunpack.c.h.bf16 %v459
        %v508 = vunpack.c.l.bf16 %v460
        %v509 = vunpack.c.l.bf16 %v461
        %v510 = vunpack.c.l.bf16 %v462
        %v511 = vunpack.c.l.bf16 %v463
        %v512 = vunpack.c.h.bf16 %v460
        %v513 = vunpack.c.h.bf16 %v461
        %v514 = vunpack.c.h.bf16 %v462
        %v515 = vunpack.c.h.bf16 %v463
        %v516 = vunpack.c.l.bf16 %v464
        %v517 = vunpack.c.l.bf16 %v465
        %v518 = vunpack.c.l.bf16 %v466
        %v519 = vunpack.c.l.bf16 %v467
        %v520 = vunpack.c.h.bf16 %v464
        %v521 = vunpack.c.h.bf16 %v465
        %v522 = vunpack.c.h.bf16 %v466
        %v523 = vunpack.c.h.bf16 %v467
        %v524 = vunpack.c.l.bf16 %v468
        %v525 = vunpack.c.l.bf16 %v469
        %v526 = vunpack.c.l.bf16 %v470
        %v527 = vunpack.c.l.bf16 %v471
        %v528 = vunpack.c.h.bf16 %v468
        %v529 = vunpack.c.h.bf16 %v469
        %v530 = vunpack.c.h.bf16 %v470
        %v531 = vunpack.c.h.bf16 %v471
        %v532 = vunpack.c.l.bf16 %v472
        %v533 = vunpack.c.l.bf16 %v473
        %v534 = vunpack.c.l.bf16 %v474
        %v535 = vunpack.c.l.bf16 %v475
        %v536 = vsub.f32 %v384, %v476
        %v537 = vsub.f32 %v385, %v477
        %v538 = vsub.f32 %v386, %v478
        %v539 = vsub.f32 %v387, %v479
        %v540 = vsub.f32 %v388, %v480
        %v541 = vsub.f32 %v389, %v481
        %v542 = vsub.f32 %v390, %v482
        %v543 = vsub.f32 %v391, %v483
        %v544 = vsub.f32 %v392, %v484
        %v545 = vsub.f32 %v393, %v485
        %v546 = vsub.f32 %v394, %v486
        %v547 = vsub.f32 %v395, %v487
        %v548 = vsub.f32 %v396, %v488
        %v549 = vsub.f32 %v397, %v489
        %v550 = vsub.f32 %v398, %v490
        %v551 = vsub.f32 %v399, %v491
        %v552 = vsub.f32 %v400, %v492
        %v553 = vsub.f32 %v401, %v493
        %v554 = vsub.f32 %v402, %v494
        %v555 = vsub.f32 %v403, %v495
        %v556 = vsub.f32 %v404, %v496
        %v557 = vsub.f32 %v405, %v497
        %v558 = vsub.f32 %v406, %v498
        %v559 = vsub.f32 %v407, %v499
        %v560 = vsub.f32 %v408, %v500
        %v561 = vsub.f32 %v409, %v501
        %v562 = vsub.f32 %v410, %v502
        %v563 = vsub.f32 %v411, %v503
        %v564 = vsub.f32 %v412, %v504
        %v565 = vsub.f32 %v413, %v505
        %v566 = vsub.f32 %v414, %v506
        %v567 = vsub.f32 %v415, %v507
        %v568 = vsub.f32 %v416, %v508
        %v569 = vsub.f32 %v417, %v509
        %v570 = vsub.f32 %v418, %v510
        %v571 = vsub.f32 %v419, %v511
        %v572 = vsub.f32 %v420, %v512
        %v573 = vsub.f32 %v421, %v513
        %v574 = vsub.f32 %v422, %v514
        %v575 = vsub.f32 %v423, %v515
        %v576 = vsub.f32 %v424, %v516
        %v577 = vsub.f32 %v425, %v517
        %v578 = vsub.f32 %v426, %v518
        %v579 = vsub.f32 %v427, %v519
        %v580 = vsub.f32 %v428, %v520
        %v581 = vsub.f32 %v429, %v521
        %v582 = vsub.f32 %v430, %v522
        %v583 = vsub.f32 %v431, %v523
        %v584 = vsub.f32 %v432, %v524
        %v585 = vsub.f32 %v433, %v525
        %v586 = vsub.f32 %v434, %v526
        %v587 = vsub.f32 %v435, %v527
        %v588 = vsub.f32 %v436, %v528
        %v589 = vsub.f32 %v437, %v529
        %v590 = vsub.f32 %v438, %v530
        %v591 = vsub.f32 %v439, %v531
        %v592 = vsub.f32 %v440, %v532
        %v593 = vsub.f32 %v441, %v533
        %v594 = vsub.f32 %v442, %v534
        %v595 = vsub.f32 %v443, %v535
        %v596 = vpack.c.bf16 %v540, %v536
        %v597 = vpack.c.bf16 %v541, %v537
        %v598 = vpack.c.bf16 %v542, %v538
        %v599 = vpack.c.bf16 %v543, %v539
        %v600 = vpack.c.bf16 %v548, %v544
        %v601 = vpack.c.bf16 %v549, %v545
        %v602 = vpack.c.bf16 %v550, %v546
        %v603 = vpack.c.bf16 %v551, %v547
        %v604 = vpack.c.bf16 %v556, %v552
        %v605 = vpack.c.bf16 %v557, %v553
        %v606 = vpack.c.bf16 %v558, %v554
        %v607 = vpack.c.bf16 %v559, %v555
        %v608 = vpack.c.bf16 %v564, %v560
        %v609 = vpack.c.bf16 %v565, %v561
        %v610 = vpack.c.bf16 %v566, %v562
        %v611 = vpack.c.bf16 %v567, %v563
        %v612 = vpack.c.bf16 %v572, %v568
        %v613 = vpack.c.bf16 %v573, %v569
        %v614 = vpack.c.bf16 %v574, %v570
        %v615 = vpack.c.bf16 %v575, %v571
        %v616 = vpack.c.bf16 %v580, %v576
        %v617 = vpack.c.bf16 %v581, %v577
        %v618 = vpack.c.bf16 %v582, %v578
        %v619 = vpack.c.bf16 %v583, %v579
        %v620 = vpack.c.bf16 %v588, %v584
        %v621 = vpack.c.bf16 %v589, %v585
        %v622 = vpack.c.bf16 %v590, %v586
        %v623 = vpack.c.bf16 %v591, %v587
        %v624 = vpack.c.bf16 %v592, %v592
        %v625 = vpack.c.bf16 %v593, %v593
        %v626 = vpack.c.bf16 %v594, %v594
        %v627 = vpack.c.bf16 %v595, %v595
        %v628 = vld [vmem:[#allocation7] sm:$0xff]
        %v629 = vld [vmem:[#allocation7 + $0x8] sm:$0xff]
        %v630 = vld [vmem:[#allocation7 + $0x10] sm:$0xff]
        %v631 = vld [vmem:[#allocation7 + $0x18] sm:$0xff]
        %v632 = vld [vmem:[#allocation7 + $0x20] sm:$0xff]
        %v633 = vld [vmem:[#allocation7 + $0x28] sm:$0xff]
        %v634 = vld [vmem:[#allocation7 + $0x30] sm:$0xff]
        %v635 = vld [vmem:[#allocation7 + $0x38] sm:$0xff]
        %v636 = vld [vmem:[#allocation7 + $0x40] sm:$0xff]
        %v637 = vld [vmem:[#allocation7 + $0x48] sm:$0xff]
        %v638 = vld [vmem:[#allocation7 + $0x50] sm:$0xff]
        %v639 = vld [vmem:[#allocation7 + $0x58] sm:$0xff]
        %v640 = vld [vmem:[#allocation7 + $0x60] sm:$0xff]
        %v641 = vld [vmem:[#allocation7 + $0x68] sm:$0xff]
        %v642 = vld [vmem:[#allocation7 + $0x70] sm:$0xff]
        %v643 = vld [vmem:[#allocation7 + $0x78] sm:$0xff]
        %v644 = vld [vmem:[#allocation7 + $0x80] sm:$0xff]
        %v645 = vld [vmem:[#allocation7 + $0x88] sm:$0xff]
        %v646 = vld [vmem:[#allocation7 + $0x90] sm:$0xff]
        %v647 = vld [vmem:[#allocation7 + $0x98] sm:$0xff]
        %v648 = vld [vmem:[#allocation7 + $0xa0] sm:$0xff]
        %v649 = vld [vmem:[#allocation7 + $0xa8] sm:$0xff]
        %v650 = vld [vmem:[#allocation7 + $0xb0] sm:$0xff]
        %v651 = vld [vmem:[#allocation7 + $0xb8] sm:$0xff]
        %v652 = vld [vmem:[#allocation7 + $0xc0] sm:$0xff]
        %v653 = vld [vmem:[#allocation7 + $0xc8] sm:$0xff]
        %v654 = vld [vmem:[#allocation7 + $0xd0] sm:$0xff]
        %v655 = vld [vmem:[#allocation7 + $0xd8] sm:$0xff]
        %v656 = vld [vmem:[#allocation7 + $0xe0] sm:$0xff]
        %v657 = vld [vmem:[#allocation7 + $0xe8] sm:$0xff]
        %v658 = vld [vmem:[#allocation7 + $0xf0] sm:$0xff]
        %v659 = vld [vmem:[#allocation7 + $0xf8] sm:$0xff]
        %v660 = vld [vmem:[#allocation7 + $0x100] sm:$0xff]
        %v661 = vld [vmem:[#allocation7 + $0x108] sm:$0xff]
        %v662 = vld [vmem:[#allocation7 + $0x110] sm:$0xff]
        %v663 = vld [vmem:[#allocation7 + $0x118] sm:$0xff]
        %v664 = vld [vmem:[#allocation7 + $0x120] sm:$0xff]
        %v665 = vld [vmem:[#allocation7 + $0x128] sm:$0xff]
        %v666 = vld [vmem:[#allocation7 + $0x130] sm:$0xff]
        %v667 = vld [vmem:[#allocation7 + $0x138] sm:$0xff]
        %v668 = vld [vmem:[#allocation7 + $0x140] sm:$0xff]
        %v669 = vld [vmem:[#allocation7 + $0x148] sm:$0xff]
        %v670 = vld [vmem:[#allocation7 + $0x150] sm:$0xff]
        %v671 = vld [vmem:[#allocation7 + $0x158] sm:$0xff]
        %v672 = vld [vmem:[#allocation7 + $0x160] sm:$0xff]
        %v673 = vld [vmem:[#allocation7 + $0x168] sm:$0xff]
        %v674 = vld [vmem:[#allocation7 + $0x170] sm:$0xff]
        %v675 = vld [vmem:[#allocation7 + $0x178] sm:$0xff]
        %v676 = vld [vmem:[#allocation7 + $0x180] sm:$0xff]
        %v677 = vld [vmem:[#allocation7 + $0x188] sm:$0xff]
        %v678 = vld [vmem:[#allocation7 + $0x190] sm:$0xff]
        %v679 = vld [vmem:[#allocation7 + $0x198] sm:$0xff]
        %v680 = vld [vmem:[#allocation7 + $0x1a0] sm:$0xff]
        %v681 = vld [vmem:[#allocation7 + $0x1a8] sm:$0xff]
        %v682 = vld [vmem:[#allocation7 + $0x1b0] sm:$0xff]
        %v683 = vld [vmem:[#allocation7 + $0x1b8] sm:$0xff]
        %v684 = vld [vmem:[#allocation7 + $0x1c0] sm:$0xff]
        %v685 = vld [vmem:[#allocation7 + $0x1c8] sm:$0xff]
        %v686 = vld [vmem:[#allocation7 + $0x1d0] sm:$0xff]
        %v687 = vld [vmem:[#allocation7 + $0x1d8] sm:$0xff]
        %v688 = vld [vmem:[#allocation7 + $0x1e0] sm:$0xff]
        %v689 = vld [vmem:[#allocation7 + $0x1e8] sm:$0xff]
        %v690 = vld [vmem:[#allocation7 + $0x1f0] sm:$0xff]
        %v691 = vld [vmem:[#allocation7 + $0x1f8] sm:$0xff]
        %v692 = vld [vmem:[#allocation7 + $0x200] sm:$0xff]
        %v693 = vld [vmem:[#allocation7 + $0x208] sm:$0xff]
        %v694 = vld [vmem:[#allocation7 + $0x210] sm:$0xff]
        %v695 = vld [vmem:[#allocation7 + $0x218] sm:$0xff]
        %v696 = vld [vmem:[#allocation7 + $0x220] sm:$0xff]
        %v697 = vld [vmem:[#allocation7 + $0x228] sm:$0xff]
        %v698 = vld [vmem:[#allocation7 + $0x230] sm:$0xff]
        %v699 = vld [vmem:[#allocation7 + $0x238] sm:$0xff]
        %v700 = vld [vmem:[#allocation7 + $0x240] sm:$0xff]
        %v701 = vld [vmem:[#allocation7 + $0x248] sm:$0xff]
        %v702 = vld [vmem:[#allocation7 + $0x250] sm:$0xff]
        %v703 = vld [vmem:[#allocation7 + $0x258] sm:$0xff]
        %v704 = vld [vmem:[#allocation7 + $0x260] sm:$0xff]
        %v705 = vld [vmem:[#allocation7 + $0x268] sm:$0xff]
        %v706 = vld [vmem:[#allocation7 + $0x270] sm:$0xff]
        %v707 = vld [vmem:[#allocation7 + $0x278] sm:$0xff]
        %v708 = vld [vmem:[#allocation7 + $0x280] sm:$0xff]
        %v709 = vld [vmem:[#allocation7 + $0x288] sm:$0xff]
        %v710 = vld [vmem:[#allocation7 + $0x290] sm:$0xff]
        %v711 = vld [vmem:[#allocation7 + $0x298] sm:$0xff]
        %v712 = vld [vmem:[#allocation7 + $0x2a0] sm:$0xff]
        %v713 = vld [vmem:[#allocation7 + $0x2a8] sm:$0xff]
        %v714 = vld [vmem:[#allocation7 + $0x2b0] sm:$0xff]
        %v715 = vld [vmem:[#allocation7 + $0x2b8] sm:$0xff]
        %v716 = vld [vmem:[#allocation7 + $0x2c0] sm:$0xff]
        %v717 = vld [vmem:[#allocation7 + $0x2c8] sm:$0xff]
        %v718 = vld [vmem:[#allocation7 + $0x2d0] sm:$0xff]
        %v719 = vld [vmem:[#allocation7 + $0x2d8] sm:$0xff]
        %v720 = vld [vmem:[#allocation7 + $0x2e0] sm:$0xff]
        %v721 = vld [vmem:[#allocation7 + $0x2e8] sm:$0xff]
        %v722 = vld [vmem:[#allocation7 + $0x2f0] sm:$0xff]
        %v723 = vld [vmem:[#allocation7 + $0x2f8] sm:$0xff]
        %v724 = vld [vmem:[#allocation7 + $0x300] sm:$0xff]
        %v725 = vld [vmem:[#allocation7 + $0x308] sm:$0xff]
        %v726 = vld [vmem:[#allocation7 + $0x310] sm:$0xff]
        %v727 = vld [vmem:[#allocation7 + $0x318] sm:$0xff]
        %v728 = vld [vmem:[#allocation7 + $0x320] sm:$0xff]
        %v729 = vld [vmem:[#allocation7 + $0x328] sm:$0xff]
        %v730 = vld [vmem:[#allocation7 + $0x330] sm:$0xff]
        %v731 = vld [vmem:[#allocation7 + $0x338] sm:$0xff]
        %v732 = vld [vmem:[#allocation7 + $0x340] sm:$0xff]
        %v733 = vld [vmem:[#allocation7 + $0x348] sm:$0xff]
        %v734 = vld [vmem:[#allocation7 + $0x350] sm:$0xff]
        %v735 = vld [vmem:[#allocation7 + $0x358] sm:$0xff]
        %v736 = vld [vmem:[#allocation7 + $0x360] sm:$0xff]
        %v737 = vld [vmem:[#allocation7 + $0x368] sm:$0xff]
        %v738 = vld [vmem:[#allocation7 + $0x370] sm:$0xff]
        %v739 = vld [vmem:[#allocation7 + $0x378] sm:$0xff]
        %v740 = vld [vmem:[#allocation7 + $0x380] sm:$0xff]
        %v741 = vld [vmem:[#allocation7 + $0x388] sm:$0xff]
        %v742 = vld [vmem:[#allocation7 + $0x390] sm:$0xff]
        %v743 = vld [vmem:[#allocation7 + $0x398] sm:$0xff]
        %v744 = vld [vmem:[#allocation7 + $0x3a0] sm:$0xff]
        %v745 = vld [vmem:[#allocation7 + $0x3a8] sm:$0xff]
        %v746 = vld [vmem:[#allocation7 + $0x3b0] sm:$0xff]
        %v747 = vld [vmem:[#allocation7 + $0x3b8] sm:$0xff]
        %v748 = vld [vmem:[#allocation7 + $0x3c0] sm:$0xff]
        %v749 = vld [vmem:[#allocation7 + $0x3c8] sm:$0xff]
        %v750 = vld [vmem:[#allocation7 + $0x3d0] sm:$0xff]
        %v751 = vld [vmem:[#allocation7 + $0x3d8] sm:$0xff]
        %v752 = vld [vmem:[#allocation7 + $0x3e0] sm:$0xff]
        %v753 = vld [vmem:[#allocation7 + $0x3e8] sm:$0xff]
        %v754 = vld [vmem:[#allocation7 + $0x3f0] sm:$0xff]
        %v755 = vld [vmem:[#allocation7 + $0x3f8] sm:$0xff]
        %v756 = vld [vmem:[#allocation7 + $0x400] sm:$0xff]
        %v757 = vld [vmem:[#allocation7 + $0x408] sm:$0xff]
        %v758 = vld [vmem:[#allocation7 + $0x410] sm:$0xff]
        %v759 = vld [vmem:[#allocation7 + $0x418] sm:$0xff]
        %v760 = vld [vmem:[#allocation7 + $0x420] sm:$0xff]
        %v761 = vld [vmem:[#allocation7 + $0x428] sm:$0xff]
        %v762 = vld [vmem:[#allocation7 + $0x430] sm:$0xff]
        %v763 = vld [vmem:[#allocation7 + $0x438] sm:$0xff]
        %v764 = vld [vmem:[#allocation7 + $0x440] sm:$0xff]
        %v765 = vld [vmem:[#allocation7 + $0x448] sm:$0xff]
        %v766 = vld [vmem:[#allocation7 + $0x450] sm:$0xff]
        %v767 = vld [vmem:[#allocation7 + $0x458] sm:$0xff]
        %v768 = vld [vmem:[#allocation7 + $0x460] sm:$0xff]
        %v769 = vld [vmem:[#allocation7 + $0x468] sm:$0xff]
        %v770 = vld [vmem:[#allocation7 + $0x470] sm:$0xff]
        %v771 = vld [vmem:[#allocation7 + $0x478] sm:$0xff]
        %v772 = vld [vmem:[#allocation7 + $0x480] sm:$0xff]
        %v773 = vld [vmem:[#allocation7 + $0x488] sm:$0xff]
        %v774 = vld [vmem:[#allocation7 + $0x490] sm:$0xff]
        %v775 = vld [vmem:[#allocation7 + $0x498] sm:$0xff]
        %v776 = vld [vmem:[#allocation7 + $0x4a0] sm:$0xff]
        %v777 = vld [vmem:[#allocation7 + $0x4a8] sm:$0xff]
        %v778 = vld [vmem:[#allocation7 + $0x4b0] sm:$0xff]
        %v779 = vld [vmem:[#allocation7 + $0x4b8] sm:$0xff]
        %v780 = vld [vmem:[#allocation7 + $0x4c0] sm:$0xff]
        %v781 = vld [vmem:[#allocation7 + $0x4c8] sm:$0xff]
        %v782 = vld [vmem:[#allocation7 + $0x4d0] sm:$0xff]
        %v783 = vld [vmem:[#allocation7 + $0x4d8] sm:$0xff]
        %v784 = vld [vmem:[#allocation7 + $0x4e0] sm:$0xff]
        %v785 = vld [vmem:[#allocation7 + $0x4e8] sm:$0xff]
        %v786 = vld [vmem:[#allocation7 + $0x4f0] sm:$0xff]
        %v787 = vld [vmem:[#allocation7 + $0x4f8] sm:$0xff]
        %v788 = vld [vmem:[#allocation7 + $0x500] sm:$0xff]
        %v789 = vld [vmem:[#allocation7 + $0x508] sm:$0xff]
        %v790 = vld [vmem:[#allocation7 + $0x510] sm:$0xff]
        %v791 = vld [vmem:[#allocation7 + $0x518] sm:$0xff]
        %v792 = vld [vmem:[#allocation7 + $0x520] sm:$0xff]
        %v793 = vld [vmem:[#allocation7 + $0x528] sm:$0xff]
        %v794 = vld [vmem:[#allocation7 + $0x530] sm:$0xff]
        %v795 = vld [vmem:[#allocation7 + $0x538] sm:$0xff]
        %v796 = vld [vmem:[#allocation7 + $0x540] sm:$0xff]
        %v797 = vld [vmem:[#allocation7 + $0x548] sm:$0xff]
        %v798 = vld [vmem:[#allocation7 + $0x550] sm:$0xff]
        %v799 = vld [vmem:[#allocation7 + $0x558] sm:$0xff]
        %v800 = vld [vmem:[#allocation7 + $0x560] sm:$0xff]
        %v801 = vld [vmem:[#allocation7 + $0x568] sm:$0xff]
        %v802 = vld [vmem:[#allocation7 + $0x570] sm:$0xff]
        %v803 = vld [vmem:[#allocation7 + $0x578] sm:$0xff]
        %v804 = vld [vmem:[#allocation7 + $0x580] sm:$0xff]
        %v805 = vld [vmem:[#allocation7 + $0x588] sm:$0xff]
        %v806 = vld [vmem:[#allocation7 + $0x590] sm:$0xff]
        %v807 = vld [vmem:[#allocation7 + $0x598] sm:$0xff]
        %v808 = vld [vmem:[#allocation7 + $0x5a0] sm:$0xff]
        %v809 = vld [vmem:[#allocation7 + $0x5a8] sm:$0xff]
        %v810 = vld [vmem:[#allocation7 + $0x5b0] sm:$0xff]
        %v811 = vld [vmem:[#allocation7 + $0x5b8] sm:$0xff]
        %v812 = vld [vmem:[#allocation7 + $0x5c0] sm:$0xff]
        %v813 = vld [vmem:[#allocation7 + $0x5c8] sm:$0xff]
        %v814 = vld [vmem:[#allocation7 + $0x5d0] sm:$0xff]
        %v815 = vld [vmem:[#allocation7 + $0x5d8] sm:$0xff]
        %v816 = vld [vmem:[#allocation7 + $0x5e0] sm:$0xff]
        %v817 = vld [vmem:[#allocation7 + $0x5e8] sm:$0xff]
        %v818 = vld [vmem:[#allocation7 + $0x5f0] sm:$0xff]
        %v819 = vld [vmem:[#allocation7 + $0x5f8] sm:$0xff]
        %v820 = vld [vmem:[#allocation8] sm:$0xff]
        %v821 = vld [vmem:[#allocation8 + $0x8] sm:$0xff]
        %v822 = vld [vmem:[#allocation8 + $0x10] sm:$0xff]
        %v823 = vld [vmem:[#allocation8 + $0x18] sm:$0xff]
        %v824 = vld [vmem:[#allocation8 + $0x20] sm:$0xff]
        %v825 = vld [vmem:[#allocation8 + $0x28] sm:$0xff]
        %v826 = vld [vmem:[#allocation8 + $0x30] sm:$0xff]
        %v827 = vld [vmem:[#allocation8 + $0x38] sm:$0xff]
        %v828 = vld [vmem:[#allocation8 + $0x40] sm:$0xff]
        %v829 = vld [vmem:[#allocation8 + $0x48] sm:$0xff]
        %v830 = vld [vmem:[#allocation8 + $0x50] sm:$0xff]
        %v831 = vld [vmem:[#allocation8 + $0x58] sm:$0xff]
        %v832 = vld [vmem:[#allocation8 + $0x60] sm:$0xff]
        %v833 = vld [vmem:[#allocation8 + $0x68] sm:$0xff]
        %v834 = vld [vmem:[#allocation8 + $0x70] sm:$0xff]
        %v835 = vld [vmem:[#allocation8 + $0x78] sm:$0xff]
        %v836 = vld [vmem:[#allocation8 + $0x80] sm:$0xff]
        %v837 = vld [vmem:[#allocation8 + $0x88] sm:$0xff]
        %v838 = vld [vmem:[#allocation8 + $0x90] sm:$0xff]
        %v839 = vld [vmem:[#allocation8 + $0x98] sm:$0xff]
        %v840 = vld [vmem:[#allocation8 + $0xa0] sm:$0xff]
        %v841 = vld [vmem:[#allocation8 + $0xa8] sm:$0xff]
        %v842 = vld [vmem:[#allocation8 + $0xb0] sm:$0xff]
        %v843 = vld [vmem:[#allocation8 + $0xb8] sm:$0xff]
        %v844 = vld [vmem:[#allocation8 + $0xc0] sm:$0xff]
        %v845 = vld [vmem:[#allocation8 + $0xc8] sm:$0xff]
        %v846 = vld [vmem:[#allocation8 + $0xd0] sm:$0xff]
        %v847 = vld [vmem:[#allocation8 + $0xd8] sm:$0xff]
        %v848 = vld [vmem:[#allocation8 + $0xe0] sm:$0xff]
        %v849 = vld [vmem:[#allocation8 + $0xe8] sm:$0xff]
        %v850 = vld [vmem:[#allocation8 + $0xf0] sm:$0xff]
        %v851 = vld [vmem:[#allocation8 + $0xf8] sm:$0xff]
        %v852 = vld [vmem:[#allocation8 + $0x100] sm:$0xff]
        %v853 = vld [vmem:[#allocation8 + $0x108] sm:$0xff]
        %v854 = vld [vmem:[#allocation8 + $0x110] sm:$0xff]
        %v855 = vld [vmem:[#allocation8 + $0x118] sm:$0xff]
        %v856 = vld [vmem:[#allocation8 + $0x120] sm:$0xff]
        %v857 = vld [vmem:[#allocation8 + $0x128] sm:$0xff]
        %v858 = vld [vmem:[#allocation8 + $0x130] sm:$0xff]
        %v859 = vld [vmem:[#allocation8 + $0x138] sm:$0xff]
        %v860 = vld [vmem:[#allocation8 + $0x140] sm:$0xff]
        %v861 = vld [vmem:[#allocation8 + $0x148] sm:$0xff]
        %v862 = vld [vmem:[#allocation8 + $0x150] sm:$0xff]
        %v863 = vld [vmem:[#allocation8 + $0x158] sm:$0xff]
        %v864 = vld [vmem:[#allocation8 + $0x160] sm:$0xff]
        %v865 = vld [vmem:[#allocation8 + $0x168] sm:$0xff]
        %v866 = vld [vmem:[#allocation8 + $0x170] sm:$0xff]
        %v867 = vld [vmem:[#allocation8 + $0x178] sm:$0xff]
        %v868 = vld [vmem:[#allocation8 + $0x180] sm:$0xff]
        %v869 = vld [vmem:[#allocation8 + $0x188] sm:$0xff]
        %v870 = vld [vmem:[#allocation8 + $0x190] sm:$0xff]
        %v871 = vld [vmem:[#allocation8 + $0x198] sm:$0xff]
        %v872 = vld [vmem:[#allocation8 + $0x1a0] sm:$0xff]
        %v873 = vld [vmem:[#allocation8 + $0x1a8] sm:$0xff]
        %v874 = vld [vmem:[#allocation8 + $0x1b0] sm:$0xff]
        %v875 = vld [vmem:[#allocation8 + $0x1b8] sm:$0xff]
        %v876 = vld [vmem:[#allocation8 + $0x1c0] sm:$0xff]
        %v877 = vld [vmem:[#allocation8 + $0x1c8] sm:$0xff]
        %v878 = vld [vmem:[#allocation8 + $0x1d0] sm:$0xff]
        %v879 = vld [vmem:[#allocation8 + $0x1d8] sm:$0xff]
        %v880 = vld [vmem:[#allocation8 + $0x1e0] sm:$0xff]
        %v881 = vld [vmem:[#allocation8 + $0x1e8] sm:$0xff]
        %v882 = vld [vmem:[#allocation8 + $0x1f0] sm:$0xff]
        %v883 = vld [vmem:[#allocation8 + $0x1f8] sm:$0xff]
        %v884 = vld [vmem:[#allocation8 + $0x200] sm:$0xff]
        %v885 = vld [vmem:[#allocation8 + $0x208] sm:$0xff]
        %v886 = vld [vmem:[#allocation8 + $0x210] sm:$0xff]
        %v887 = vld [vmem:[#allocation8 + $0x218] sm:$0xff]
        %v888 = vld [vmem:[#allocation8 + $0x220] sm:$0xff]
        %v889 = vld [vmem:[#allocation8 + $0x228] sm:$0xff]
        %v890 = vld [vmem:[#allocation8 + $0x230] sm:$0xff]
        %v891 = vld [vmem:[#allocation8 + $0x238] sm:$0xff]
        %v892 = vld [vmem:[#allocation8 + $0x240] sm:$0xff]
        %v893 = vld [vmem:[#allocation8 + $0x248] sm:$0xff]
        %v894 = vld [vmem:[#allocation8 + $0x250] sm:$0xff]
        %v895 = vld [vmem:[#allocation8 + $0x258] sm:$0xff]
        %v896 = vld [vmem:[#allocation8 + $0x260] sm:$0xff]
        %v897 = vld [vmem:[#allocation8 + $0x268] sm:$0xff]
        %v898 = vld [vmem:[#allocation8 + $0x270] sm:$0xff]
        %v899 = vld [vmem:[#allocation8 + $0x278] sm:$0xff]
        %v900 = vld [vmem:[#allocation8 + $0x280] sm:$0xff]
        %v901 = vld [vmem:[#allocation8 + $0x288] sm:$0xff]
        %v902 = vld [vmem:[#allocation8 + $0x290] sm:$0xff]
        %v903 = vld [vmem:[#allocation8 + $0x298] sm:$0xff]
        %v904 = vld [vmem:[#allocation8 + $0x2a0] sm:$0xff]
        %v905 = vld [vmem:[#allocation8 + $0x2a8] sm:$0xff]
        %v906 = vld [vmem:[#allocation8 + $0x2b0] sm:$0xff]
        %v907 = vld [vmem:[#allocation8 + $0x2b8] sm:$0xff]
        %v908 = vld [vmem:[#allocation8 + $0x2c0] sm:$0xff]
        %v909 = vld [vmem:[#allocation8 + $0x2c8] sm:$0xff]
        %v910 = vld [vmem:[#allocation8 + $0x2d0] sm:$0xff]
        %v911 = vld [vmem:[#allocation8 + $0x2d8] sm:$0xff]
        %v912 = vld [vmem:[#allocation8 + $0x2e0] sm:$0xff]
        %v913 = vld [vmem:[#allocation8 + $0x2e8] sm:$0xff]
        %v914 = vld [vmem:[#allocation8 + $0x2f0] sm:$0xff]
        %v915 = vld [vmem:[#allocation8 + $0x2f8] sm:$0xff]
        %v916 = vld [vmem:[#allocation8 + $0x300] sm:$0xff]
        %v917 = vld [vmem:[#allocation8 + $0x308] sm:$0xff]
        %v918 = vld [vmem:[#allocation8 + $0x310] sm:$0xff]
        %v919 = vld [vmem:[#allocation8 + $0x318] sm:$0xff]
        %v920 = vld [vmem:[#allocation8 + $0x320] sm:$0xff]
        %v921 = vld [vmem:[#allocation8 + $0x328] sm:$0xff]
        %v922 = vld [vmem:[#allocation8 + $0x330] sm:$0xff]
        %v923 = vld [vmem:[#allocation8 + $0x338] sm:$0xff]
        %v924 = vld [vmem:[#allocation8 + $0x340] sm:$0xff]
        %v925 = vld [vmem:[#allocation8 + $0x348] sm:$0xff]
        %v926 = vld [vmem:[#allocation8 + $0x350] sm:$0xff]
        %v927 = vld [vmem:[#allocation8 + $0x358] sm:$0xff]
        %v928 = vld [vmem:[#allocation8 + $0x360] sm:$0xff]
        %v929 = vld [vmem:[#allocation8 + $0x368] sm:$0xff]
        %v930 = vld [vmem:[#allocation8 + $0x370] sm:$0xff]
        %v931 = vld [vmem:[#allocation8 + $0x378] sm:$0xff]
        %v932 = vld [vmem:[#allocation8 + $0x380] sm:$0xff]
        %v933 = vld [vmem:[#allocation8 + $0x388] sm:$0xff]
        %v934 = vld [vmem:[#allocation8 + $0x390] sm:$0xff]
        %v935 = vld [vmem:[#allocation8 + $0x398] sm:$0xff]
        %v936 = vld [vmem:[#allocation8 + $0x3a0] sm:$0xff]
        %v937 = vld [vmem:[#allocation8 + $0x3a8] sm:$0xff]
        %v938 = vld [vmem:[#allocation8 + $0x3b0] sm:$0xff]
        %v939 = vld [vmem:[#allocation8 + $0x3b8] sm:$0xff]
        %v940 = vld [vmem:[#allocation8 + $0x3c0] sm:$0xff]
        %v941 = vld [vmem:[#allocation8 + $0x3c8] sm:$0xff]
        %v942 = vld [vmem:[#allocation8 + $0x3d0] sm:$0xff]
        %v943 = vld [vmem:[#allocation8 + $0x3d8] sm:$0xff]
        %v944 = vld [vmem:[#allocation8 + $0x3e0] sm:$0xff]
        %v945 = vld [vmem:[#allocation8 + $0x3e8] sm:$0xff]
        %v946 = vld [vmem:[#allocation8 + $0x3f0] sm:$0xff]
        %v947 = vld [vmem:[#allocation8 + $0x3f8] sm:$0xff]
        %v948 = vld [vmem:[#allocation8 + $0x400] sm:$0xff]
        %v949 = vld [vmem:[#allocation8 + $0x408] sm:$0xff]
        %v950 = vld [vmem:[#allocation8 + $0x410] sm:$0xff]
        %v951 = vld [vmem:[#allocation8 + $0x418] sm:$0xff]
        %v952 = vld [vmem:[#allocation8 + $0x420] sm:$0xff]
        %v953 = vld [vmem:[#allocation8 + $0x428] sm:$0xff]
        %v954 = vld [vmem:[#allocation8 + $0x430] sm:$0xff]
        %v955 = vld [vmem:[#allocation8 + $0x438] sm:$0xff]
        %v956 = vld [vmem:[#allocation8 + $0x440] sm:$0xff]
        %v957 = vld [vmem:[#allocation8 + $0x448] sm:$0xff]
        %v958 = vld [vmem:[#allocation8 + $0x450] sm:$0xff]
        %v959 = vld [vmem:[#allocation8 + $0x458] sm:$0xff]
        %v960 = vld [vmem:[#allocation8 + $0x460] sm:$0xff]
        %v961 = vld [vmem:[#allocation8 + $0x468] sm:$0xff]
        %v962 = vld [vmem:[#allocation8 + $0x470] sm:$0xff]
        %v963 = vld [vmem:[#allocation8 + $0x478] sm:$0xff]
        %v964 = vld [vmem:[#allocation8 + $0x480] sm:$0xff]
        %v965 = vld [vmem:[#allocation8 + $0x488] sm:$0xff]
        %v966 = vld [vmem:[#allocation8 + $0x490] sm:$0xff]
        %v967 = vld [vmem:[#allocation8 + $0x498] sm:$0xff]
        %v968 = vld [vmem:[#allocation8 + $0x4a0] sm:$0xff]
        %v969 = vld [vmem:[#allocation8 + $0x4a8] sm:$0xff]
        %v970 = vld [vmem:[#allocation8 + $0x4b0] sm:$0xff]
        %v971 = vld [vmem:[#allocation8 + $0x4b8] sm:$0xff]
        %v972 = vld [vmem:[#allocation8 + $0x4c0] sm:$0xff]
        %v973 = vld [vmem:[#allocation8 + $0x4c8] sm:$0xff]
        %v974 = vld [vmem:[#allocation8 + $0x4d0] sm:$0xff]
        %v975 = vld [vmem:[#allocation8 + $0x4d8] sm:$0xff]
        %v976 = vld [vmem:[#allocation8 + $0x4e0] sm:$0xff]
        %v977 = vld [vmem:[#allocation8 + $0x4e8] sm:$0xff]
        %v978 = vld [vmem:[#allocation8 + $0x4f0] sm:$0xff]
        %v979 = vld [vmem:[#allocation8 + $0x4f8] sm:$0xff]
        %v980 = vld [vmem:[#allocation8 + $0x500] sm:$0xff]
        %v981 = vld [vmem:[#allocation8 + $0x508] sm:$0xff]
        %v982 = vld [vmem:[#allocation8 + $0x510] sm:$0xff]
        %v983 = vld [vmem:[#allocation8 + $0x518] sm:$0xff]
        %v984 = vld [vmem:[#allocation8 + $0x520] sm:$0xff]
        %v985 = vld [vmem:[#allocation8 + $0x528] sm:$0xff]
        %v986 = vld [vmem:[#allocation8 + $0x530] sm:$0xff]
        %v987 = vld [vmem:[#allocation8 + $0x538] sm:$0xff]
        %v988 = vld [vmem:[#allocation8 + $0x540] sm:$0xff]
        %v989 = vld [vmem:[#allocation8 + $0x548] sm:$0xff]
        %v990 = vld [vmem:[#allocation8 + $0x550] sm:$0xff]
        %v991 = vld [vmem:[#allocation8 + $0x558] sm:$0xff]
        %v992 = vld [vmem:[#allocation8 + $0x560] sm:$0xff]
        %v993 = vld [vmem:[#allocation8 + $0x568] sm:$0xff]
        %v994 = vld [vmem:[#allocation8 + $0x570] sm:$0xff]
        %v995 = vld [vmem:[#allocation8 + $0x578] sm:$0xff]
        %v996 = vld [vmem:[#allocation8 + $0x580] sm:$0xff]
        %v997 = vld [vmem:[#allocation8 + $0x588] sm:$0xff]
        %v998 = vld [vmem:[#allocation8 + $0x590] sm:$0xff]
        %v999 = vld [vmem:[#allocation8 + $0x598] sm:$0xff]
        %v1000 = vld [vmem:[#allocation8 + $0x5a0] sm:$0xff]
        %v1001 = vld [vmem:[#allocation8 + $0x5a8] sm:$0xff]
        %v1002 = vld [vmem:[#allocation8 + $0x5b0] sm:$0xff]
        %v1003 = vld [vmem:[#allocation8 + $0x5b8] sm:$0xff]
        %v1004 = vld [vmem:[#allocation8 + $0x5c0] sm:$0xff]
        %v1005 = vld [vmem:[#allocation8 + $0x5c8] sm:$0xff]
        %v1006 = vld [vmem:[#allocation8 + $0x5d0] sm:$0xff]
        %v1007 = vld [vmem:[#allocation8 + $0x5d8] sm:$0xff]
        %v1008 = vld [vmem:[#allocation8 + $0x5e0] sm:$0xff]
        %v1009 = vld [vmem:[#allocation8 + $0x5e8] sm:$0xff]
        %v1010 = vld [vmem:[#allocation8 + $0x5f0] sm:$0xff]
        %v1011 = vld [vmem:[#allocation8 + $0x5f8] sm:$0xff]
        %v1204 = vunpack.c.l.b16 %v628
        %v1205 = vunpack.c.h.b16 %v628
        %v1206 = vunpack.c.l.b16 %v629
        %v1207 = vunpack.c.h.b16 %v629
        %v1208 = vunpack.c.l.b16 %v630
        %v1209 = vunpack.c.h.b16 %v630
        %v1210 = vunpack.c.l.b16 %v631
        %v1211 = vunpack.c.h.b16 %v631
        %v1212 = vunpack.c.l.b16 %v632
        %v1213 = vunpack.c.h.b16 %v632
        %v1214 = vunpack.c.l.b16 %v633
        %v1215 = vunpack.c.h.b16 %v633
        %v1216 = vunpack.c.l.b16 %v634
        %v1217 = vunpack.c.h.b16 %v634
        %v1218 = vunpack.c.l.b16 %v635
        %v1219 = vunpack.c.h.b16 %v635
        %v1220 = vunpack.c.l.b16 %v636
        %v1221 = vunpack.c.h.b16 %v636
        %v1222 = vunpack.c.l.b16 %v637
        %v1223 = vunpack.c.h.b16 %v637
        %v1224 = vunpack.c.l.b16 %v638
        %v1225 = vunpack.c.h.b16 %v638
        %v1226 = vunpack.c.l.b16 %v639
        %v1227 = vunpack.c.h.b16 %v639
        %v1228 = vunpack.c.l.b16 %v640
        %v1229 = vunpack.c.h.b16 %v640
        %v1230 = vunpack.c.l.b16 %v641
        %v1231 = vunpack.c.h.b16 %v641
        %v1232 = vunpack.c.l.b16 %v642
        %v1233 = vunpack.c.h.b16 %v642
        %v1234 = vunpack.c.l.b16 %v643
        %v1235 = vunpack.c.h.b16 %v643
        %v1236 = vunpack.c.l.b16 %v644
        %v1237 = vunpack.c.h.b16 %v644
        %v1238 = vunpack.c.l.b16 %v645
        %v1239 = vunpack.c.h.b16 %v645
        %v1240 = vunpack.c.l.b16 %v646
        %v1241 = vunpack.c.h.b16 %v646
        %v1242 = vunpack.c.l.b16 %v647
        %v1243 = vunpack.c.h.b16 %v647
        %v1244 = vunpack.c.l.b16 %v648
        %v1245 = vunpack.c.h.b16 %v648
        %v1246 = vunpack.c.l.b16 %v649
        %v1247 = vunpack.c.h.b16 %v649
        %v1248 = vunpack.c.l.b16 %v650
        %v1249 = vunpack.c.h.b16 %v650
        %v1250 = vunpack.c.l.b16 %v651
        %v1251 = vunpack.c.h.b16 %v651
        %v1252 = vunpack.c.l.b16 %v652
        %v1253 = vunpack.c.h.b16 %v652
        %v1254 = vunpack.c.l.b16 %v653
        %v1255 = vunpack.c.h.b16 %v653
        %v1256 = vunpack.c.l.b16 %v654
        %v1257 = vunpack.c.h.b16 %v654
        %v1258 = vunpack.c.l.b16 %v655
        %v1259 = vunpack.c.h.b16 %v655
        %v1260 = vunpack.c.l.b16 %v656
        %v1261 = vunpack.c.h.b16 %v656
        %v1262 = vunpack.c.l.b16 %v657
        %v1263 = vunpack.c.h.b16 %v657
        %v1264 = vunpack.c.l.b16 %v658
        %v1265 = vunpack.c.h.b16 %v658
        %v1266 = vunpack.c.l.b16 %v659
        %v1267 = vunpack.c.h.b16 %v659
        %v1268 = vunpack.c.l.b16 %v660
        %v1269 = vunpack.c.h.b16 %v660
        %v1270 = vunpack.c.l.b16 %v661
        %v1271 = vunpack.c.h.b16 %v661
        %v1272 = vunpack.c.l.b16 %v662
        %v1273 = vunpack.c.h.b16 %v662
        %v1274 = vunpack.c.l.b16 %v663
        %v1275 = vunpack.c.h.b16 %v663
        %v1276 = vunpack.c.l.b16 %v664
        %v1277 = vunpack.c.h.b16 %v664
        %v1278 = vunpack.c.l.b16 %v665
        %v1279 = vunpack.c.h.b16 %v665
        %v1280 = vunpack.c.l.b16 %v666
        %v1281 = vunpack.c.h.b16 %v666
        %v1282 = vunpack.c.l.b16 %v667
        %v1283 = vunpack.c.h.b16 %v667
        %v1284 = vunpack.c.l.b16 %v668
        %v1285 = vunpack.c.h.b16 %v668
        %v1286 = vunpack.c.l.b16 %v669
        %v1287 = vunpack.c.h.b16 %v669
        %v1288 = vunpack.c.l.b16 %v670
        %v1289 = vunpack.c.h.b16 %v670
        %v1290 = vunpack.c.l.b16 %v671
        %v1291 = vunpack.c.h.b16 %v671
        %v1292 = vunpack.c.l.b16 %v672
        %v1293 = vunpack.c.h.b16 %v672
        %v1294 = vunpack.c.l.b16 %v673
        %v1295 = vunpack.c.h.b16 %v673
        %v1296 = vunpack.c.l.b16 %v674
        %v1297 = vunpack.c.h.b16 %v674
        %v1298 = vunpack.c.l.b16 %v675
        %v1299 = vunpack.c.h.b16 %v675
        %v1300 = vunpack.c.l.b16 %v676
        %v1301 = vunpack.c.h.b16 %v676
        %v1302 = vunpack.c.l.b16 %v677
        %v1303 = vunpack.c.h.b16 %v677
        %v1304 = vunpack.c.l.b16 %v678
        %v1305 = vunpack.c.h.b16 %v678
        %v1306 = vunpack.c.l.b16 %v679
        %v1307 = vunpack.c.h.b16 %v679
        %v1308 = vunpack.c.l.b16 %v680
        %v1309 = vunpack.c.h.b16 %v680
        %v1310 = vunpack.c.l.b16 %v681
        %v1311 = vunpack.c.h.b16 %v681
        %v1312 = vunpack.c.l.b16 %v682
        %v1313 = vunpack.c.h.b16 %v682
        %v1314 = vunpack.c.l.b16 %v683
        %v1315 = vunpack.c.h.b16 %v683
        %v1316 = vunpack.c.l.b16 %v684
        %v1317 = vunpack.c.h.b16 %v684
        %v1318 = vunpack.c.l.b16 %v685
        %v1319 = vunpack.c.h.b16 %v685
        %v1320 = vunpack.c.l.b16 %v686
        %v1321 = vunpack.c.h.b16 %v686
        %v1322 = vunpack.c.l.b16 %v687
        %v1323 = vunpack.c.h.b16 %v687
        %v1324 = vunpack.c.l.b16 %v688
        %v1325 = vunpack.c.h.b16 %v688
        %v1326 = vunpack.c.l.b16 %v689
        %v1327 = vunpack.c.h.b16 %v689
        %v1328 = vunpack.c.l.b16 %v690
        %v1329 = vunpack.c.h.b16 %v690
        %v1330 = vunpack.c.l.b16 %v691
        %v1331 = vunpack.c.h.b16 %v691
        %v1332 = vunpack.c.l.b16 %v692
        %v1333 = vunpack.c.h.b16 %v692
        %v1334 = vunpack.c.l.b16 %v693
        %v1335 = vunpack.c.h.b16 %v693
        %v1336 = vunpack.c.l.b16 %v694
        %v1337 = vunpack.c.h.b16 %v694
        %v1338 = vunpack.c.l.b16 %v695
        %v1339 = vunpack.c.h.b16 %v695
        %v1340 = vunpack.c.l.b16 %v696
        %v1341 = vunpack.c.h.b16 %v696
        %v1342 = vunpack.c.l.b16 %v697
        %v1343 = vunpack.c.h.b16 %v697
        %v1344 = vunpack.c.l.b16 %v698
        %v1345 = vunpack.c.h.b16 %v698
        %v1346 = vunpack.c.l.b16 %v699
        %v1347 = vunpack.c.h.b16 %v699
        %v1348 = vunpack.c.l.b16 %v700
        %v1349 = vunpack.c.h.b16 %v700
        %v1350 = vunpack.c.l.b16 %v701
        %v1351 = vunpack.c.h.b16 %v701
        %v1352 = vunpack.c.l.b16 %v702
        %v1353 = vunpack.c.h.b16 %v702
        %v1354 = vunpack.c.l.b16 %v703
        %v1355 = vunpack.c.h.b16 %v703
        %v1356 = vunpack.c.l.b16 %v704
        %v1357 = vunpack.c.h.b16 %v704
        %v1358 = vunpack.c.l.b16 %v705
        %v1359 = vunpack.c.h.b16 %v705
        %v1360 = vunpack.c.l.b16 %v706
        %v1361 = vunpack.c.h.b16 %v706
        %v1362 = vunpack.c.l.b16 %v707
        %v1363 = vunpack.c.h.b16 %v707
        %v1364 = vunpack.c.l.b16 %v708
        %v1365 = vunpack.c.h.b16 %v708
        %v1366 = vunpack.c.l.b16 %v709
        %v1367 = vunpack.c.h.b16 %v709
        %v1368 = vunpack.c.l.b16 %v710
        %v1369 = vunpack.c.h.b16 %v710
        %v1370 = vunpack.c.l.b16 %v711
        %v1371 = vunpack.c.h.b16 %v711
        %v1372 = vunpack.c.l.b16 %v712
        %v1373 = vunpack.c.h.b16 %v712
        %v1374 = vunpack.c.l.b16 %v713
        %v1375 = vunpack.c.h.b16 %v713
        %v1376 = vunpack.c.l.b16 %v714
        %v1377 = vunpack.c.h.b16 %v714
        %v1378 = vunpack.c.l.b16 %v715
        %v1379 = vunpack.c.h.b16 %v715
        %v1380 = vunpack.c.l.b16 %v716
        %v1381 = vunpack.c.h.b16 %v716
        %v1382 = vunpack.c.l.b16 %v717
        %v1383 = vunpack.c.h.b16 %v717
        %v1384 = vunpack.c.l.b16 %v718
        %v1385 = vunpack.c.h.b16 %v718
        %v1386 = vunpack.c.l.b16 %v719
        %v1387 = vunpack.c.h.b16 %v719
        %v1388 = vunpack.c.l.b16 %v720
        %v1389 = vunpack.c.h.b16 %v720
        %v1390 = vunpack.c.l.b16 %v721
        %v1391 = vunpack.c.h.b16 %v721
        %v1392 = vunpack.c.l.b16 %v722
        %v1393 = vunpack.c.h.b16 %v722
        %v1394 = vunpack.c.l.b16 %v723
        %v1395 = vunpack.c.h.b16 %v723
        %v1396 = vunpack.c.l.b16 %v724
        %v1397 = vunpack.c.h.b16 %v724
        %v1398 = vunpack.c.l.b16 %v725
        %v1399 = vunpack.c.h.b16 %v725
        %v1400 = vunpack.c.l.b16 %v726
        %v1401 = vunpack.c.h.b16 %v726
        %v1402 = vunpack.c.l.b16 %v727
        %v1403 = vunpack.c.h.b16 %v727
        %v1404 = vunpack.c.l.b16 %v728
        %v1405 = vunpack.c.h.b16 %v728
        %v1406 = vunpack.c.l.b16 %v729
        %v1407 = vunpack.c.h.b16 %v729
        %v1408 = vunpack.c.l.b16 %v730
        %v1409 = vunpack.c.h.b16 %v730
        %v1410 = vunpack.c.l.b16 %v731
        %v1411 = vunpack.c.h.b16 %v731
        %v1412 = vunpack.c.l.b16 %v732
        %v1413 = vunpack.c.h.b16 %v732
        %v1414 = vunpack.c.l.b16 %v733
        %v1415 = vunpack.c.h.b16 %v733
        %v1416 = vunpack.c.l.b16 %v734
        %v1417 = vunpack.c.h.b16 %v734
        %v1418 = vunpack.c.l.b16 %v735
        %v1419 = vunpack.c.h.b16 %v735
        %v1420 = vunpack.c.l.b16 %v736
        %v1421 = vunpack.c.h.b16 %v736
        %v1422 = vunpack.c.l.b16 %v737
        %v1423 = vunpack.c.h.b16 %v737
        %v1424 = vunpack.c.l.b16 %v738
        %v1425 = vunpack.c.h.b16 %v738
        %v1426 = vunpack.c.l.b16 %v739
        %v1427 = vunpack.c.h.b16 %v739
        %v1428 = vunpack.c.l.b16 %v740
        %v1429 = vunpack.c.h.b16 %v740
        %v1430 = vunpack.c.l.b16 %v741
        %v1431 = vunpack.c.h.b16 %v741
        %v1432 = vunpack.c.l.b16 %v742
        %v1433 = vunpack.c.h.b16 %v742
        %v1434 = vunpack.c.l.b16 %v743
        %v1435 = vunpack.c.h.b16 %v743
        %v1436 = vunpack.c.l.b16 %v744
        %v1437 = vunpack.c.h.b16 %v744
        %v1438 = vunpack.c.l.b16 %v745
        %v1439 = vunpack.c.h.b16 %v745
        %v1440 = vunpack.c.l.b16 %v746
        %v1441 = vunpack.c.h.b16 %v746
        %v1442 = vunpack.c.l.b16 %v747
        %v1443 = vunpack.c.h.b16 %v747
        %v1444 = vunpack.c.l.b16 %v748
        %v1445 = vunpack.c.h.b16 %v748
        %v1446 = vunpack.c.l.b16 %v749
        %v1447 = vunpack.c.h.b16 %v749
        %v1448 = vunpack.c.l.b16 %v750
        %v1449 = vunpack.c.h.b16 %v750
        %v1450 = vunpack.c.l.b16 %v751
        %v1451 = vunpack.c.h.b16 %v751
        %v1452 = vunpack.c.l.b16 %v752
        %v1453 = vunpack.c.h.b16 %v752
        %v1454 = vunpack.c.l.b16 %v753
        %v1455 = vunpack.c.h.b16 %v753
        %v1456 = vunpack.c.l.b16 %v754
        %v1457 = vunpack.c.h.b16 %v754
        %v1458 = vunpack.c.l.b16 %v755
        %v1459 = vunpack.c.h.b16 %v755
        %v1460 = vunpack.c.l.b16 %v756
        %v1461 = vunpack.c.h.b16 %v756
        %v1462 = vunpack.c.l.b16 %v757
        %v1463 = vunpack.c.h.b16 %v757
        %v1464 = vunpack.c.l.b16 %v758
        %v1465 = vunpack.c.h.b16 %v758
        %v1466 = vunpack.c.l.b16 %v759
        %v1467 = vunpack.c.h.b16 %v759
        %v1468 = vunpack.c.l.b16 %v760
        %v1469 = vunpack.c.h.b16 %v760
        %v1470 = vunpack.c.l.b16 %v761
        %v1471 = vunpack.c.h.b16 %v761
        %v1472 = vunpack.c.l.b16 %v762
        %v1473 = vunpack.c.h.b16 %v762
        %v1474 = vunpack.c.l.b16 %v763
        %v1475 = vunpack.c.h.b16 %v763
        %v1476 = vunpack.c.l.b16 %v764
        %v1477 = vunpack.c.h.b16 %v764
        %v1478 = vunpack.c.l.b16 %v765
        %v1479 = vunpack.c.h.b16 %v765
        %v1480 = vunpack.c.l.b16 %v766
        %v1481 = vunpack.c.h.b16 %v766
        %v1482 = vunpack.c.l.b16 %v767
        %v1483 = vunpack.c.h.b16 %v767
        %v1484 = vunpack.c.l.b16 %v768
        %v1485 = vunpack.c.h.b16 %v768
        %v1486 = vunpack.c.l.b16 %v769
        %v1487 = vunpack.c.h.b16 %v769
        %v1488 = vunpack.c.l.b16 %v770
        %v1489 = vunpack.c.h.b16 %v770
        %v1490 = vunpack.c.l.b16 %v771
        %v1491 = vunpack.c.h.b16 %v771
        %v1492 = vunpack.c.l.b16 %v772
        %v1493 = vunpack.c.h.b16 %v772
        %v1494 = vunpack.c.l.b16 %v773
        %v1495 = vunpack.c.h.b16 %v773
        %v1496 = vunpack.c.l.b16 %v774
        %v1497 = vunpack.c.h.b16 %v774
        %v1498 = vunpack.c.l.b16 %v775
        %v1499 = vunpack.c.h.b16 %v775
        %v1500 = vunpack.c.l.b16 %v776
        %v1501 = vunpack.c.h.b16 %v776
        %v1502 = vunpack.c.l.b16 %v777
        %v1503 = vunpack.c.h.b16 %v777
        %v1504 = vunpack.c.l.b16 %v778
        %v1505 = vunpack.c.h.b16 %v778
        %v1506 = vunpack.c.l.b16 %v779
        %v1507 = vunpack.c.h.b16 %v779
        %v1508 = vunpack.c.l.b16 %v780
        %v1509 = vunpack.c.h.b16 %v780
        %v1510 = vunpack.c.l.b16 %v781
        %v1511 = vunpack.c.h.b16 %v781
        %v1512 = vunpack.c.l.b16 %v782
        %v1513 = vunpack.c.h.b16 %v782
        %v1514 = vunpack.c.l.b16 %v783
        %v1515 = vunpack.c.h.b16 %v783
        %v1516 = vunpack.c.l.b16 %v784
        %v1517 = vunpack.c.h.b16 %v784
        %v1518 = vunpack.c.l.b16 %v785
        %v1519 = vunpack.c.h.b16 %v785
        %v1520 = vunpack.c.l.b16 %v786
        %v1521 = vunpack.c.h.b16 %v786
        %v1522 = vunpack.c.l.b16 %v787
        %v1523 = vunpack.c.h.b16 %v787
        %v1524 = vunpack.c.l.b16 %v788
        %v1525 = vunpack.c.h.b16 %v788
        %v1526 = vunpack.c.l.b16 %v789
        %v1527 = vunpack.c.h.b16 %v789
        %v1528 = vunpack.c.l.b16 %v790
        %v1529 = vunpack.c.h.b16 %v790
        %v1530 = vunpack.c.l.b16 %v791
        %v1531 = vunpack.c.h.b16 %v791
        %v1532 = vunpack.c.l.b16 %v792
        %v1533 = vunpack.c.h.b16 %v792
        %v1534 = vunpack.c.l.b16 %v793
        %v1535 = vunpack.c.h.b16 %v793
        %v1536 = vunpack.c.l.b16 %v794
        %v1537 = vunpack.c.h.b16 %v794
        %v1538 = vunpack.c.l.b16 %v795
        %v1539 = vunpack.c.h.b16 %v795
        %v1540 = vunpack.c.l.b16 %v796
        %v1541 = vunpack.c.h.b16 %v796
        %v1542 = vunpack.c.l.b16 %v797
        %v1543 = vunpack.c.h.b16 %v797
        %v1544 = vunpack.c.l.b16 %v798
        %v1545 = vunpack.c.h.b16 %v798
        %v1546 = vunpack.c.l.b16 %v799
        %v1547 = vunpack.c.h.b16 %v799
        %v1548 = vunpack.c.l.b16 %v800
        %v1549 = vunpack.c.h.b16 %v800
        %v1550 = vunpack.c.l.b16 %v801
        %v1551 = vunpack.c.h.b16 %v801
        %v1552 = vunpack.c.l.b16 %v802
        %v1553 = vunpack.c.h.b16 %v802
        %v1554 = vunpack.c.l.b16 %v803
        %v1555 = vunpack.c.h.b16 %v803
        %v1556 = vunpack.c.l.b16 %v804
        %v1557 = vunpack.c.h.b16 %v804
        %v1558 = vunpack.c.l.b16 %v805
        %v1559 = vunpack.c.h.b16 %v805
        %v1560 = vunpack.c.l.b16 %v806
        %v1561 = vunpack.c.h.b16 %v806
        %v1562 = vunpack.c.l.b16 %v807
        %v1563 = vunpack.c.h.b16 %v807
        %v1564 = vunpack.c.l.b16 %v808
        %v1565 = vunpack.c.h.b16 %v808
        %v1566 = vunpack.c.l.b16 %v809
        %v1567 = vunpack.c.h.b16 %v809
        %v1568 = vunpack.c.l.b16 %v810
        %v1569 = vunpack.c.h.b16 %v810
        %v1570 = vunpack.c.l.b16 %v811
        %v1571 = vunpack.c.h.b16 %v811
        %v1572 = vunpack.c.l.b16 %v812
        %v1573 = vunpack.c.h.b16 %v812
        %v1574 = vunpack.c.l.b16 %v813
        %v1575 = vunpack.c.h.b16 %v813
        %v1576 = vunpack.c.l.b16 %v814
        %v1577 = vunpack.c.h.b16 %v814
        %v1578 = vunpack.c.l.b16 %v815
        %v1579 = vunpack.c.h.b16 %v815
        %v1580 = vunpack.c.l.b16 %v816
        %v1581 = vunpack.c.h.b16 %v816
        %v1582 = vunpack.c.l.b16 %v817
        %v1583 = vunpack.c.h.b16 %v817
        %v1584 = vunpack.c.l.b16 %v818
        %v1585 = vunpack.c.h.b16 %v818
        %v1586 = vunpack.c.l.b16 %v819
        %v1587 = vunpack.c.h.b16 %v819
        %v1588 = vpack.c.b16 %v1210, %v1204
        %v1589 = vpack.c.b16 %v1211, %v1205
        %v1590 = vpack.c.b16 %v1212, %v1206
        %v1591 = vpack.c.b16 %v1213, %v1207
        %v1592 = vpack.c.b16 %v1214, %v1208
        %v1593 = vpack.c.b16 %v1215, %v1209
        %v1594 = vpack.c.b16 %v1222, %v1216
        %v1595 = vpack.c.b16 %v1223, %v1217
        %v1596 = vpack.c.b16 %v1224, %v1218
        %v1597 = vpack.c.b16 %v1225, %v1219
        %v1598 = vpack.c.b16 %v1226, %v1220
        %v1599 = vpack.c.b16 %v1227, %v1221
        %v1600 = vpack.c.b16 %v1234, %v1228
        %v1601 = vpack.c.b16 %v1235, %v1229
        %v1602 = vpack.c.b16 %v1236, %v1230
        %v1603 = vpack.c.b16 %v1237, %v1231
        %v1604 = vpack.c.b16 %v1238, %v1232
        %v1605 = vpack.c.b16 %v1239, %v1233
        %v1606 = vpack.c.b16 %v1246, %v1240
        %v1607 = vpack.c.b16 %v1247, %v1241
        %v1608 = vpack.c.b16 %v1248, %v1242
        %v1609 = vpack.c.b16 %v1249, %v1243
        %v1610 = vpack.c.b16 %v1250, %v1244
        %v1611 = vpack.c.b16 %v1251, %v1245
        %v1612 = vpack.c.b16 %v1258, %v1252
        %v1613 = vpack.c.b16 %v1259, %v1253
        %v1614 = vpack.c.b16 %v1260, %v1254
        %v1615 = vpack.c.b16 %v1261, %v1255
        %v1616 = vpack.c.b16 %v1262, %v1256
        %v1617 = vpack.c.b16 %v1263, %v1257
        %v1618 = vpack.c.b16 %v1270, %v1264
        %v1619 = vpack.c.b16 %v1271, %v1265
        %v1620 = vpack.c.b16 %v1272, %v1266
        %v1621 = vpack.c.b16 %v1273, %v1267
        %v1622 = vpack.c.b16 %v1274, %v1268
        %v1623 = vpack.c.b16 %v1275, %v1269
        %v1624 = vpack.c.b16 %v1282, %v1276
        %v1625 = vpack.c.b16 %v1283, %v1277
        %v1626 = vpack.c.b16 %v1284, %v1278
        %v1627 = vpack.c.b16 %v1285, %v1279
        %v1628 = vpack.c.b16 %v1286, %v1280
        %v1629 = vpack.c.b16 %v1287, %v1281
        %v1630 = vpack.c.b16 %v1294, %v1288
        %v1631 = vpack.c.b16 %v1295, %v1289
        %v1632 = vpack.c.b16 %v1296, %v1290
        %v1633 = vpack.c.b16 %v1297, %v1291
        %v1634 = vpack.c.b16 %v1298, %v1292
        %v1635 = vpack.c.b16 %v1299, %v1293
        %v1636 = vpack.c.b16 %v1306, %v1300
        %v1637 = vpack.c.b16 %v1307, %v1301
        %v1638 = vpack.c.b16 %v1308, %v1302
        %v1639 = vpack.c.b16 %v1309, %v1303
        %v1640 = vpack.c.b16 %v1310, %v1304
        %v1641 = vpack.c.b16 %v1311, %v1305
        %v1642 = vpack.c.b16 %v1318, %v1312
        %v1643 = vpack.c.b16 %v1319, %v1313
        %v1644 = vpack.c.b16 %v1320, %v1314
        %v1645 = vpack.c.b16 %v1321, %v1315
        %v1646 = vpack.c.b16 %v1322, %v1316
        %v1647 = vpack.c.b16 %v1323, %v1317
        %v1648 = vpack.c.b16 %v1330, %v1324
        %v1649 = vpack.c.b16 %v1331, %v1325
        %v1650 = vpack.c.b16 %v1332, %v1326
        %v1651 = vpack.c.b16 %v1333, %v1327
        %v1652 = vpack.c.b16 %v1334, %v1328
        %v1653 = vpack.c.b16 %v1335, %v1329
        %v1654 = vpack.c.b16 %v1342, %v1336
        %v1655 = vpack.c.b16 %v1343, %v1337
        %v1656 = vpack.c.b16 %v1344, %v1338
        %v1657 = vpack.c.b16 %v1345, %v1339
        %v1658 = vpack.c.b16 %v1346, %v1340
        %v1659 = vpack.c.b16 %v1347, %v1341
        %v1660 = vpack.c.b16 %v1354, %v1348
        %v1661 = vpack.c.b16 %v1355, %v1349
        %v1662 = vpack.c.b16 %v1356, %v1350
        %v1663 = vpack.c.b16 %v1357, %v1351
        %v1664 = vpack.c.b16 %v1358, %v1352
        %v1665 = vpack.c.b16 %v1359, %v1353
        %v1666 = vpack.c.b16 %v1366, %v1360
        %v1667 = vpack.c.b16 %v1367, %v1361
        %v1668 = vpack.c.b16 %v1368, %v1362
        %v1669 = vpack.c.b16 %v1369, %v1363
        %v1670 = vpack.c.b16 %v1370, %v1364
        %v1671 = vpack.c.b16 %v1371, %v1365
        %v1672 = vpack.c.b16 %v1378, %v1372
        %v1673 = vpack.c.b16 %v1379, %v1373
        %v1674 = vpack.c.b16 %v1380, %v1374
        %v1675 = vpack.c.b16 %v1381, %v1375
        %v1676 = vpack.c.b16 %v1382, %v1376
        %v1677 = vpack.c.b16 %v1383, %v1377
        %v1678 = vpack.c.b16 %v1390, %v1384
        %v1679 = vpack.c.b16 %v1391, %v1385
        %v1680 = vpack.c.b16 %v1392, %v1386
        %v1681 = vpack.c.b16 %v1393, %v1387
        %v1682 = vpack.c.b16 %v1394, %v1388
        %v1683 = vpack.c.b16 %v1395, %v1389
        %v1684 = vpack.c.b16 %v1402, %v1396
        %v1685 = vpack.c.b16 %v1403, %v1397
        %v1686 = vpack.c.b16 %v1404, %v1398
        %v1687 = vpack.c.b16 %v1405, %v1399
        %v1688 = vpack.c.b16 %v1406, %v1400
        %v1689 = vpack.c.b16 %v1407, %v1401
        %v1690 = vpack.c.b16 %v1414, %v1408
        %v1691 = vpack.c.b16 %v1415, %v1409
        %v1692 = vpack.c.b16 %v1416, %v1410
        %v1693 = vpack.c.b16 %v1417, %v1411
        %v1694 = vpack.c.b16 %v1418, %v1412
        %v1695 = vpack.c.b16 %v1419, %v1413
        %v1696 = vpack.c.b16 %v1426, %v1420
        %v1697 = vpack.c.b16 %v1427, %v1421
        %v1698 = vpack.c.b16 %v1428, %v1422
        %v1699 = vpack.c.b16 %v1429, %v1423
        %v1700 = vpack.c.b16 %v1430, %v1424
        %v1701 = vpack.c.b16 %v1431, %v1425
        %v1702 = vpack.c.b16 %v1438, %v1432
        %v1703 = vpack.c.b16 %v1439, %v1433
        %v1704 = vpack.c.b16 %v1440, %v1434
        %v1705 = vpack.c.b16 %v1441, %v1435
        %v1706 = vpack.c.b16 %v1442, %v1436
        %v1707 = vpack.c.b16 %v1443, %v1437
        %v1708 = vpack.c.b16 %v1450, %v1444
        %v1709 = vpack.c.b16 %v1451, %v1445
        %v1710 = vpack.c.b16 %v1452, %v1446
        %v1711 = vpack.c.b16 %v1453, %v1447
        %v1712 = vpack.c.b16 %v1454, %v1448
        %v1713 = vpack.c.b16 %v1455, %v1449
        %v1714 = vpack.c.b16 %v1462, %v1456
        %v1715 = vpack.c.b16 %v1463, %v1457
        %v1716 = vpack.c.b16 %v1464, %v1458
        %v1717 = vpack.c.b16 %v1465, %v1459
        %v1718 = vpack.c.b16 %v1466, %v1460
        %v1719 = vpack.c.b16 %v1467, %v1461
        %v1720 = vpack.c.b16 %v1474, %v1468
        %v1721 = vpack.c.b16 %v1475, %v1469
        %v1722 = vpack.c.b16 %v1476, %v1470
        %v1723 = vpack.c.b16 %v1477, %v1471
        %v1724 = vpack.c.b16 %v1478, %v1472
        %v1725 = vpack.c.b16 %v1479, %v1473
        %v1726 = vpack.c.b16 %v1486, %v1480
        %v1727 = vpack.c.b16 %v1487, %v1481
        %v1728 = vpack.c.b16 %v1488, %v1482
        %v1729 = vpack.c.b16 %v1489, %v1483
        %v1730 = vpack.c.b16 %v1490, %v1484
        %v1731 = vpack.c.b16 %v1491, %v1485
        %v1732 = vpack.c.b16 %v1498, %v1492
        %v1733 = vpack.c.b16 %v1499, %v1493
        %v1734 = vpack.c.b16 %v1500, %v1494
        %v1735 = vpack.c.b16 %v1501, %v1495
        %v1736 = vpack.c.b16 %v1502, %v1496
        %v1737 = vpack.c.b16 %v1503, %v1497
        %v1738 = vpack.c.b16 %v1510, %v1504
        %v1739 = vpack.c.b16 %v1511, %v1505
        %v1740 = vpack.c.b16 %v1512, %v1506
        %v1741 = vpack.c.b16 %v1513, %v1507
        %v1742 = vpack.c.b16 %v1514, %v1508
        %v1743 = vpack.c.b16 %v1515, %v1509
        %v1744 = vpack.c.b16 %v1522, %v1516
        %v1745 = vpack.c.b16 %v1523, %v1517
        %v1746 = vpack.c.b16 %v1524, %v1518
        %v1747 = vpack.c.b16 %v1525, %v1519
        %v1748 = vpack.c.b16 %v1526, %v1520
        %v1749 = vpack.c.b16 %v1527, %v1521
        %v1750 = vpack.c.b16 %v1534, %v1528
        %v1751 = vpack.c.b16 %v1535, %v1529
        %v1752 = vpack.c.b16 %v1536, %v1530
        %v1753 = vpack.c.b16 %v1537, %v1531
        %v1754 = vpack.c.b16 %v1538, %v1532
        %v1755 = vpack.c.b16 %v1539, %v1533
        %v1756 = vpack.c.b16 %v1546, %v1540
        %v1757 = vpack.c.b16 %v1547, %v1541
        %v1758 = vpack.c.b16 %v1548, %v1542
        %v1759 = vpack.c.b16 %v1549, %v1543
        %v1760 = vpack.c.b16 %v1550, %v1544
        %v1761 = vpack.c.b16 %v1551, %v1545
        %v1762 = vpack.c.b16 %v1558, %v1552
        %v1763 = vpack.c.b16 %v1559, %v1553
        %v1764 = vpack.c.b16 %v1560, %v1554
        %v1765 = vpack.c.b16 %v1561, %v1555
        %v1766 = vpack.c.b16 %v1562, %v1556
        %v1767 = vpack.c.b16 %v1563, %v1557
        %v1768 = vpack.c.b16 %v1570, %v1564
        %v1769 = vpack.c.b16 %v1571, %v1565
        %v1770 = vpack.c.b16 %v1572, %v1566
        %v1771 = vpack.c.b16 %v1573, %v1567
        %v1772 = vpack.c.b16 %v1574, %v1568
        %v1773 = vpack.c.b16 %v1575, %v1569
        %v1774 = vpack.c.b16 %v1582, %v1576
        %v1775 = vpack.c.b16 %v1583, %v1577
        %v1776 = vpack.c.b16 %v1584, %v1578
        %v1777 = vpack.c.b16 %v1585, %v1579
        %v1778 = vpack.c.b16 %v1586, %v1580
        %v1779 = vpack.c.b16 %v1587, %v1581
        %1972 = vmatprep.subr.bf16.mxu0 %v1589
        %1973 = vmatpush1.bf16.msra.mxu0 %v1588
        %1974 = vmatprep.subr.bf16.mxu0 %v1595
        %1975 = vmatpush1.bf16.msra.mxu0 %v1594
        %1976 = vmatprep.subr.bf16.mxu0 %v1601
        %1977 = vmatpush1.bf16.msra.mxu0 %v1600
        %1978 = vmatprep.subr.bf16.mxu0 %v1607
        %1979 = vmatpush1.bf16.msra.mxu0 %v1606
        %1980 = vmatprep.subr.bf16.mxu0 %v1613
        %1981 = vmatpush1.bf16.msra.mxu0 %v1612
        %1982 = vmatprep.subr.bf16.mxu0 %v1619
        %1983 = vmatpush1.bf16.msra.mxu0 %v1618
        %1984 = vmatprep.subr.bf16.mxu0 %v1625
        %1985 = vmatpush1.bf16.msra.mxu0 %v1624
        %1986 = vmatprep.subr.bf16.mxu0 %v1631
        %1987 = vmatpush1.bf16.msra.mxu0 %v1630
        %1988 = vmatprep.subr.bf16.mxu0 %v1637
        %1989 = vmatpush1.bf16.msra.mxu0 %v1636
        %1990 = vmatprep.subr.bf16.mxu0 %v1643
        %1991 = vmatpush1.bf16.msra.mxu0 %v1642
        %1992 = vmatprep.subr.bf16.mxu0 %v1649
        %1993 = vmatpush1.bf16.msra.mxu0 %v1648
        %1994 = vmatprep.subr.bf16.mxu0 %v1655
        %1995 = vmatpush1.bf16.msra.mxu0 %v1654
        %1996 = vmatprep.subr.bf16.mxu0 %v1661
        %1997 = vmatpush1.bf16.msra.mxu0 %v1660
        %1998 = vmatprep.subr.bf16.mxu0 %v1667
        %1999 = vmatpush1.bf16.msra.mxu0 %v1666
        %2000 = vmatprep.subr.bf16.mxu0 %v1673
        %2001 = vmatpush1.bf16.msra.mxu0 %v1672
        %2002 = vmatprep.subr.bf16.mxu0 %v1679
        %2003 = vmatpush1.bf16.msra.mxu0 %v1678
        %2004 = vmatprep.mubr.bf16.mxu0 %v597
        %2005 = vmatmul.mubr.bf16.gmra.mrb[0].mxu0 %v596
        %v2006 = vpop.f32.mrb[0].mxu0
        %v2007 = vadd.f32 0.0, %v2006
        %v2008 = vpop.f32.mrb[0].mxu0
        %v2009 = vadd.f32 0.0, %v2008
        %v2010 = vpop.f32.mrb[0].mxu0
        %v2011 = vadd.f32 0.0, %v2010
        %v2012 = vpop.f32.mrb[0].mxu0
        %v2013 = vadd.f32 0.0, %v2012
        %2014 = vmatprep.mubr.bf16.mxu0 %v601
        %2015 = vmatmul.mubr.bf16.gmra.mrb[0].mxu0 %v600
        %v2016 = vpop.f32.mrb[0].mxu0
        %v2017 = vadd.f32 0.0, %v2016
        %v2018 = vpop.f32.mrb[0].mxu0
        %v2019 = vadd.f32 0.0, %v2018
        %v2020 = vpop.f32.mrb[0].mxu0
        %v2021 = vadd.f32 0.0, %v2020
        %v2022 = vpop.f32.mrb[0].mxu0
        %v2023 = vadd.f32 0.0, %v2022
        %2024 = vmatprep.mubr.bf16.mxu0 %v605
        %2025 = vmatmul.mubr.bf16.gmra.mrb[0].mxu0 %v604
        %v2026 = vpop.f32.mrb[0].mxu0
        %v2027 = vadd.f32 0.0, %v2026
        %v2028 = vpop.f32.mrb[0].mxu0
        %v2029 = vadd.f32 0.0, %v2028
        %v2030 = vpop.f32.mrb[0].mxu0
        %v2031 = vadd.f32 0.0, %v2030
        %v2032 = vpop.f32.mrb[0].mxu0
        %v2033 = vadd.f32 0.0, %v2032
        %2034 = vmatprep.mubr.bf16.mxu0 %v609
        %2035 = vmatmul.mubr.bf16.gmra.mrb[0].mxu0 %v608
        %v2036 = vpop.f32.mrb[0].mxu0
        %v2037 = vadd.f32 0.0, %v2036
        %v2038 = vpop.f32.mrb[0].mxu0
        %v2039 = vadd.f32 0.0, %v2038
        %v2040 = vpop.f32.mrb[0].mxu0
        %v2041 = vadd.f32 0.0, %v2040
        %v2042 = vpop.f32.mrb[0].mxu0
        %v2043 = vadd.f32 0.0, %v2042
        %2044 = vmatprep.mubr.bf16.mxu0 %v613
        %2045 = vmatmul.mubr.bf16.gmra.mrb[0].mxu0 %v612
        %v2046 = vpop.f32.mrb[0].mxu0
        %v2047 = vadd.f32 0.0, %v2046
        %v2048 = vpop.f32.mrb[0].mxu0
        %v2049 = vadd.f32 0.0, %v2048
        %v2050 = vpop.f32.mrb[0].mxu0
        %v2051 = vadd.f32 0.0, %v2050
        %v2052 = vpop.f32.mrb[0].mxu0
        %v2053 = vadd.f32 0.0, %v2052
        %2054 = vmatprep.mubr.bf16.mxu0 %v617
        %2055 = vmatmul.mubr.bf16.gmra.mrb[0].mxu0 %v616
        %v2056 = vpop.f32.mrb[0].mxu0
        %v2057 = vadd.f32 0.0, %v2056
        %v2058 = vpop.f32.mrb[0].mxu0
        %v2059 = vadd.f32 0.0, %v2058
        %v2060 = vpop.f32.mrb[0].mxu0
        %v2061 = vadd.f32 0.0, %v2060
        %v2062 = vpop.f32.mrb[0].mxu0
        %v2063 = vadd.f32 0.0, %v2062
        %2064 = vmatprep.mubr.bf16.mxu0 %v621
        %2065 = vmatmul.mubr.bf16.gmra.mrb[0].mxu0 %v620
        %v2066 = vpop.f32.mrb[0].mxu0
        %v2067 = vadd.f32 0.0, %v2066
        %v2068 = vpop.f32.mrb[0].mxu0
        %v2069 = vadd.f32 0.0, %v2068
        %v2070 = vpop.f32.mrb[0].mxu0
        %v2071 = vadd.f32 0.0, %v2070
        %v2072 = vpop.f32.mrb[0].mxu0
        %v2073 = vadd.f32 0.0, %v2072
        %2074 = vmatprep.mubr.bf16.mxu0 %v625
        %2075 = vmatmul.mubr.bf16.gmra.mrb[0].mxu0 %v624
        %v2076 = vpop.f32.mrb[0].mxu0
        %v2077 = vadd.f32 0.0, %v2076
        %v2078 = vpop.f32.mrb[0].mxu0
        %v2079 = vadd.f32 0.0, %v2078
        %v2080 = vpop.f32.mrb[0].mxu0
        %v2081 = vpop.f32.mrb[0].mxu0
        %2082 = vdwg.mxu0
        %2083 = vmatprep.subr.bf16.mxu0 %v1685
        %2084 = vmatpush1.bf16.msra.mxu0 %v1684
        %2085 = vmatprep.subr.bf16.mxu0 %v1691
        %2086 = vmatpush1.bf16.msra.mxu0 %v1690
        %2087 = vmatprep.subr.bf16.mxu0 %v1697
        %2088 = vmatpush1.bf16.msra.mxu0 %v1696
        %2089 = vmatprep.subr.bf16.mxu0 %v1703
        %2090 = vmatpush1.bf16.msra.mxu0 %v1702
        %2091 = vmatprep.subr.bf16.mxu0 %v1709
        %2092 = vmatpush1.bf16.msra.mxu0 %v1708
        %2093 = vmatprep.subr.bf16.mxu0 %v1715
        %2094 = vmatpush1.bf16.msra.mxu0 %v1714
        %2095 = vmatprep.subr.bf16.mxu0 %v1721
        %2096 = vmatpush1.bf16.msra.mxu0 %v1720
        %2097 = vmatprep.subr.bf16.mxu0 %v1727
        %2098 = vmatpush1.bf16.msra.mxu0 %v1726
        %2099 = vmatprep.subr.bf16.mxu0 %v1733
        %2100 = vmatpush1.bf16.msra.mxu0 %v1732
        %2101 = vmatprep.subr.bf16.mxu0 %v1739
        %2102 = vmatpush1.bf16.msra.mxu0 %v1738
        %2103 = vmatprep.subr.bf16.mxu0 %v1745
        %2104 = vmatpush1.bf16.msra.mxu0 %v1744
        %2105 = vmatprep.subr.bf16.mxu0 %v1751
        %2106 = vmatpush1.bf16.msra.mxu0 %v1750
        %2107 = vmatprep.subr.bf16.mxu0 %v1757
        %2108 = vmatpush1.bf16.msra.mxu0 %v1756
        %2109 = vmatprep.subr.bf16.mxu0 %v1763
        %2110 = vmatpush1.bf16.msra.mxu0 %v1762
        %2111 = vmatprep.subr.bf16.mxu0 %v1769
        %2112 = vmatpush1.bf16.msra.mxu0 %v1768
        %2113 = vmatprep.subr.bf16.mxu0 %v1775
        %2114 = vmatpush1.bf16.msra.mxu0 %v1774
        %2115 = vmatprep.mubr.bf16.mxu0 %v599
        %2116 = vmatmul.mubr.bf16.gmra.mrb[0].mxu0 %v598
        %v2117 = vpop.f32.mrb[0].mxu0
        %v2118 = vadd.f32 %v2007, %v2117
        %v2119 = vpop.f32.mrb[0].mxu0
        %v2120 = vadd.f32 %v2009, %v2119
        %v2121 = vpop.f32.mrb[0].mxu0
        %v2122 = vadd.f32 %v2011, %v2121
        %v2123 = vpop.f32.mrb[0].mxu0
        %v2124 = vadd.f32 %v2013, %v2123
        %2125 = vmatprep.mubr.bf16.mxu0 %v603
        %2126 = vmatmul.mubr.bf16.gmra.mrb[0].mxu0 %v602
        %v2127 = vpop.f32.mrb[0].mxu0
        %v2128 = vadd.f32 %v2017, %v2127
        %v2129 = vpop.f32.mrb[0].mxu0
        %v2130 = vadd.f32 %v2019, %v2129
        %v2131 = vpop.f32.mrb[0].mxu0
        %v2132 = vadd.f32 %v2021, %v2131
        %v2133 = vpop.f32.mrb[0].mxu0
        %v2134 = vadd.f32 %v2023, %v2133
        %2135 = vmatprep.mubr.bf16.mxu0 %v607
        %2136 = vmatmul.mubr.bf16.gmra.mrb[0].mxu0 %v606
        %v2137 = vpop.f32.mrb[0].mxu0
        %v2138 = vadd.f32 %v2027, %v2137
        %v2139 = vpop.f32.mrb[0].mxu0
        %v2140 = vadd.f32 %v2029, %v2139
        %v2141 = vpop.f32.mrb[0].mxu0
        %v2142 = vadd.f32 %v2031, %v2141
        %v2143 = vpop.f32.mrb[0].mxu0
        %v2144 = vadd.f32 %v2033, %v2143
        %2145 = vmatprep.mubr.bf16.mxu0 %v611
        %2146 = vmatmul.mubr.bf16.gmra.mrb[0].mxu0 %v610
        %v2147 = vpop.f32.mrb[0].mxu0
        %v2148 = vadd.f32 %v2037, %v2147
        %v2149 = vpop.f32.mrb[0].mxu0
        %v2150 = vadd.f32 %v2039, %v2149
        %v2151 = vpop.f32.mrb[0].mxu0
        %v2152 = vadd.f32 %v2041, %v2151
        %v2153 = vpop.f32.mrb[0].mxu0
        %v2154 = vadd.f32 %v2043, %v2153
        %2155 = vmatprep.mubr.bf16.mxu0 %v615
        %2156 = vmatmul.mubr.bf16.gmra.mrb[0].mxu0 %v614
        %v2157 = vpop.f32.mrb[0].mxu0
        %v2158 = vadd.f32 %v2047, %v2157
        %v2159 = vpop.f32.mrb[0].mxu0
        %v2160 = vadd.f32 %v2049, %v2159
        %v2161 = vpop.f32.mrb[0].mxu0
        %v2162 = vadd.f32 %v2051, %v2161
        %v2163 = vpop.f32.mrb[0].mxu0
        %v2164 = vadd.f32 %v2053, %v2163
        %2165 = vmatprep.mubr.bf16.mxu0 %v619
        %2166 = vmatmul.mubr.bf16.gmra.mrb[0].mxu0 %v618
        %v2167 = vpop.f32.mrb[0].mxu0
        %v2168 = vadd.f32 %v2057, %v2167
        %v2169 = vpop.f32.mrb[0].mxu0
        %v2170 = vadd.f32 %v2059, %v2169
        %v2171 = vpop.f32.mrb[0].mxu0
        %v2172 = vadd.f32 %v2061, %v2171
        %v2173 = vpop.f32.mrb[0].mxu0
        %v2174 = vadd.f32 %v2063, %v2173
        %2175 = vmatprep.mubr.bf16.mxu0 %v623
        %2176 = vmatmul.mubr.bf16.gmra.mrb[0].mxu0 %v622
        %v2177 = vpop.f32.mrb[0].mxu0
        %v2178 = vadd.f32 %v2067, %v2177
        %v2179 = vpop.f32.mrb[0].mxu0
        %v2180 = vadd.f32 %v2069, %v2179
        %v2181 = vpop.f32.mrb[0].mxu0
        %v2182 = vadd.f32 %v2071, %v2181
        %v2183 = vpop.f32.mrb[0].mxu0
        %v2184 = vadd.f32 %v2073, %v2183
        %2185 = vmatprep.mubr.bf16.mxu0 %v627
        %2186 = vmatmul.mubr.bf16.gmra.mrb[0].mxu0 %v626
        %v2187 = vpop.f32.mrb[0].mxu0
        %v2188 = vadd.f32 %v2077, %v2187
        %v2189 = vpop.f32.mrb[0].mxu0
        %v2190 = vadd.f32 %v2079, %v2189
        %v2191 = vpop.f32.mrb[0].mxu0
        %v2192 = vpop.f32.mrb[0].mxu0
        %2193 = vdwg.mxu0
        %2194 = vmatprep.subr.bf16.mxu0 %v1591
        %2195 = vmatpush1.bf16.msra.mxu0 %v1590
        %2196 = vmatprep.subr.bf16.mxu0 %v1597
        %2197 = vmatpush1.bf16.msra.mxu0 %v1596
        %2198 = vmatprep.subr.bf16.mxu0 %v1603
        %2199 = vmatpush1.bf16.msra.mxu0 %v1602
        %2200 = vmatprep.subr.bf16.mxu0 %v1609
        %2201 = vmatpush1.bf16.msra.mxu0 %v1608
        %2202 = vmatprep.subr.bf16.mxu0 %v1615
        %2203 = vmatpush1.bf16.msra.mxu0 %v1614
        %2204 = vmatprep.subr.bf16.mxu0 %v1621
        %2205 = vmatpush1.bf16.msra.mxu0 %v1620
        %2206 = vmatprep.subr.bf16.mxu0 %v1627
        %2207 = vmatpush1.bf16.msra.mxu0 %v1626
        %2208 = vmatprep.subr.bf16.mxu0 %v1633
        %2209 = vmatpush1.bf16.msra.mxu0 %v1632
        %2210 = vmatprep.subr.bf16.mxu0 %v1639
        %2211 = vmatpush1.bf16.msra.mxu0 %v1638
        %2212 = vmatprep.subr.bf16.mxu0 %v1645
        %2213 = vmatpush1.bf16.msra.mxu0 %v1644
        %2214 = vmatprep.subr.bf16.mxu0 %v1651
        %2215 = vmatpush1.bf16.msra.mxu0 %v1650
        %2216 = vmatprep.subr.bf16.mxu0 %v1657
        %2217 = vmatpush1.bf16.msra.mxu0 %v1656
        %2218 = vmatprep.subr.bf16.mxu0 %v1663
        %2219 = vmatpush1.bf16.msra.mxu0 %v1662
        %2220 = vmatprep.subr.bf16.mxu0 %v1669
        %2221 = vmatpush1.bf16.msra.mxu0 %v1668
        %2222 = vmatprep.subr.bf16.mxu0 %v1675
        %2223 = vmatpush1.bf16.msra.mxu0 %v1674
        %2224 = vmatprep.subr.bf16.mxu0 %v1681
        %2225 = vmatpush1.bf16.msra.mxu0 %v1680
        %2226 = vmatprep.mubr.bf16.mxu0 %v597
        %2227 = vmatmul.mubr.bf16.gmra.mrb[0].mxu0 %v596
        %v2228 = vpop.f32.mrb[0].mxu0
        %v2229 = vadd.f32 0.0, %v2228
        %v2230 = vpop.f32.mrb[0].mxu0
        %v2231 = vadd.f32 0.0, %v2230
        %v2232 = vpop.f32.mrb[0].mxu0
        %v2233 = vadd.f32 0.0, %v2232
        %v2234 = vpop.f32.mrb[0].mxu0
        %v2235 = vadd.f32 0.0, %v2234
        %2236 = vmatprep.mubr.bf16.mxu0 %v601
        %2237 = vmatmul.mubr.bf16.gmra.mrb[0].mxu0 %v600
        %v2238 = vpop.f32.mrb[0].mxu0
        %v2239 = vadd.f32 0.0, %v2238
        %v2240 = vpop.f32.mrb[0].mxu0
        %v2241 = vadd.f32 0.0, %v2240
        %v2242 = vpop.f32.mrb[0].mxu0
        %v2243 = vadd.f32 0.0, %v2242
        %v2244 = vpop.f32.mrb[0].mxu0
        %v2245 = vadd.f32 0.0, %v2244
        %2246 = vmatprep.mubr.bf16.mxu0 %v605
        %2247 = vmatmul.mubr.bf16.gmra.mrb[0].mxu0 %v604
        %v2248 = vpop.f32.mrb[0].mxu0
        %v2249 = vadd.f32 0.0, %v2248
        %v2250 = vpop.f32.mrb[0].mxu0
        %v2251 = vadd.f32 0.0, %v2250
        %v2252 = vpop.f32.mrb[0].mxu0
        %v2253 = vadd.f32 0.0, %v2252
        %v2254 = vpop.f32.mrb[0].mxu0
        %v2255 = vadd.f32 0.0, %v2254
        %2256 = vmatprep.mubr.bf16.mxu0 %v609
        %2257 = vmatmul.mubr.bf16.gmra.mrb[0].mxu0 %v608
        %v2258 = vpop.f32.mrb[0].mxu0
        %v2259 = vadd.f32 0.0, %v2258
        %v2260 = vpop.f32.mrb[0].mxu0
        %v2261 = vadd.f32 0.0, %v2260
        %v2262 = vpop.f32.mrb[0].mxu0
        %v2263 = vadd.f32 0.0, %v2262
        %v2264 = vpop.f32.mrb[0].mxu0
        %v2265 = vadd.f32 0.0, %v2264
        %2266 = vmatprep.mubr.bf16.mxu0 %v613
        %2267 = vmatmul.mubr.bf16.gmra.mrb[0].mxu0 %v612
        %v2268 = vpop.f32.mrb[0].mxu0
        %v2269 = vadd.f32 0.0, %v2268
        %v2270 = vpop.f32.mrb[0].mxu0
        %v2271 = vadd.f32 0.0, %v2270
        %v2272 = vpop.f32.mrb[0].mxu0
        %v2273 = vadd.f32 0.0, %v2272
        %v2274 = vpop.f32.mrb[0].mxu0
        %v2275 = vadd.f32 0.0, %v2274
        %2276 = vmatprep.mubr.bf16.mxu0 %v617
        %2277 = vmatmul.mubr.bf16.gmra.mrb[0].mxu0 %v616
        %v2278 = vpop.f32.mrb[0].mxu0
        %v2279 = vadd.f32 0.0, %v2278
        %v2280 = vpop.f32.mrb[0].mxu0
        %v2281 = vadd.f32 0.0, %v2280
        %v2282 = vpop.f32.mrb[0].mxu0
        %v2283 = vadd.f32 0.0, %v2282
        %v2284 = vpop.f32.mrb[0].mxu0
        %v2285 = vadd.f32 0.0, %v2284
        %2286 = vmatprep.mubr.bf16.mxu0 %v621
        %2287 = vmatmul.mubr.bf16.gmra.mrb[0].mxu0 %v620
        %v2288 = vpop.f32.mrb[0].mxu0
        %v2289 = vadd.f32 0.0, %v2288
        %v2290 = vpop.f32.mrb[0].mxu0
        %v2291 = vadd.f32 0.0, %v2290
        %v2292 = vpop.f32.mrb[0].mxu0
        %v2293 = vadd.f32 0.0, %v2292
        %v2294 = vpop.f32.mrb[0].mxu0
        %v2295 = vadd.f32 0.0, %v2294
        %2296 = vmatprep.mubr.bf16.mxu0 %v625
        %2297 = vmatmul.mubr.bf16.gmra.mrb[0].mxu0 %v624
        %v2298 = vpop.f32.mrb[0].mxu0
        %v2299 = vadd.f32 0.0, %v2298
        %v2300 = vpop.f32.mrb[0].mxu0
        %v2301 = vadd.f32 0.0, %v2300
        %v2302 = vpop.f32.mrb[0].mxu0
        %v2303 = vpop.f32.mrb[0].mxu0
        %2304 = vdwg.mxu0
        %2305 = vmatprep.subr.bf16.mxu0 %v1687
        %2306 = vmatpush1.bf16.msra.mxu0 %v1686
        %2307 = vmatprep.subr.bf16.mxu0 %v1693
        %2308 = vmatpush1.bf16.msra.mxu0 %v1692
        %2309 = vmatprep.subr.bf16.mxu0 %v1699
        %2310 = vmatpush1.bf16.msra.mxu0 %v1698
        %2311 = vmatprep.subr.bf16.mxu0 %v1705
        %2312 = vmatpush1.bf16.msra.mxu0 %v1704
        %2313 = vmatprep.subr.bf16.mxu0 %v1711
        %2314 = vmatpush1.bf16.msra.mxu0 %v1710
        %2315 = vmatprep.subr.bf16.mxu0 %v1717
        %2316 = vmatpush1.bf16.msra.mxu0 %v1716
        %2317 = vmatprep.subr.bf16.mxu0 %v1723
        %2318 = vmatpush1.bf16.msra.mxu0 %v1722
        %2319 = vmatprep.subr.bf16.mxu0 %v1729
        %2320 = vmatpush1.bf16.msra.mxu0 %v1728
        %2321 = vmatprep.subr.bf16.mxu0 %v1735
        %2322 = vmatpush1.bf16.msra.mxu0 %v1734
        %2323 = vmatprep.subr.bf16.mxu0 %v1741
        %2324 = vmatpush1.bf16.msra.mxu0 %v1740
        %2325 = vmatprep.subr.bf16.mxu0 %v1747
        %2326 = vmatpush1.bf16.msra.mxu0 %v1746
        %2327 = vmatprep.subr.bf16.mxu0 %v1753
        %2328 = vmatpush1.bf16.msra.mxu0 %v1752
        %2329 = vmatprep.subr.bf16.mxu0 %v1759
        %2330 = vmatpush1.bf16.msra.mxu0 %v1758
        %2331 = vmatprep.subr.bf16.mxu0 %v1765
        %2332 = vmatpush1.bf16.msra.mxu0 %v1764
        %2333 = vmatprep.subr.bf16.mxu0 %v1771
        %2334 = vmatpush1.bf16.msra.mxu0 %v1770
        %2335 = vmatprep.subr.bf16.mxu0 %v1777
        %2336 = vmatpush1.bf16.msra.mxu0 %v1776
        %2337 = vmatprep.mubr.bf16.mxu0 %v599
        %2338 = vmatmul.mubr.bf16.gmra.mrb[0].mxu0 %v598
        %v2339 = vpop.f32.mrb[0].mxu0
        %v2340 = vadd.f32 %v2229, %v2339
        %v2341 = vpop.f32.mrb[0].mxu0
        %v2342 = vadd.f32 %v2231, %v2341
        %v2343 = vpop.f32.mrb[0].mxu0
        %v2344 = vadd.f32 %v2233, %v2343
        %v2345 = vpop.f32.mrb[0].mxu0
        %v2346 = vadd.f32 %v2235, %v2345
        %2347 = vmatprep.mubr.bf16.mxu0 %v603
        %2348 = vmatmul.mubr.bf16.gmra.mrb[0].mxu0 %v602
        %v2349 = vpop.f32.mrb[0].mxu0
        %v2350 = vadd.f32 %v2239, %v2349
        %v2351 = vpop.f32.mrb[0].mxu0
        %v2352 = vadd.f32 %v2241, %v2351
        %v2353 = vpop.f32.mrb[0].mxu0
        %v2354 = vadd.f32 %v2243, %v2353
        %v2355 = vpop.f32.mrb[0].mxu0
        %v2356 = vadd.f32 %v2245, %v2355
        %2357 = vmatprep.mubr.bf16.mxu0 %v607
        %2358 = vmatmul.mubr.bf16.gmra.mrb[0].mxu0 %v606
        %v2359 = vpop.f32.mrb[0].mxu0
        %v2360 = vadd.f32 %v2249, %v2359
        %v2361 = vpop.f32.mrb[0].mxu0
        %v2362 = vadd.f32 %v2251, %v2361
        %v2363 = vpop.f32.mrb[0].mxu0
        %v2364 = vadd.f32 %v2253, %v2363
        %v2365 = vpop.f32.mrb[0].mxu0
        %v2366 = vadd.f32 %v2255, %v2365
        %2367 = vmatprep.mubr.bf16.mxu0 %v611
        %2368 = vmatmul.mubr.bf16.gmra.mrb[0].mxu0 %v610
        %v2369 = vpop.f32.mrb[0].mxu0
        %v2370 = vadd.f32 %v2259, %v2369
        %v2371 = vpop.f32.mrb[0].mxu0
        %v2372 = vadd.f32 %v2261, %v2371
        %v2373 = vpop.f32.mrb[0].mxu0
        %v2374 = vadd.f32 %v2263, %v2373
        %v2375 = vpop.f32.mrb[0].mxu0
        %v2376 = vadd.f32 %v2265, %v2375
        %2377 = vmatprep.mubr.bf16.mxu0 %v615
        %2378 = vmatmul.mubr.bf16.gmra.mrb[0].mxu0 %v614
        %v2379 = vpop.f32.mrb[0].mxu0
        %v2380 = vadd.f32 %v2269, %v2379
        %v2381 = vpop.f32.mrb[0].mxu0
        %v2382 = vadd.f32 %v2271, %v2381
        %v2383 = vpop.f32.mrb[0].mxu0
        %v2384 = vadd.f32 %v2273, %v2383
        %v2385 = vpop.f32.mrb[0].mxu0
        %v2386 = vadd.f32 %v2275, %v2385
        %2387 = vmatprep.mubr.bf16.mxu0 %v619
        %2388 = vmatmul.mubr.bf16.gmra.mrb[0].mxu0 %v618
        %v2389 = vpop.f32.mrb[0].mxu0
        %v2390 = vadd.f32 %v2279, %v2389
        %v2391 = vpop.f32.mrb[0].mxu0
        %v2392 = vadd.f32 %v2281, %v2391
        %v2393 = vpop.f32.mrb[0].mxu0
        %v2394 = vadd.f32 %v2283, %v2393
        %v2395 = vpop.f32.mrb[0].mxu0
        %v2396 = vadd.f32 %v2285, %v2395
        %2397 = vmatprep.mubr.bf16.mxu0 %v623
        %2398 = vmatmul.mubr.bf16.gmra.mrb[0].mxu0 %v622
        %v2399 = vpop.f32.mrb[0].mxu0
        %v2400 = vadd.f32 %v2289, %v2399
        %v2401 = vpop.f32.mrb[0].mxu0
        %v2402 = vadd.f32 %v2291, %v2401
        %v2403 = vpop.f32.mrb[0].mxu0
        %v2404 = vadd.f32 %v2293, %v2403
        %v2405 = vpop.f32.mrb[0].mxu0
        %v2406 = vadd.f32 %v2295, %v2405
        %2407 = vmatprep.mubr.bf16.mxu0 %v627
        %2408 = vmatmul.mubr.bf16.gmra.mrb[0].mxu0 %v626
        %v2409 = vpop.f32.mrb[0].mxu0
        %v2410 = vadd.f32 %v2299, %v2409
        %v2411 = vpop.f32.mrb[0].mxu0
        %v2412 = vadd.f32 %v2301, %v2411
        %v2413 = vpop.f32.mrb[0].mxu0
        %v2414 = vpop.f32.mrb[0].mxu0
        %2415 = vdwg.mxu0
        %2416 = vmatprep.subr.bf16.mxu0 %v1593
        %2417 = vmatpush1.bf16.msra.mxu0 %v1592
        %2418 = vmatprep.subr.bf16.mxu0 %v1599
        %2419 = vmatpush1.bf16.msra.mxu0 %v1598
        %2420 = vmatprep.subr.bf16.mxu0 %v1605
        %2421 = vmatpush1.bf16.msra.mxu0 %v1604
        %2422 = vmatprep.subr.bf16.mxu0 %v1611
        %2423 = vmatpush1.bf16.msra.mxu0 %v1610
        %2424 = vmatprep.subr.bf16.mxu0 %v1617
        %2425 = vmatpush1.bf16.msra.mxu0 %v1616
        %2426 = vmatprep.subr.bf16.mxu0 %v1623
        %2427 = vmatpush1.bf16.msra.mxu0 %v1622
        %2428 = vmatprep.subr.bf16.mxu0 %v1629
        %2429 = vmatpush1.bf16.msra.mxu0 %v1628
        %2430 = vmatprep.subr.bf16.mxu0 %v1635
        %2431 = vmatpush1.bf16.msra.mxu0 %v1634
        %2432 = vmatprep.subr.bf16.mxu0 %v1641
        %2433 = vmatpush1.bf16.msra.mxu0 %v1640
        %2434 = vmatprep.subr.bf16.mxu0 %v1647
        %2435 = vmatpush1.bf16.msra.mxu0 %v1646
        %2436 = vmatprep.subr.bf16.mxu0 %v1653
        %2437 = vmatpush1.bf16.msra.mxu0 %v1652
        %2438 = vmatprep.subr.bf16.mxu0 %v1659
        %2439 = vmatpush1.bf16.msra.mxu0 %v1658
        %2440 = vmatprep.subr.bf16.mxu0 %v1665
        %2441 = vmatpush1.bf16.msra.mxu0 %v1664
        %2442 = vmatprep.subr.bf16.mxu0 %v1671
        %2443 = vmatpush1.bf16.msra.mxu0 %v1670
        %2444 = vmatprep.subr.bf16.mxu0 %v1677
        %2445 = vmatpush1.bf16.msra.mxu0 %v1676
        %2446 = vmatprep.subr.bf16.mxu0 %v1683
        %2447 = vmatpush1.bf16.msra.mxu0 %v1682
        %2448 = vmatprep.mubr.bf16.mxu0 %v597
        %2449 = vmatmul.mubr.bf16.gmra.mrb[0].mxu0 %v596
        %v2450 = vpop.f32.mrb[0].mxu0
        %v2451 = vadd.f32 0.0, %v2450
        %v2452 = vpop.f32.mrb[0].mxu0
        %v2453 = vadd.f32 0.0, %v2452
        %v2454 = vpop.f32.mrb[0].mxu0
        %v2455 = vadd.f32 0.0, %v2454
        %v2456 = vpop.f32.mrb[0].mxu0
        %v2457 = vadd.f32 0.0, %v2456
        %2458 = vmatprep.mubr.bf16.mxu0 %v601
        %2459 = vmatmul.mubr.bf16.gmra.mrb[0].mxu0 %v600
        %v2460 = vpop.f32.mrb[0].mxu0
        %v2461 = vadd.f32 0.0, %v2460
        %v2462 = vpop.f32.mrb[0].mxu0
        %v2463 = vadd.f32 0.0, %v2462
        %v2464 = vpop.f32.mrb[0].mxu0
        %v2465 = vadd.f32 0.0, %v2464
        %v2466 = vpop.f32.mrb[0].mxu0
        %v2467 = vadd.f32 0.0, %v2466
        %2468 = vmatprep.mubr.bf16.mxu0 %v605
        %2469 = vmatmul.mubr.bf16.gmra.mrb[0].mxu0 %v604
        %v2470 = vpop.f32.mrb[0].mxu0
        %v2471 = vadd.f32 0.0, %v2470
        %v2472 = vpop.f32.mrb[0].mxu0
        %v2473 = vadd.f32 0.0, %v2472
        %v2474 = vpop.f32.mrb[0].mxu0
        %v2475 = vadd.f32 0.0, %v2474
        %v2476 = vpop.f32.mrb[0].mxu0
        %v2477 = vadd.f32 0.0, %v2476
        %2478 = vmatprep.mubr.bf16.mxu0 %v609
        %2479 = vmatmul.mubr.bf16.gmra.mrb[0].mxu0 %v608
        %v2480 = vpop.f32.mrb[0].mxu0
        %v2481 = vadd.f32 0.0, %v2480
        %v2482 = vpop.f32.mrb[0].mxu0
        %v2483 = vadd.f32 0.0, %v2482
        %v2484 = vpop.f32.mrb[0].mxu0
        %v2485 = vadd.f32 0.0, %v2484
        %v2486 = vpop.f32.mrb[0].mxu0
        %v2487 = vadd.f32 0.0, %v2486
        %2488 = vmatprep.mubr.bf16.mxu0 %v613
        %2489 = vmatmul.mubr.bf16.gmra.mrb[0].mxu0 %v612
        %v2490 = vpop.f32.mrb[0].mxu0
        %v2491 = vadd.f32 0.0, %v2490
        %v2492 = vpop.f32.mrb[0].mxu0
        %v2493 = vadd.f32 0.0, %v2492
        %v2494 = vpop.f32.mrb[0].mxu0
        %v2495 = vadd.f32 0.0, %v2494
        %v2496 = vpop.f32.mrb[0].mxu0
        %v2497 = vadd.f32 0.0, %v2496
        %2498 = vmatprep.mubr.bf16.mxu0 %v617
        %2499 = vmatmul.mubr.bf16.gmra.mrb[0].mxu0 %v616
        %v2500 = vpop.f32.mrb[0].mxu0
        %v2501 = vadd.f32 0.0, %v2500
        %v2502 = vpop.f32.mrb[0].mxu0
        %v2503 = vadd.f32 0.0, %v2502
        %v2504 = vpop.f32.mrb[0].mxu0
        %v2505 = vadd.f32 0.0, %v2504
        %v2506 = vpop.f32.mrb[0].mxu0
        %v2507 = vadd.f32 0.0, %v2506
        %2508 = vmatprep.mubr.bf16.mxu0 %v621
        %2509 = vmatmul.mubr.bf16.gmra.mrb[0].mxu0 %v620
        %v2510 = vpop.f32.mrb[0].mxu0
        %v2511 = vadd.f32 0.0, %v2510
        %v2512 = vpop.f32.mrb[0].mxu0
        %v2513 = vadd.f32 0.0, %v2512
        %v2514 = vpop.f32.mrb[0].mxu0
        %v2515 = vadd.f32 0.0, %v2514
        %v2516 = vpop.f32.mrb[0].mxu0
        %v2517 = vadd.f32 0.0, %v2516
        %2518 = vmatprep.mubr.bf16.mxu0 %v625
        %2519 = vmatmul.mubr.bf16.gmra.mrb[0].mxu0 %v624
        %v2520 = vpop.f32.mrb[0].mxu0
        %v2521 = vadd.f32 0.0, %v2520
        %v2522 = vpop.f32.mrb[0].mxu0
        %v2523 = vadd.f32 0.0, %v2522
        %v2524 = vpop.f32.mrb[0].mxu0
        %v2525 = vpop.f32.mrb[0].mxu0
        %2526 = vdwg.mxu0
        %2527 = vmatprep.subr.bf16.mxu0 %v1689
        %2528 = vmatpush1.bf16.msra.mxu0 %v1688
        %2529 = vmatprep.subr.bf16.mxu0 %v1695
        %2530 = vmatpush1.bf16.msra.mxu0 %v1694
        %2531 = vmatprep.subr.bf16.mxu0 %v1701
        %2532 = vmatpush1.bf16.msra.mxu0 %v1700
        %2533 = vmatprep.subr.bf16.mxu0 %v1707
        %2534 = vmatpush1.bf16.msra.mxu0 %v1706
        %2535 = vmatprep.subr.bf16.mxu0 %v1713
        %2536 = vmatpush1.bf16.msra.mxu0 %v1712
        %2537 = vmatprep.subr.bf16.mxu0 %v1719
        %2538 = vmatpush1.bf16.msra.mxu0 %v1718
        %2539 = vmatprep.subr.bf16.mxu0 %v1725
        %2540 = vmatpush1.bf16.msra.mxu0 %v1724
        %2541 = vmatprep.subr.bf16.mxu0 %v1731
        %2542 = vmatpush1.bf16.msra.mxu0 %v1730
        %2543 = vmatprep.subr.bf16.mxu0 %v1737
        %2544 = vmatpush1.bf16.msra.mxu0 %v1736
        %2545 = vmatprep.subr.bf16.mxu0 %v1743
        %2546 = vmatpush1.bf16.msra.mxu0 %v1742
        %2547 = vmatprep.subr.bf16.mxu0 %v1749
        %2548 = vmatpush1.bf16.msra.mxu0 %v1748
        %2549 = vmatprep.subr.bf16.mxu0 %v1755
        %2550 = vmatpush1.bf16.msra.mxu0 %v1754
        %2551 = vmatprep.subr.bf16.mxu0 %v1761
        %2552 = vmatpush1.bf16.msra.mxu0 %v1760
        %2553 = vmatprep.subr.bf16.mxu0 %v1767
        %2554 = vmatpush1.bf16.msra.mxu0 %v1766
        %2555 = vmatprep.subr.bf16.mxu0 %v1773
        %2556 = vmatpush1.bf16.msra.mxu0 %v1772
        %2557 = vmatprep.subr.bf16.mxu0 %v1779
        %2558 = vmatpush1.bf16.msra.mxu0 %v1778
        %2559 = vmatprep.mubr.bf16.mxu0 %v599
        %2560 = vmatmul.mubr.bf16.gmra.mrb[0].mxu0 %v598
        %v2561 = vpop.f32.mrb[0].mxu0
        %v2562 = vadd.f32 %v2451, %v2561
        %v2563 = vpop.f32.mrb[0].mxu0
        %v2564 = vadd.f32 %v2453, %v2563
        %v2565 = vpop.f32.mrb[0].mxu0
        %v2566 = vadd.f32 %v2455, %v2565
        %v2567 = vpop.f32.mrb[0].mxu0
        %v2568 = vadd.f32 %v2457, %v2567
        %2569 = vmatprep.mubr.bf16.mxu0 %v603
        %2570 = vmatmul.mubr.bf16.gmra.mrb[0].mxu0 %v602
        %v2571 = vpop.f32.mrb[0].mxu0
        %v2572 = vadd.f32 %v2461, %v2571
        %v2573 = vpop.f32.mrb[0].mxu0
        %v2574 = vadd.f32 %v2463, %v2573
        %v2575 = vpop.f32.mrb[0].mxu0
        %v2576 = vadd.f32 %v2465, %v2575
        %v2577 = vpop.f32.mrb[0].mxu0
        %v2578 = vadd.f32 %v2467, %v2577
        %2579 = vmatprep.mubr.bf16.mxu0 %v607
        %2580 = vmatmul.mubr.bf16.gmra.mrb[0].mxu0 %v606
        %v2581 = vpop.f32.mrb[0].mxu0
        %v2582 = vadd.f32 %v2471, %v2581
        %v2583 = vpop.f32.mrb[0].mxu0
        %v2584 = vadd.f32 %v2473, %v2583
        %v2585 = vpop.f32.mrb[0].mxu0
        %v2586 = vadd.f32 %v2475, %v2585
        %v2587 = vpop.f32.mrb[0].mxu0
        %v2588 = vadd.f32 %v2477, %v2587
        %2589 = vmatprep.mubr.bf16.mxu0 %v611
        %2590 = vmatmul.mubr.bf16.gmra.mrb[0].mxu0 %v610
        %v2591 = vpop.f32.mrb[0].mxu0
        %v2592 = vadd.f32 %v2481, %v2591
        %v2593 = vpop.f32.mrb[0].mxu0
        %v2594 = vadd.f32 %v2483, %v2593
        %v2595 = vpop.f32.mrb[0].mxu0
        %v2596 = vadd.f32 %v2485, %v2595
        %v2597 = vpop.f32.mrb[0].mxu0
        %v2598 = vadd.f32 %v2487, %v2597
        %2599 = vmatprep.mubr.bf16.mxu0 %v615
        %2600 = vmatmul.mubr.bf16.gmra.mrb[0].mxu0 %v614
        %v2601 = vpop.f32.mrb[0].mxu0
        %v2602 = vadd.f32 %v2491, %v2601
        %v2603 = vpop.f32.mrb[0].mxu0
        %v2604 = vadd.f32 %v2493, %v2603
        %v2605 = vpop.f32.mrb[0].mxu0
        %v2606 = vadd.f32 %v2495, %v2605
        %v2607 = vpop.f32.mrb[0].mxu0
        %v2608 = vadd.f32 %v2497, %v2607
        %2609 = vmatprep.mubr.bf16.mxu0 %v619
        %2610 = vmatmul.mubr.bf16.gmra.mrb[0].mxu0 %v618
        %v2611 = vpop.f32.mrb[0].mxu0
        %v2612 = vadd.f32 %v2501, %v2611
        %v2613 = vpop.f32.mrb[0].mxu0
        %v2614 = vadd.f32 %v2503, %v2613
        %v2615 = vpop.f32.mrb[0].mxu0
        %v2616 = vadd.f32 %v2505, %v2615
        %v2617 = vpop.f32.mrb[0].mxu0
        %v2618 = vadd.f32 %v2507, %v2617
        %2619 = vmatprep.mubr.bf16.mxu0 %v623
        %2620 = vmatmul.mubr.bf16.gmra.mrb[0].mxu0 %v622
        %v2621 = vpop.f32.mrb[0].mxu0
        %v2622 = vadd.f32 %v2511, %v2621
        %v2623 = vpop.f32.mrb[0].mxu0
        %v2624 = vadd.f32 %v2513, %v2623
        %v2625 = vpop.f32.mrb[0].mxu0
        %v2626 = vadd.f32 %v2515, %v2625
        %v2627 = vpop.f32.mrb[0].mxu0
        %v2628 = vadd.f32 %v2517, %v2627
        %2629 = vmatprep.mubr.bf16.mxu0 %v627
        %2630 = vmatmul.mubr.bf16.gmra.mrb[0].mxu0 %v626
        %v2631 = vpop.f32.mrb[0].mxu0
        %v2632 = vadd.f32 %v2521, %v2631
        %v2633 = vpop.f32.mrb[0].mxu0
        %v2634 = vadd.f32 %v2523, %v2633
        %v2635 = vpop.f32.mrb[0].mxu0
        %v2636 = vpop.f32.mrb[0].mxu0
        %2637 = vdwg.mxu0
        %2638 = vmatprep.subr.bf16.mxu0 %v1589
        %2639 = vmatpush1.bf16.msra.mxu0 %v1588
        %2640 = vmatprep.subr.bf16.mxu0 %v1595
        %2641 = vmatpush1.bf16.msra.mxu0 %v1594
        %2642 = vmatprep.subr.bf16.mxu0 %v1601
        %2643 = vmatpush1.bf16.msra.mxu0 %v1600
        %2644 = vmatprep.subr.bf16.mxu0 %v1607
        %2645 = vmatpush1.bf16.msra.mxu0 %v1606
        %2646 = vmatprep.subr.bf16.mxu0 %v1613
        %2647 = vmatpush1.bf16.msra.mxu0 %v1612
        %2648 = vmatprep.subr.bf16.mxu0 %v1619
        %2649 = vmatpush1.bf16.msra.mxu0 %v1618
        %2650 = vmatprep.subr.bf16.mxu0 %v1625
        %2651 = vmatpush1.bf16.msra.mxu0 %v1624
        %2652 = vmatprep.subr.bf16.mxu0 %v1631
        %2653 = vmatpush1.bf16.msra.mxu0 %v1630
        %2654 = vmatprep.subr.bf16.mxu0 %v1637
        %2655 = vmatpush1.bf16.msra.mxu0 %v1636
        %2656 = vmatprep.subr.bf16.mxu0 %v1643
        %2657 = vmatpush1.bf16.msra.mxu0 %v1642
        %2658 = vmatprep.subr.bf16.mxu0 %v1649
        %2659 = vmatpush1.bf16.msra.mxu0 %v1648
        %2660 = vmatprep.subr.bf16.mxu0 %v1655
        %2661 = vmatpush1.bf16.msra.mxu0 %v1654
        %2662 = vmatprep.subr.bf16.mxu0 %v1661
        %2663 = vmatpush1.bf16.msra.mxu0 %v1660
        %2664 = vmatprep.subr.bf16.mxu0 %v1667
        %2665 = vmatpush1.bf16.msra.mxu0 %v1666
        %2666 = vmatprep.subr.bf16.mxu0 %v1673
        %2667 = vmatpush1.bf16.msra.mxu0 %v1672
        %2668 = vmatprep.subr.bf16.mxu0 %v1679
        %2669 = vmatpush1.bf16.msra.mxu0 %v1678
        %2670 = vmatprep.mubr.bf16.mxu0 %v445
        %2671 = vmatmul.mubr.bf16.gmra.mrb[0].mxu0 %v444
        %v2672 = vpop.f32.mrb[0].mxu0
        %v2673 = vadd.f32 %v2118, %v2672
        %v2674 = vpop.f32.mrb[0].mxu0
        %v2675 = vadd.f32 %v2120, %v2674
        %v2676 = vpop.f32.mrb[0].mxu0
        %v2677 = vadd.f32 %v2122, %v2676
        %v2678 = vpop.f32.mrb[0].mxu0
        %v2679 = vadd.f32 %v2124, %v2678
        %2680 = vmatprep.mubr.bf16.mxu0 %v449
        %2681 = vmatmul.mubr.bf16.gmra.mrb[0].mxu0 %v448
        %v2682 = vpop.f32.mrb[0].mxu0
        %v2683 = vadd.f32 %v2128, %v2682
        %v2684 = vpop.f32.mrb[0].mxu0
        %v2685 = vadd.f32 %v2130, %v2684
        %v2686 = vpop.f32.mrb[0].mxu0
        %v2687 = vadd.f32 %v2132, %v2686
        %v2688 = vpop.f32.mrb[0].mxu0
        %v2689 = vadd.f32 %v2134, %v2688
        %2690 = vmatprep.mubr.bf16.mxu0 %v453
        %2691 = vmatmul.mubr.bf16.gmra.mrb[0].mxu0 %v452
        %v2692 = vpop.f32.mrb[0].mxu0
        %v2693 = vadd.f32 %v2138, %v2692
        %v2694 = vpop.f32.mrb[0].mxu0
        %v2695 = vadd.f32 %v2140, %v2694
        %v2696 = vpop.f32.mrb[0].mxu0
        %v2697 = vadd.f32 %v2142, %v2696
        %v2698 = vpop.f32.mrb[0].mxu0
        %v2699 = vadd.f32 %v2144, %v2698
        %2700 = vmatprep.mubr.bf16.mxu0 %v457
        %2701 = vmatmul.mubr.bf16.gmra.mrb[0].mxu0 %v456
        %v2702 = vpop.f32.mrb[0].mxu0
        %v2703 = vadd.f32 %v2148, %v2702
        %v2704 = vpop.f32.mrb[0].mxu0
        %v2705 = vadd.f32 %v2150, %v2704
        %v2706 = vpop.f32.mrb[0].mxu0
        %v2707 = vadd.f32 %v2152, %v2706
        %v2708 = vpop.f32.mrb[0].mxu0
        %v2709 = vadd.f32 %v2154, %v2708
        %2710 = vmatprep.mubr.bf16.mxu0 %v461
        %2711 = vmatmul.mubr.bf16.gmra.mrb[0].mxu0 %v460
        %v2712 = vpop.f32.mrb[0].mxu0
        %v2713 = vadd.f32 %v2158, %v2712
        %v2714 = vpop.f32.mrb[0].mxu0
        %v2715 = vadd.f32 %v2160, %v2714
        %v2716 = vpop.f32.mrb[0].mxu0
        %v2717 = vadd.f32 %v2162, %v2716
        %v2718 = vpop.f32.mrb[0].mxu0
        %v2719 = vadd.f32 %v2164, %v2718
        %2720 = vmatprep.mubr.bf16.mxu0 %v465
        %2721 = vmatmul.mubr.bf16.gmra.mrb[0].mxu0 %v464
        %v2722 = vpop.f32.mrb[0].mxu0
        %v2723 = vadd.f32 %v2168, %v2722
        %v2724 = vpop.f32.mrb[0].mxu0
        %v2725 = vadd.f32 %v2170, %v2724
        %v2726 = vpop.f32.mrb[0].mxu0
        %v2727 = vadd.f32 %v2172, %v2726
        %v2728 = vpop.f32.mrb[0].mxu0
        %v2729 = vadd.f32 %v2174, %v2728
        %2730 = vmatprep.mubr.bf16.mxu0 %v469
        %2731 = vmatmul.mubr.bf16.gmra.mrb[0].mxu0 %v468
        %v2732 = vpop.f32.mrb[0].mxu0
        %v2733 = vadd.f32 %v2178, %v2732
        %v2734 = vpop.f32.mrb[0].mxu0
        %v2735 = vadd.f32 %v2180, %v2734
        %v2736 = vpop.f32.mrb[0].mxu0
        %v2737 = vadd.f32 %v2182, %v2736
        %v2738 = vpop.f32.mrb[0].mxu0
        %v2739 = vadd.f32 %v2184, %v2738
        %2740 = vmatprep.mubr.bf16.mxu0 %v473
        %2741 = vmatmul.mubr.bf16.gmra.mrb[0].mxu0 %v472
        %v2742 = vpop.f32.mrb[0].mxu0
        %v2743 = vadd.f32 %v2188, %v2742
        %v2744 = vpop.f32.mrb[0].mxu0
        %v2745 = vadd.f32 %v2190, %v2744
        %v2746 = vpop.f32.mrb[0].mxu0
        %v2747 = vpop.f32.mrb[0].mxu0
        %2748 = vdwg.mxu0
        %2749 = vmatprep.subr.bf16.mxu0 %v1685
        %2750 = vmatpush1.bf16.msra.mxu0 %v1684
        %2751 = vmatprep.subr.bf16.mxu0 %v1691
        %2752 = vmatpush1.bf16.msra.mxu0 %v1690
        %2753 = vmatprep.subr.bf16.mxu0 %v1697
        %2754 = vmatpush1.bf16.msra.mxu0 %v1696
        %2755 = vmatprep.subr.bf16.mxu0 %v1703
        %2756 = vmatpush1.bf16.msra.mxu0 %v1702
        %2757 = vmatprep.subr.bf16.mxu0 %v1709
        %2758 = vmatpush1.bf16.msra.mxu0 %v1708
        %2759 = vmatprep.subr.bf16.mxu0 %v1715
        %2760 = vmatpush1.bf16.msra.mxu0 %v1714
        %2761 = vmatprep.subr.bf16.mxu0 %v1721
        %2762 = vmatpush1.bf16.msra.mxu0 %v1720
        %2763 = vmatprep.subr.bf16.mxu0 %v1727
        %2764 = vmatpush1.bf16.msra.mxu0 %v1726
        %2765 = vmatprep.subr.bf16.mxu0 %v1733
        %2766 = vmatpush1.bf16.msra.mxu0 %v1732
        %2767 = vmatprep.subr.bf16.mxu0 %v1739
        %2768 = vmatpush1.bf16.msra.mxu0 %v1738
        %2769 = vmatprep.subr.bf16.mxu0 %v1745
        %2770 = vmatpush1.bf16.msra.mxu0 %v1744
        %2771 = vmatprep.subr.bf16.mxu0 %v1751
        %2772 = vmatpush1.bf16.msra.mxu0 %v1750
        %2773 = vmatprep.subr.bf16.mxu0 %v1757
        %2774 = vmatpush1.bf16.msra.mxu0 %v1756
        %2775 = vmatprep.subr.bf16.mxu0 %v1763
        %2776 = vmatpush1.bf16.msra.mxu0 %v1762
        %2777 = vmatprep.subr.bf16.mxu0 %v1769
        %2778 = vmatpush1.bf16.msra.mxu0 %v1768
        %2779 = vmatprep.subr.bf16.mxu0 %v1775
        %2780 = vmatpush1.bf16.msra.mxu0 %v1774
        %2781 = vmatprep.mubr.bf16.mxu0 %v447
        %2782 = vmatmul.mubr.bf16.gmra.mrb[0].mxu0 %v446
        %v2783 = vpop.f32.mrb[0].mxu0
        %v2784 = vadd.f32 %v2673, %v2783
        %v2785 = vpop.f32.mrb[0].mxu0
        %v2786 = vadd.f32 %v2675, %v2785
        %v2787 = vpop.f32.mrb[0].mxu0
        %v2788 = vadd.f32 %v2677, %v2787
        %v2789 = vpop.f32.mrb[0].mxu0
        %v2790 = vadd.f32 %v2679, %v2789
        %2791 = vmatprep.mubr.bf16.mxu0 %v451
        %2792 = vmatmul.mubr.bf16.gmra.mrb[0].mxu0 %v450
        %v2793 = vpop.f32.mrb[0].mxu0
        %v2794 = vadd.f32 %v2683, %v2793
        %v2795 = vpop.f32.mrb[0].mxu0
        %v2796 = vadd.f32 %v2685, %v2795
        %v2797 = vpop.f32.mrb[0].mxu0
        %v2798 = vadd.f32 %v2687, %v2797
        %v2799 = vpop.f32.mrb[0].mxu0
        %v2800 = vadd.f32 %v2689, %v2799
        %2801 = vmatprep.mubr.bf16.mxu0 %v455
        %2802 = vmatmul.mubr.bf16.gmra.mrb[0].mxu0 %v454
        %v2803 = vpop.f32.mrb[0].mxu0
        %v2804 = vadd.f32 %v2693, %v2803
        %v2805 = vpop.f32.mrb[0].mxu0
        %v2806 = vadd.f32 %v2695, %v2805
        %v2807 = vpop.f32.mrb[0].mxu0
        %v2808 = vadd.f32 %v2697, %v2807
        %v2809 = vpop.f32.mrb[0].mxu0
        %v2810 = vadd.f32 %v2699, %v2809
        %2811 = vmatprep.mubr.bf16.mxu0 %v459
        %2812 = vmatmul.mubr.bf16.gmra.mrb[0].mxu0 %v458
        %v2813 = vpop.f32.mrb[0].mxu0
        %v2814 = vadd.f32 %v2703, %v2813
        %v2815 = vpop.f32.mrb[0].mxu0
        %v2816 = vadd.f32 %v2705, %v2815
        %v2817 = vpop.f32.mrb[0].mxu0
        %v2818 = vadd.f32 %v2707, %v2817
        %v2819 = vpop.f32.mrb[0].mxu0
        %v2820 = vadd.f32 %v2709, %v2819
        %2821 = vmatprep.mubr.bf16.mxu0 %v463
        %2822 = vmatmul.mubr.bf16.gmra.mrb[0].mxu0 %v462
        %v2823 = vpop.f32.mrb[0].mxu0
        %v2824 = vadd.f32 %v2713, %v2823
        %v2825 = vpop.f32.mrb[0].mxu0
        %v2826 = vadd.f32 %v2715, %v2825
        %v2827 = vpop.f32.mrb[0].mxu0
        %v2828 = vadd.f32 %v2717, %v2827
        %v2829 = vpop.f32.mrb[0].mxu0
        %v2830 = vadd.f32 %v2719, %v2829
        %2831 = vmatprep.mubr.bf16.mxu0 %v467
        %2832 = vmatmul.mubr.bf16.gmra.mrb[0].mxu0 %v466
        %v2833 = vpop.f32.mrb[0].mxu0
        %v2834 = vadd.f32 %v2723, %v2833
        %v2835 = vpop.f32.mrb[0].mxu0
        %v2836 = vadd.f32 %v2725, %v2835
        %v2837 = vpop.f32.mrb[0].mxu0
        %v2838 = vadd.f32 %v2727, %v2837
        %v2839 = vpop.f32.mrb[0].mxu0
        %v2840 = vadd.f32 %v2729, %v2839
        %2841 = vmatprep.mubr.bf16.mxu0 %v471
        %2842 = vmatmul.mubr.bf16.gmra.mrb[0].mxu0 %v470
        %v2843 = vpop.f32.mrb[0].mxu0
        %v2844 = vadd.f32 %v2733, %v2843
        %v2845 = vpop.f32.mrb[0].mxu0
        %v2846 = vadd.f32 %v2735, %v2845
        %v2847 = vpop.f32.mrb[0].mxu0
        %v2848 = vadd.f32 %v2737, %v2847
        %v2849 = vpop.f32.mrb[0].mxu0
        %v2850 = vadd.f32 %v2739, %v2849
        %2851 = vmatprep.mubr.bf16.mxu0 %v475
        %2852 = vmatmul.mubr.bf16.gmra.mrb[0].mxu0 %v474
        %v2853 = vpop.f32.mrb[0].mxu0
        %v2854 = vadd.f32 %v2743, %v2853
        %v2855 = vpop.f32.mrb[0].mxu0
        %v2856 = vadd.f32 %v2745, %v2855
        %v2857 = vpop.f32.mrb[0].mxu0
        %v2858 = vpop.f32.mrb[0].mxu0
        %2859 = vdwg.mxu0
        %2860 = vmatprep.subr.bf16.mxu0 %v1591
        %2861 = vmatpush1.bf16.msra.mxu0 %v1590
        %2862 = vmatprep.subr.bf16.mxu0 %v1597
        %2863 = vmatpush1.bf16.msra.mxu0 %v1596
        %2864 = vmatprep.subr.bf16.mxu0 %v1603
        %2865 = vmatpush1.bf16.msra.mxu0 %v1602
        %2866 = vmatprep.subr.bf16.mxu0 %v1609
        %2867 = vmatpush1.bf16.msra.mxu0 %v1608
        %2868 = vmatprep.subr.bf16.mxu0 %v1615
        %2869 = vmatpush1.bf16.msra.mxu0 %v1614
        %2870 = vmatprep.subr.bf16.mxu0 %v1621
        %2871 = vmatpush1.bf16.msra.mxu0 %v1620
        %2872 = vmatprep.subr.bf16.mxu0 %v1627
        %2873 = vmatpush1.bf16.msra.mxu0 %v1626
        %2874 = vmatprep.subr.bf16.mxu0 %v1633
        %2875 = vmatpush1.bf16.msra.mxu0 %v1632
        %2876 = vmatprep.subr.bf16.mxu0 %v1639
        %2877 = vmatpush1.bf16.msra.mxu0 %v1638
        %2878 = vmatprep.subr.bf16.mxu0 %v1645
        %2879 = vmatpush1.bf16.msra.mxu0 %v1644
        %2880 = vmatprep.subr.bf16.mxu0 %v1651
        %2881 = vmatpush1.bf16.msra.mxu0 %v1650
        %2882 = vmatprep.subr.bf16.mxu0 %v1657
        %2883 = vmatpush1.bf16.msra.mxu0 %v1656
        %2884 = vmatprep.subr.bf16.mxu0 %v1663
        %2885 = vmatpush1.bf16.msra.mxu0 %v1662
        %2886 = vmatprep.subr.bf16.mxu0 %v1669
        %2887 = vmatpush1.bf16.msra.mxu0 %v1668
        %2888 = vmatprep.subr.bf16.mxu0 %v1675
        %2889 = vmatpush1.bf16.msra.mxu0 %v1674
        %2890 = vmatprep.subr.bf16.mxu0 %v1681
        %2891 = vmatpush1.bf16.msra.mxu0 %v1680
        %2892 = vmatprep.mubr.bf16.mxu0 %v445
        %2893 = vmatmul.mubr.bf16.gmra.mrb[0].mxu0 %v444
        %v2894 = vpop.f32.mrb[0].mxu0
        %v2895 = vadd.f32 %v2340, %v2894
        %v2896 = vpop.f32.mrb[0].mxu0
        %v2897 = vadd.f32 %v2342, %v2896
        %v2898 = vpop.f32.mrb[0].mxu0
        %v2899 = vadd.f32 %v2344, %v2898
        %v2900 = vpop.f32.mrb[0].mxu0
        %v2901 = vadd.f32 %v2346, %v2900
        %2902 = vmatprep.mubr.bf16.mxu0 %v449
        %2903 = vmatmul.mubr.bf16.gmra.mrb[0].mxu0 %v448
        %v2904 = vpop.f32.mrb[0].mxu0
        %v2905 = vadd.f32 %v2350, %v2904
        %v2906 = vpop.f32.mrb[0].mxu0
        %v2907 = vadd.f32 %v2352, %v2906
        %v2908 = vpop.f32.mrb[0].mxu0
        %v2909 = vadd.f32 %v2354, %v2908
        %v2910 = vpop.f32.mrb[0].mxu0
        %v2911 = vadd.f32 %v2356, %v2910
        %2912 = vmatprep.mubr.bf16.mxu0 %v453
        %2913 = vmatmul.mubr.bf16.gmra.mrb[0].mxu0 %v452
        %v2914 = vpop.f32.mrb[0].mxu0
        %v2915 = vadd.f32 %v2360, %v2914
        %v2916 = vpop.f32.mrb[0].mxu0
        %v2917 = vadd.f32 %v2362, %v2916
        %v2918 = vpop.f32.mrb[0].mxu0
        %v2919 = vadd.f32 %v2364, %v2918
        %v2920 = vpop.f32.mrb[0].mxu0
        %v2921 = vadd.f32 %v2366, %v2920
        %2922 = vmatprep.mubr.bf16.mxu0 %v457
        %2923 = vmatmul.mubr.bf16.gmra.mrb[0].mxu0 %v456
        %v2924 = vpop.f32.mrb[0].mxu0
        %v2925 = vadd.f32 %v2370, %v2924
        %v2926 = vpop.f32.mrb[0].mxu0
        %v2927 = vadd.f32 %v2372, %v2926
        %v2928 = vpop.f32.mrb[0].mxu0
        %v2929 = vadd.f32 %v2374, %v2928
        %v2930 = vpop.f32.mrb[0].mxu0
        %v2931 = vadd.f32 %v2376, %v2930
        %2932 = vmatprep.mubr.bf16.mxu0 %v461
        %2933 = vmatmul.mubr.bf16.gmra.mrb[0].mxu0 %v460
        %v2934 = vpop.f32.mrb[0].mxu0
        %v2935 = vadd.f32 %v2380, %v2934
        %v2936 = vpop.f32.mrb[0].mxu0
        %v2937 = vadd.f32 %v2382, %v2936
        %v2938 = vpop.f32.mrb[0].mxu0
        %v2939 = vadd.f32 %v2384, %v2938
        %v2940 = vpop.f32.mrb[0].mxu0
        %v2941 = vadd.f32 %v2386, %v2940
        %2942 = vmatprep.mubr.bf16.mxu0 %v465
        %2943 = vmatmul.mubr.bf16.gmra.mrb[0].mxu0 %v464
        %v2944 = vpop.f32.mrb[0].mxu0
        %v2945 = vadd.f32 %v2390, %v2944
        %v2946 = vpop.f32.mrb[0].mxu0
        %v2947 = vadd.f32 %v2392, %v2946
        %v2948 = vpop.f32.mrb[0].mxu0
        %v2949 = vadd.f32 %v2394, %v2948
        %v2950 = vpop.f32.mrb[0].mxu0
        %v2951 = vadd.f32 %v2396, %v2950
        %2952 = vmatprep.mubr.bf16.mxu0 %v469
        %2953 = vmatmul.mubr.bf16.gmra.mrb[0].mxu0 %v468
        %v2954 = vpop.f32.mrb[0].mxu0
        %v2955 = vadd.f32 %v2400, %v2954
        %v2956 = vpop.f32.mrb[0].mxu0
        %v2957 = vadd.f32 %v2402, %v2956
        %v2958 = vpop.f32.mrb[0].mxu0
        %v2959 = vadd.f32 %v2404, %v2958
        %v2960 = vpop.f32.mrb[0].mxu0
        %v2961 = vadd.f32 %v2406, %v2960
        %2962 = vmatprep.mubr.bf16.mxu0 %v473
        %2963 = vmatmul.mubr.bf16.gmra.mrb[0].mxu0 %v472
        %v2964 = vpop.f32.mrb[0].mxu0
        %v2965 = vadd.f32 %v2410, %v2964
        %v2966 = vpop.f32.mrb[0].mxu0
        %v2967 = vadd.f32 %v2412, %v2966
        %v2968 = vpop.f32.mrb[0].mxu0
        %v2969 = vpop.f32.mrb[0].mxu0
        %2970 = vdwg.mxu0
        %2971 = vmatprep.subr.bf16.mxu0 %v1687
        %2972 = vmatpush1.bf16.msra.mxu0 %v1686
        %2973 = vmatprep.subr.bf16.mxu0 %v1693
        %2974 = vmatpush1.bf16.msra.mxu0 %v1692
        %2975 = vmatprep.subr.bf16.mxu0 %v1699
        %2976 = vmatpush1.bf16.msra.mxu0 %v1698
        %2977 = vmatprep.subr.bf16.mxu0 %v1705
        %2978 = vmatpush1.bf16.msra.mxu0 %v1704
        %2979 = vmatprep.subr.bf16.mxu0 %v1711
        %2980 = vmatpush1.bf16.msra.mxu0 %v1710
        %2981 = vmatprep.subr.bf16.mxu0 %v1717
        %2982 = vmatpush1.bf16.msra.mxu0 %v1716
        %2983 = vmatprep.subr.bf16.mxu0 %v1723
        %2984 = vmatpush1.bf16.msra.mxu0 %v1722
        %2985 = vmatprep.subr.bf16.mxu0 %v1729
        %2986 = vmatpush1.bf16.msra.mxu0 %v1728
        %2987 = vmatprep.subr.bf16.mxu0 %v1735
        %2988 = vmatpush1.bf16.msra.mxu0 %v1734
        %2989 = vmatprep.subr.bf16.mxu0 %v1741
        %2990 = vmatpush1.bf16.msra.mxu0 %v1740
        %2991 = vmatprep.subr.bf16.mxu0 %v1747
        %2992 = vmatpush1.bf16.msra.mxu0 %v1746
        %2993 = vmatprep.subr.bf16.mxu0 %v1753
        %2994 = vmatpush1.bf16.msra.mxu0 %v1752
        %2995 = vmatprep.subr.bf16.mxu0 %v1759
        %2996 = vmatpush1.bf16.msra.mxu0 %v1758
        %2997 = vmatprep.subr.bf16.mxu0 %v1765
        %2998 = vmatpush1.bf16.msra.mxu0 %v1764
        %2999 = vmatprep.subr.bf16.mxu0 %v1771
        %3000 = vmatpush1.bf16.msra.mxu0 %v1770
        %3001 = vmatprep.subr.bf16.mxu0 %v1777
        %3002 = vmatpush1.bf16.msra.mxu0 %v1776
        %3003 = vmatprep.mubr.bf16.mxu0 %v447
        %3004 = vmatmul.mubr.bf16.gmra.mrb[0].mxu0 %v446
        %v3005 = vpop.f32.mrb[0].mxu0
        %v3006 = vadd.f32 %v2895, %v3005
        %v3007 = vpop.f32.mrb[0].mxu0
        %v3008 = vadd.f32 %v2897, %v3007
        %v3009 = vpop.f32.mrb[0].mxu0
        %v3010 = vadd.f32 %v2899, %v3009
        %v3011 = vpop.f32.mrb[0].mxu0
        %v3012 = vadd.f32 %v2901, %v3011
        %3013 = vmatprep.mubr.bf16.mxu0 %v451
        %3014 = vmatmul.mubr.bf16.gmra.mrb[0].mxu0 %v450
        %v3015 = vpop.f32.mrb[0].mxu0
        %v3016 = vadd.f32 %v2905, %v3015
        %v3017 = vpop.f32.mrb[0].mxu0
        %v3018 = vadd.f32 %v2907, %v3017
        %v3019 = vpop.f32.mrb[0].mxu0
        %v3020 = vadd.f32 %v2909, %v3019
        %v3021 = vpop.f32.mrb[0].mxu0
        %v3022 = vadd.f32 %v2911, %v3021
        %3023 = vmatprep.mubr.bf16.mxu0 %v455
        %3024 = vmatmul.mubr.bf16.gmra.mrb[0].mxu0 %v454
        %v3025 = vpop.f32.mrb[0].mxu0
        %v3026 = vadd.f32 %v2915, %v3025
        %v3027 = vpop.f32.mrb[0].mxu0
        %v3028 = vadd.f32 %v2917, %v3027
        %v3029 = vpop.f32.mrb[0].mxu0
        %v3030 = vadd.f32 %v2919, %v3029
        %v3031 = vpop.f32.mrb[0].mxu0
        %v3032 = vadd.f32 %v2921, %v3031
        %3033 = vmatprep.mubr.bf16.mxu0 %v459
        %3034 = vmatmul.mubr.bf16.gmra.mrb[0].mxu0 %v458
        %v3035 = vpop.f32.mrb[0].mxu0
        %v3036 = vadd.f32 %v2925, %v3035
        %v3037 = vpop.f32.mrb[0].mxu0
        %v3038 = vadd.f32 %v2927, %v3037
        %v3039 = vpop.f32.mrb[0].mxu0
        %v3040 = vadd.f32 %v2929, %v3039
        %v3041 = vpop.f32.mrb[0].mxu0
        %v3042 = vadd.f32 %v2931, %v3041
        %3043 = vmatprep.mubr.bf16.mxu0 %v463
        %3044 = vmatmul.mubr.bf16.gmra.mrb[0].mxu0 %v462
        %v3045 = vpop.f32.mrb[0].mxu0
        %v3046 = vadd.f32 %v2935, %v3045
        %v3047 = vpop.f32.mrb[0].mxu0
        %v3048 = vadd.f32 %v2937, %v3047
        %v3049 = vpop.f32.mrb[0].mxu0
        %v3050 = vadd.f32 %v2939, %v3049
        %v3051 = vpop.f32.mrb[0].mxu0
        %v3052 = vadd.f32 %v2941, %v3051
        %3053 = vmatprep.mubr.bf16.mxu0 %v467
        %3054 = vmatmul.mubr.bf16.gmra.mrb[0].mxu0 %v466
        %v3055 = vpop.f32.mrb[0].mxu0
        %v3056 = vadd.f32 %v2945, %v3055
        %v3057 = vpop.f32.mrb[0].mxu0
        %v3058 = vadd.f32 %v2947, %v3057
        %v3059 = vpop.f32.mrb[0].mxu0
        %v3060 = vadd.f32 %v2949, %v3059
        %v3061 = vpop.f32.mrb[0].mxu0
        %v3062 = vadd.f32 %v2951, %v3061
        %3063 = vmatprep.mubr.bf16.mxu0 %v471
        %3064 = vmatmul.mubr.bf16.gmra.mrb[0].mxu0 %v470
        %v3065 = vpop.f32.mrb[0].mxu0
        %v3066 = vadd.f32 %v2955, %v3065
        %v3067 = vpop.f32.mrb[0].mxu0
        %v3068 = vadd.f32 %v2957, %v3067
        %v3069 = vpop.f32.mrb[0].mxu0
        %v3070 = vadd.f32 %v2959, %v3069
        %v3071 = vpop.f32.mrb[0].mxu0
        %v3072 = vadd.f32 %v2961, %v3071
        %3073 = vmatprep.mubr.bf16.mxu0 %v475
        %3074 = vmatmul.mubr.bf16.gmra.mrb[0].mxu0 %v474
        %v3075 = vpop.f32.mrb[0].mxu0
        %v3076 = vadd.f32 %v2965, %v3075
        %v3077 = vpop.f32.mrb[0].mxu0
        %v3078 = vadd.f32 %v2967, %v3077
        %v3079 = vpop.f32.mrb[0].mxu0
        %v3080 = vpop.f32.mrb[0].mxu0
        %3081 = vdwg.mxu0
        %3082 = vmatprep.subr.bf16.mxu0 %v1593
        %3083 = vmatpush1.bf16.msra.mxu0 %v1592
        %3084 = vmatprep.subr.bf16.mxu0 %v1599
        %3085 = vmatpush1.bf16.msra.mxu0 %v1598
        %3086 = vmatprep.subr.bf16.mxu0 %v1605
        %3087 = vmatpush1.bf16.msra.mxu0 %v1604
        %3088 = vmatprep.subr.bf16.mxu0 %v1611
        %3089 = vmatpush1.bf16.msra.mxu0 %v1610
        %3090 = vmatprep.subr.bf16.mxu0 %v1617
        %3091 = vmatpush1.bf16.msra.mxu0 %v1616
        %3092 = vmatprep.subr.bf16.mxu0 %v1623
        %3093 = vmatpush1.bf16.msra.mxu0 %v1622
        %3094 = vmatprep.subr.bf16.mxu0 %v1629
        %3095 = vmatpush1.bf16.msra.mxu0 %v1628
        %3096 = vmatprep.subr.bf16.mxu0 %v1635
        %3097 = vmatpush1.bf16.msra.mxu0 %v1634
        %3098 = vmatprep.subr.bf16.mxu0 %v1641
        %3099 = vmatpush1.bf16.msra.mxu0 %v1640
        %3100 = vmatprep.subr.bf16.mxu0 %v1647
        %3101 = vmatpush1.bf16.msra.mxu0 %v1646
        %3102 = vmatprep.subr.bf16.mxu0 %v1653
        %3103 = vmatpush1.bf16.msra.mxu0 %v1652
        %3104 = vmatprep.subr.bf16.mxu0 %v1659
        %3105 = vmatpush1.bf16.msra.mxu0 %v1658
        %3106 = vmatprep.subr.bf16.mxu0 %v1665
        %3107 = vmatpush1.bf16.msra.mxu0 %v1664
        %3108 = vmatprep.subr.bf16.mxu0 %v1671
        %3109 = vmatpush1.bf16.msra.mxu0 %v1670
        %3110 = vmatprep.subr.bf16.mxu0 %v1677
        %3111 = vmatpush1.bf16.msra.mxu0 %v1676
        %3112 = vmatprep.subr.bf16.mxu0 %v1683
        %3113 = vmatpush1.bf16.msra.mxu0 %v1682
        %3114 = vmatprep.mubr.bf16.mxu0 %v445
        %3115 = vmatmul.mubr.bf16.gmra.mrb[0].mxu0 %v444
        %v3116 = vpop.f32.mrb[0].mxu0
        %v3117 = vadd.f32 %v2562, %v3116
        %v3118 = vpop.f32.mrb[0].mxu0
        %v3119 = vadd.f32 %v2564, %v3118
        %v3120 = vpop.f32.mrb[0].mxu0
        %v3121 = vadd.f32 %v2566, %v3120
        %v3122 = vpop.f32.mrb[0].mxu0
        %v3123 = vadd.f32 %v2568, %v3122
        %3124 = vmatprep.mubr.bf16.mxu0 %v449
        %3125 = vmatmul.mubr.bf16.gmra.mrb[0].mxu0 %v448
        %v3126 = vpop.f32.mrb[0].mxu0
        %v3127 = vadd.f32 %v2572, %v3126
        %v3128 = vpop.f32.mrb[0].mxu0
        %v3129 = vadd.f32 %v2574, %v3128
        %v3130 = vpop.f32.mrb[0].mxu0
        %v3131 = vadd.f32 %v2576, %v3130
        %v3132 = vpop.f32.mrb[0].mxu0
        %v3133 = vadd.f32 %v2578, %v3132
        %3134 = vmatprep.mubr.bf16.mxu0 %v453
        %3135 = vmatmul.mubr.bf16.gmra.mrb[0].mxu0 %v452
        %v3136 = vpop.f32.mrb[0].mxu0
        %v3137 = vadd.f32 %v2582, %v3136
        %v3138 = vpop.f32.mrb[0].mxu0
        %v3139 = vadd.f32 %v2584, %v3138
        %v3140 = vpop.f32.mrb[0].mxu0
        %v3141 = vadd.f32 %v2586, %v3140
        %v3142 = vpop.f32.mrb[0].mxu0
        %v3143 = vadd.f32 %v2588, %v3142
        %3144 = vmatprep.mubr.bf16.mxu0 %v457
        %3145 = vmatmul.mubr.bf16.gmra.mrb[0].mxu0 %v456
        %v3146 = vpop.f32.mrb[0].mxu0
        %v3147 = vadd.f32 %v2592, %v3146
        %v3148 = vpop.f32.mrb[0].mxu0
        %v3149 = vadd.f32 %v2594, %v3148
        %v3150 = vpop.f32.mrb[0].mxu0
        %v3151 = vadd.f32 %v2596, %v3150
        %v3152 = vpop.f32.mrb[0].mxu0
        %v3153 = vadd.f32 %v2598, %v3152
        %3154 = vmatprep.mubr.bf16.mxu0 %v461
        %3155 = vmatmul.mubr.bf16.gmra.mrb[0].mxu0 %v460
        %v3156 = vpop.f32.mrb[0].mxu0
        %v3157 = vadd.f32 %v2602, %v3156
        %v3158 = vpop.f32.mrb[0].mxu0
        %v3159 = vadd.f32 %v2604, %v3158
        %v3160 = vpop.f32.mrb[0].mxu0
        %v3161 = vadd.f32 %v2606, %v3160
        %v3162 = vpop.f32.mrb[0].mxu0
        %v3163 = vadd.f32 %v2608, %v3162
        %3164 = vmatprep.mubr.bf16.mxu0 %v465
        %3165 = vmatmul.mubr.bf16.gmra.mrb[0].mxu0 %v464
        %v3166 = vpop.f32.mrb[0].mxu0
        %v3167 = vadd.f32 %v2612, %v3166
        %v3168 = vpop.f32.mrb[0].mxu0
        %v3169 = vadd.f32 %v2614, %v3168
        %v3170 = vpop.f32.mrb[0].mxu0
        %v3171 = vadd.f32 %v2616, %v3170
        %v3172 = vpop.f32.mrb[0].mxu0
        %v3173 = vadd.f32 %v2618, %v3172
        %3174 = vmatprep.mubr.bf16.mxu0 %v469
        %3175 = vmatmul.mubr.bf16.gmra.mrb[0].mxu0 %v468
        %v3176 = vpop.f32.mrb[0].mxu0
        %v3177 = vadd.f32 %v2622, %v3176
        %v3178 = vpop.f32.mrb[0].mxu0
        %v3179 = vadd.f32 %v2624, %v3178
        %v3180 = vpop.f32.mrb[0].mxu0
        %v3181 = vadd.f32 %v2626, %v3180
        %v3182 = vpop.f32.mrb[0].mxu0
        %v3183 = vadd.f32 %v2628, %v3182
        %3184 = vmatprep.mubr.bf16.mxu0 %v473
        %3185 = vmatmul.mubr.bf16.gmra.mrb[0].mxu0 %v472
        %v3186 = vpop.f32.mrb[0].mxu0
        %v3187 = vadd.f32 %v2632, %v3186
        %v3188 = vpop.f32.mrb[0].mxu0
        %v3189 = vadd.f32 %v2634, %v3188
        %v3190 = vpop.f32.mrb[0].mxu0
        %v3191 = vpop.f32.mrb[0].mxu0
        %3192 = vdwg.mxu0
        %3193 = vmatprep.subr.bf16.mxu0 %v1689
        %3194 = vmatpush1.bf16.msra.mxu0 %v1688
        %3195 = vmatprep.subr.bf16.mxu0 %v1695
        %3196 = vmatpush1.bf16.msra.mxu0 %v1694
        %3197 = vmatprep.subr.bf16.mxu0 %v1701
        %3198 = vmatpush1.bf16.msra.mxu0 %v1700
        %3199 = vmatprep.subr.bf16.mxu0 %v1707
        %3200 = vmatpush1.bf16.msra.mxu0 %v1706
        %3201 = vmatprep.subr.bf16.mxu0 %v1713
        %3202 = vmatpush1.bf16.msra.mxu0 %v1712
        %3203 = vmatprep.subr.bf16.mxu0 %v1719
        %3204 = vmatpush1.bf16.msra.mxu0 %v1718
        %3205 = vmatprep.subr.bf16.mxu0 %v1725
        %3206 = vmatpush1.bf16.msra.mxu0 %v1724
        %3207 = vmatprep.subr.bf16.mxu0 %v1731
        %3208 = vmatpush1.bf16.msra.mxu0 %v1730
        %3209 = vmatprep.subr.bf16.mxu0 %v1737
        %3210 = vmatpush1.bf16.msra.mxu0 %v1736
        %3211 = vmatprep.subr.bf16.mxu0 %v1743
        %3212 = vmatpush1.bf16.msra.mxu0 %v1742
        %3213 = vmatprep.subr.bf16.mxu0 %v1749
        %3214 = vmatpush1.bf16.msra.mxu0 %v1748
        %3215 = vmatprep.subr.bf16.mxu0 %v1755
        %3216 = vmatpush1.bf16.msra.mxu0 %v1754
        %3217 = vmatprep.subr.bf16.mxu0 %v1761
        %3218 = vmatpush1.bf16.msra.mxu0 %v1760
        %3219 = vmatprep.subr.bf16.mxu0 %v1767
        %3220 = vmatpush1.bf16.msra.mxu0 %v1766
        %3221 = vmatprep.subr.bf16.mxu0 %v1773
        %3222 = vmatpush1.bf16.msra.mxu0 %v1772
        %3223 = vmatprep.subr.bf16.mxu0 %v1779
        %3224 = vmatpush1.bf16.msra.mxu0 %v1778
        %3225 = vmatprep.mubr.bf16.mxu0 %v447
        %3226 = vmatmul.mubr.bf16.gmra.mrb[0].mxu0 %v446
        %v3227 = vpop.f32.mrb[0].mxu0
        %v3228 = vadd.f32 %v3117, %v3227
        %v3229 = vpop.f32.mrb[0].mxu0
        %v3230 = vadd.f32 %v3119, %v3229
        %v3231 = vpop.f32.mrb[0].mxu0
        %v3232 = vadd.f32 %v3121, %v3231
        %v3233 = vpop.f32.mrb[0].mxu0
        %v3234 = vadd.f32 %v3123, %v3233
        %3235 = vmatprep.mubr.bf16.mxu0 %v451
        %3236 = vmatmul.mubr.bf16.gmra.mrb[0].mxu0 %v450
        %v3237 = vpop.f32.mrb[0].mxu0
        %v3238 = vadd.f32 %v3127, %v3237
        %v3239 = vpop.f32.mrb[0].mxu0
        %v3240 = vadd.f32 %v3129, %v3239
        %v3241 = vpop.f32.mrb[0].mxu0
        %v3242 = vadd.f32 %v3131, %v3241
        %v3243 = vpop.f32.mrb[0].mxu0
        %v3244 = vadd.f32 %v3133, %v3243
        %3245 = vmatprep.mubr.bf16.mxu0 %v455
        %3246 = vmatmul.mubr.bf16.gmra.mrb[0].mxu0 %v454
        %v3247 = vpop.f32.mrb[0].mxu0
        %v3248 = vadd.f32 %v3137, %v3247
        %v3249 = vpop.f32.mrb[0].mxu0
        %v3250 = vadd.f32 %v3139, %v3249
        %v3251 = vpop.f32.mrb[0].mxu0
        %v3252 = vadd.f32 %v3141, %v3251
        %v3253 = vpop.f32.mrb[0].mxu0
        %v3254 = vadd.f32 %v3143, %v3253
        %3255 = vmatprep.mubr.bf16.mxu0 %v459
        %3256 = vmatmul.mubr.bf16.gmra.mrb[0].mxu0 %v458
        %v3257 = vpop.f32.mrb[0].mxu0
        %v3258 = vadd.f32 %v3147, %v3257
        %v3259 = vpop.f32.mrb[0].mxu0
        %v3260 = vadd.f32 %v3149, %v3259
        %v3261 = vpop.f32.mrb[0].mxu0
        %v3262 = vadd.f32 %v3151, %v3261
        %v3263 = vpop.f32.mrb[0].mxu0
        %v3264 = vadd.f32 %v3153, %v3263
        %3265 = vmatprep.mubr.bf16.mxu0 %v463
        %3266 = vmatmul.mubr.bf16.gmra.mrb[0].mxu0 %v462
        %v3267 = vpop.f32.mrb[0].mxu0
        %v3268 = vadd.f32 %v3157, %v3267
        %v3269 = vpop.f32.mrb[0].mxu0
        %v3270 = vadd.f32 %v3159, %v3269
        %v3271 = vpop.f32.mrb[0].mxu0
        %v3272 = vadd.f32 %v3161, %v3271
        %v3273 = vpop.f32.mrb[0].mxu0
        %v3274 = vadd.f32 %v3163, %v3273
        %3275 = vmatprep.mubr.bf16.mxu0 %v467
        %3276 = vmatmul.mubr.bf16.gmra.mrb[0].mxu0 %v466
        %v3277 = vpop.f32.mrb[0].mxu0
        %v3278 = vadd.f32 %v3167, %v3277
        %v3279 = vpop.f32.mrb[0].mxu0
        %v3280 = vadd.f32 %v3169, %v3279
        %v3281 = vpop.f32.mrb[0].mxu0
        %v3282 = vadd.f32 %v3171, %v3281
        %v3283 = vpop.f32.mrb[0].mxu0
        %v3284 = vadd.f32 %v3173, %v3283
        %3285 = vmatprep.mubr.bf16.mxu0 %v471
        %3286 = vmatmul.mubr.bf16.gmra.mrb[0].mxu0 %v470
        %v3287 = vpop.f32.mrb[0].mxu0
        %v3288 = vadd.f32 %v3177, %v3287
        %v3289 = vpop.f32.mrb[0].mxu0
        %v3290 = vadd.f32 %v3179, %v3289
        %v3291 = vpop.f32.mrb[0].mxu0
        %v3292 = vadd.f32 %v3181, %v3291
        %v3293 = vpop.f32.mrb[0].mxu0
        %v3294 = vadd.f32 %v3183, %v3293
        %3295 = vmatprep.mubr.bf16.mxu0 %v475
        %3296 = vmatmul.mubr.bf16.gmra.mrb[0].mxu0 %v474
        %v3297 = vpop.f32.mrb[0].mxu0
        %v3298 = vadd.f32 %v3187, %v3297
        %v3299 = vpop.f32.mrb[0].mxu0
        %v3300 = vadd.f32 %v3189, %v3299
        %v3301 = vpop.f32.mrb[0].mxu0
        %v3302 = vpop.f32.mrb[0].mxu0
        %3303 = vdwg.mxu0
        %v3496 = vunpack.c.l.b16 %v820
        %v3497 = vunpack.c.h.b16 %v820
        %v3498 = vunpack.c.l.b16 %v821
        %v3499 = vunpack.c.h.b16 %v821
        %v3500 = vunpack.c.l.b16 %v822
        %v3501 = vunpack.c.h.b16 %v822
        %v3502 = vunpack.c.l.b16 %v823
        %v3503 = vunpack.c.h.b16 %v823
        %v3504 = vunpack.c.l.b16 %v824
        %v3505 = vunpack.c.h.b16 %v824
        %v3506 = vunpack.c.l.b16 %v825
        %v3507 = vunpack.c.h.b16 %v825
        %v3508 = vunpack.c.l.b16 %v826
        %v3509 = vunpack.c.h.b16 %v826
        %v3510 = vunpack.c.l.b16 %v827
        %v3511 = vunpack.c.h.b16 %v827
        %v3512 = vunpack.c.l.b16 %v828
        %v3513 = vunpack.c.h.b16 %v828
        %v3514 = vunpack.c.l.b16 %v829
        %v3515 = vunpack.c.h.b16 %v829
        %v3516 = vunpack.c.l.b16 %v830
        %v3517 = vunpack.c.h.b16 %v830
        %v3518 = vunpack.c.l.b16 %v831
        %v3519 = vunpack.c.h.b16 %v831
        %v3520 = vunpack.c.l.b16 %v832
        %v3521 = vunpack.c.h.b16 %v832
        %v3522 = vunpack.c.l.b16 %v833
        %v3523 = vunpack.c.h.b16 %v833
        %v3524 = vunpack.c.l.b16 %v834
        %v3525 = vunpack.c.h.b16 %v834
        %v3526 = vunpack.c.l.b16 %v835
        %v3527 = vunpack.c.h.b16 %v835
        %v3528 = vunpack.c.l.b16 %v836
        %v3529 = vunpack.c.h.b16 %v836
        %v3530 = vunpack.c.l.b16 %v837
        %v3531 = vunpack.c.h.b16 %v837
        %v3532 = vunpack.c.l.b16 %v838
        %v3533 = vunpack.c.h.b16 %v838
        %v3534 = vunpack.c.l.b16 %v839
        %v3535 = vunpack.c.h.b16 %v839
        %v3536 = vunpack.c.l.b16 %v840
        %v3537 = vunpack.c.h.b16 %v840
        %v3538 = vunpack.c.l.b16 %v841
        %v3539 = vunpack.c.h.b16 %v841
        %v3540 = vunpack.c.l.b16 %v842
        %v3541 = vunpack.c.h.b16 %v842
        %v3542 = vunpack.c.l.b16 %v843
        %v3543 = vunpack.c.h.b16 %v843
        %v3544 = vunpack.c.l.b16 %v844
        %v3545 = vunpack.c.h.b16 %v844
        %v3546 = vunpack.c.l.b16 %v845
        %v3547 = vunpack.c.h.b16 %v845
        %v3548 = vunpack.c.l.b16 %v846
        %v3549 = vunpack.c.h.b16 %v846
        %v3550 = vunpack.c.l.b16 %v847
        %v3551 = vunpack.c.h.b16 %v847
        %v3552 = vunpack.c.l.b16 %v848
        %v3553 = vunpack.c.h.b16 %v848
        %v3554 = vunpack.c.l.b16 %v849
        %v3555 = vunpack.c.h.b16 %v849
        %v3556 = vunpack.c.l.b16 %v850
        %v3557 = vunpack.c.h.b16 %v850
        %v3558 = vunpack.c.l.b16 %v851
        %v3559 = vunpack.c.h.b16 %v851
        %v3560 = vunpack.c.l.b16 %v852
        %v3561 = vunpack.c.h.b16 %v852
        %v3562 = vunpack.c.l.b16 %v853
        %v3563 = vunpack.c.h.b16 %v853
        %v3564 = vunpack.c.l.b16 %v854
        %v3565 = vunpack.c.h.b16 %v854
        %v3566 = vunpack.c.l.b16 %v855
        %v3567 = vunpack.c.h.b16 %v855
        %v3568 = vunpack.c.l.b16 %v856
        %v3569 = vunpack.c.h.b16 %v856
        %v3570 = vunpack.c.l.b16 %v857
        %v3571 = vunpack.c.h.b16 %v857
        %v3572 = vunpack.c.l.b16 %v858
        %v3573 = vunpack.c.h.b16 %v858
        %v3574 = vunpack.c.l.b16 %v859
        %v3575 = vunpack.c.h.b16 %v859
        %v3576 = vunpack.c.l.b16 %v860
        %v3577 = vunpack.c.h.b16 %v860
        %v3578 = vunpack.c.l.b16 %v861
        %v3579 = vunpack.c.h.b16 %v861
        %v3580 = vunpack.c.l.b16 %v862
        %v3581 = vunpack.c.h.b16 %v862
        %v3582 = vunpack.c.l.b16 %v863
        %v3583 = vunpack.c.h.b16 %v863
        %v3584 = vunpack.c.l.b16 %v864
        %v3585 = vunpack.c.h.b16 %v864
        %v3586 = vunpack.c.l.b16 %v865
        %v3587 = vunpack.c.h.b16 %v865
        %v3588 = vunpack.c.l.b16 %v866
        %v3589 = vunpack.c.h.b16 %v866
        %v3590 = vunpack.c.l.b16 %v867
        %v3591 = vunpack.c.h.b16 %v867
        %v3592 = vunpack.c.l.b16 %v868
        %v3593 = vunpack.c.h.b16 %v868
        %v3594 = vunpack.c.l.b16 %v869
        %v3595 = vunpack.c.h.b16 %v869
        %v3596 = vunpack.c.l.b16 %v870
        %v3597 = vunpack.c.h.b16 %v870
        %v3598 = vunpack.c.l.b16 %v871
        %v3599 = vunpack.c.h.b16 %v871
        %v3600 = vunpack.c.l.b16 %v872
        %v3601 = vunpack.c.h.b16 %v872
        %v3602 = vunpack.c.l.b16 %v873
        %v3603 = vunpack.c.h.b16 %v873
        %v3604 = vunpack.c.l.b16 %v874
        %v3605 = vunpack.c.h.b16 %v874
        %v3606 = vunpack.c.l.b16 %v875
        %v3607 = vunpack.c.h.b16 %v875
        %v3608 = vunpack.c.l.b16 %v876
        %v3609 = vunpack.c.h.b16 %v876
        %v3610 = vunpack.c.l.b16 %v877
        %v3611 = vunpack.c.h.b16 %v877
        %v3612 = vunpack.c.l.b16 %v878
        %v3613 = vunpack.c.h.b16 %v878
        %v3614 = vunpack.c.l.b16 %v879
        %v3615 = vunpack.c.h.b16 %v879
        %v3616 = vunpack.c.l.b16 %v880
        %v3617 = vunpack.c.h.b16 %v880
        %v3618 = vunpack.c.l.b16 %v881
        %v3619 = vunpack.c.h.b16 %v881
        %v3620 = vunpack.c.l.b16 %v882
        %v3621 = vunpack.c.h.b16 %v882
        %v3622 = vunpack.c.l.b16 %v883
        %v3623 = vunpack.c.h.b16 %v883
        %v3624 = vunpack.c.l.b16 %v884
        %v3625 = vunpack.c.h.b16 %v884
        %v3626 = vunpack.c.l.b16 %v885
        %v3627 = vunpack.c.h.b16 %v885
        %v3628 = vunpack.c.l.b16 %v886
        %v3629 = vunpack.c.h.b16 %v886
        %v3630 = vunpack.c.l.b16 %v887
        %v3631 = vunpack.c.h.b16 %v887
        %v3632 = vunpack.c.l.b16 %v888
        %v3633 = vunpack.c.h.b16 %v888
        %v3634 = vunpack.c.l.b16 %v889
        %v3635 = vunpack.c.h.b16 %v889
        %v3636 = vunpack.c.l.b16 %v890
        %v3637 = vunpack.c.h.b16 %v890
        %v3638 = vunpack.c.l.b16 %v891
        %v3639 = vunpack.c.h.b16 %v891
        %v3640 = vunpack.c.l.b16 %v892
        %v3641 = vunpack.c.h.b16 %v892
        %v3642 = vunpack.c.l.b16 %v893
        %v3643 = vunpack.c.h.b16 %v893
        %v3644 = vunpack.c.l.b16 %v894
        %v3645 = vunpack.c.h.b16 %v894
        %v3646 = vunpack.c.l.b16 %v895
        %v3647 = vunpack.c.h.b16 %v895
        %v3648 = vunpack.c.l.b16 %v896
        %v3649 = vunpack.c.h.b16 %v896
        %v3650 = vunpack.c.l.b16 %v897
        %v3651 = vunpack.c.h.b16 %v897
        %v3652 = vunpack.c.l.b16 %v898
        %v3653 = vunpack.c.h.b16 %v898
        %v3654 = vunpack.c.l.b16 %v899
        %v3655 = vunpack.c.h.b16 %v899
        %v3656 = vunpack.c.l.b16 %v900
        %v3657 = vunpack.c.h.b16 %v900
        %v3658 = vunpack.c.l.b16 %v901
        %v3659 = vunpack.c.h.b16 %v901
        %v3660 = vunpack.c.l.b16 %v902
        %v3661 = vunpack.c.h.b16 %v902
        %v3662 = vunpack.c.l.b16 %v903
        %v3663 = vunpack.c.h.b16 %v903
        %v3664 = vunpack.c.l.b16 %v904
        %v3665 = vunpack.c.h.b16 %v904
        %v3666 = vunpack.c.l.b16 %v905
        %v3667 = vunpack.c.h.b16 %v905
        %v3668 = vunpack.c.l.b16 %v906
        %v3669 = vunpack.c.h.b16 %v906
        %v3670 = vunpack.c.l.b16 %v907
        %v3671 = vunpack.c.h.b16 %v907
        %v3672 = vunpack.c.l.b16 %v908
        %v3673 = vunpack.c.h.b16 %v908
        %v3674 = vunpack.c.l.b16 %v909
        %v3675 = vunpack.c.h.b16 %v909
        %v3676 = vunpack.c.l.b16 %v910
        %v3677 = vunpack.c.h.b16 %v910
        %v3678 = vunpack.c.l.b16 %v911
        %v3679 = vunpack.c.h.b16 %v911
        %v3680 = vunpack.c.l.b16 %v912
        %v3681 = vunpack.c.h.b16 %v912
        %v3682 = vunpack.c.l.b16 %v913
        %v3683 = vunpack.c.h.b16 %v913
        %v3684 = vunpack.c.l.b16 %v914
        %v3685 = vunpack.c.h.b16 %v914
        %v3686 = vunpack.c.l.b16 %v915
        %v3687 = vunpack.c.h.b16 %v915
        %v3688 = vunpack.c.l.b16 %v916
        %v3689 = vunpack.c.h.b16 %v916
        %v3690 = vunpack.c.l.b16 %v917
        %v3691 = vunpack.c.h.b16 %v917
        %v3692 = vunpack.c.l.b16 %v918
        %v3693 = vunpack.c.h.b16 %v918
        %v3694 = vunpack.c.l.b16 %v919
        %v3695 = vunpack.c.h.b16 %v919
        %v3696 = vunpack.c.l.b16 %v920
        %v3697 = vunpack.c.h.b16 %v920
        %v3698 = vunpack.c.l.b16 %v921
        %v3699 = vunpack.c.h.b16 %v921
        %v3700 = vunpack.c.l.b16 %v922
        %v3701 = vunpack.c.h.b16 %v922
        %v3702 = vunpack.c.l.b16 %v923
        %v3703 = vunpack.c.h.b16 %v923
        %v3704 = vunpack.c.l.b16 %v924
        %v3705 = vunpack.c.h.b16 %v924
        %v3706 = vunpack.c.l.b16 %v925
        %v3707 = vunpack.c.h.b16 %v925
        %v3708 = vunpack.c.l.b16 %v926
        %v3709 = vunpack.c.h.b16 %v926
        %v3710 = vunpack.c.l.b16 %v927
        %v3711 = vunpack.c.h.b16 %v927
        %v3712 = vunpack.c.l.b16 %v928
        %v3713 = vunpack.c.h.b16 %v928
        %v3714 = vunpack.c.l.b16 %v929
        %v3715 = vunpack.c.h.b16 %v929
        %v3716 = vunpack.c.l.b16 %v930
        %v3717 = vunpack.c.h.b16 %v930
        %v3718 = vunpack.c.l.b16 %v931
        %v3719 = vunpack.c.h.b16 %v931
        %v3720 = vunpack.c.l.b16 %v932
        %v3721 = vunpack.c.h.b16 %v932
        %v3722 = vunpack.c.l.b16 %v933
        %v3723 = vunpack.c.h.b16 %v933
        %v3724 = vunpack.c.l.b16 %v934
        %v3725 = vunpack.c.h.b16 %v934
        %v3726 = vunpack.c.l.b16 %v935
        %v3727 = vunpack.c.h.b16 %v935
        %v3728 = vunpack.c.l.b16 %v936
        %v3729 = vunpack.c.h.b16 %v936
        %v3730 = vunpack.c.l.b16 %v937
        %v3731 = vunpack.c.h.b16 %v937
        %v3732 = vunpack.c.l.b16 %v938
        %v3733 = vunpack.c.h.b16 %v938
        %v3734 = vunpack.c.l.b16 %v939
        %v3735 = vunpack.c.h.b16 %v939
        %v3736 = vunpack.c.l.b16 %v940
        %v3737 = vunpack.c.h.b16 %v940
        %v3738 = vunpack.c.l.b16 %v941
        %v3739 = vunpack.c.h.b16 %v941
        %v3740 = vunpack.c.l.b16 %v942
        %v3741 = vunpack.c.h.b16 %v942
        %v3742 = vunpack.c.l.b16 %v943
        %v3743 = vunpack.c.h.b16 %v943
        %v3744 = vunpack.c.l.b16 %v944
        %v3745 = vunpack.c.h.b16 %v944
        %v3746 = vunpack.c.l.b16 %v945
        %v3747 = vunpack.c.h.b16 %v945
        %v3748 = vunpack.c.l.b16 %v946
        %v3749 = vunpack.c.h.b16 %v946
        %v3750 = vunpack.c.l.b16 %v947
        %v3751 = vunpack.c.h.b16 %v947
        %v3752 = vunpack.c.l.b16 %v948
        %v3753 = vunpack.c.h.b16 %v948
        %v3754 = vunpack.c.l.b16 %v949
        %v3755 = vunpack.c.h.b16 %v949
        %v3756 = vunpack.c.l.b16 %v950
        %v3757 = vunpack.c.h.b16 %v950
        %v3758 = vunpack.c.l.b16 %v951
        %v3759 = vunpack.c.h.b16 %v951
        %v3760 = vunpack.c.l.b16 %v952
        %v3761 = vunpack.c.h.b16 %v952
        %v3762 = vunpack.c.l.b16 %v953
        %v3763 = vunpack.c.h.b16 %v953
        %v3764 = vunpack.c.l.b16 %v954
        %v3765 = vunpack.c.h.b16 %v954
        %v3766 = vunpack.c.l.b16 %v955
        %v3767 = vunpack.c.h.b16 %v955
        %v3768 = vunpack.c.l.b16 %v956
        %v3769 = vunpack.c.h.b16 %v956
        %v3770 = vunpack.c.l.b16 %v957
        %v3771 = vunpack.c.h.b16 %v957
        %v3772 = vunpack.c.l.b16 %v958
        %v3773 = vunpack.c.h.b16 %v958
        %v3774 = vunpack.c.l.b16 %v959
        %v3775 = vunpack.c.h.b16 %v959
        %v3776 = vunpack.c.l.b16 %v960
        %v3777 = vunpack.c.h.b16 %v960
        %v3778 = vunpack.c.l.b16 %v961
        %v3779 = vunpack.c.h.b16 %v961
        %v3780 = vunpack.c.l.b16 %v962
        %v3781 = vunpack.c.h.b16 %v962
        %v3782 = vunpack.c.l.b16 %v963
        %v3783 = vunpack.c.h.b16 %v963
        %v3784 = vunpack.c.l.b16 %v964
        %v3785 = vunpack.c.h.b16 %v964
        %v3786 = vunpack.c.l.b16 %v965
        %v3787 = vunpack.c.h.b16 %v965
        %v3788 = vunpack.c.l.b16 %v966
        %v3789 = vunpack.c.h.b16 %v966
        %v3790 = vunpack.c.l.b16 %v967
        %v3791 = vunpack.c.h.b16 %v967
        %v3792 = vunpack.c.l.b16 %v968
        %v3793 = vunpack.c.h.b16 %v968
        %v3794 = vunpack.c.l.b16 %v969
        %v3795 = vunpack.c.h.b16 %v969
        %v3796 = vunpack.c.l.b16 %v970
        %v3797 = vunpack.c.h.b16 %v970
        %v3798 = vunpack.c.l.b16 %v971
        %v3799 = vunpack.c.h.b16 %v971
        %v3800 = vunpack.c.l.b16 %v972
        %v3801 = vunpack.c.h.b16 %v972
        %v3802 = vunpack.c.l.b16 %v973
        %v3803 = vunpack.c.h.b16 %v973
        %v3804 = vunpack.c.l.b16 %v974
        %v3805 = vunpack.c.h.b16 %v974
        %v3806 = vunpack.c.l.b16 %v975
        %v3807 = vunpack.c.h.b16 %v975
        %v3808 = vunpack.c.l.b16 %v976
        %v3809 = vunpack.c.h.b16 %v976
        %v3810 = vunpack.c.l.b16 %v977
        %v3811 = vunpack.c.h.b16 %v977
        %v3812 = vunpack.c.l.b16 %v978
        %v3813 = vunpack.c.h.b16 %v978
        %v3814 = vunpack.c.l.b16 %v979
        %v3815 = vunpack.c.h.b16 %v979
        %v3816 = vunpack.c.l.b16 %v980
        %v3817 = vunpack.c.h.b16 %v980
        %v3818 = vunpack.c.l.b16 %v981
        %v3819 = vunpack.c.h.b16 %v981
        %v3820 = vunpack.c.l.b16 %v982
        %v3821 = vunpack.c.h.b16 %v982
        %v3822 = vunpack.c.l.b16 %v983
        %v3823 = vunpack.c.h.b16 %v983
        %v3824 = vunpack.c.l.b16 %v984
        %v3825 = vunpack.c.h.b16 %v984
        %v3826 = vunpack.c.l.b16 %v985
        %v3827 = vunpack.c.h.b16 %v985
        %v3828 = vunpack.c.l.b16 %v986
        %v3829 = vunpack.c.h.b16 %v986
        %v3830 = vunpack.c.l.b16 %v987
        %v3831 = vunpack.c.h.b16 %v987
        %v3832 = vunpack.c.l.b16 %v988
        %v3833 = vunpack.c.h.b16 %v988
        %v3834 = vunpack.c.l.b16 %v989
        %v3835 = vunpack.c.h.b16 %v989
        %v3836 = vunpack.c.l.b16 %v990
        %v3837 = vunpack.c.h.b16 %v990
        %v3838 = vunpack.c.l.b16 %v991
        %v3839 = vunpack.c.h.b16 %v991
        %v3840 = vunpack.c.l.b16 %v992
        %v3841 = vunpack.c.h.b16 %v992
        %v3842 = vunpack.c.l.b16 %v993
        %v3843 = vunpack.c.h.b16 %v993
        %v3844 = vunpack.c.l.b16 %v994
        %v3845 = vunpack.c.h.b16 %v994
        %v3846 = vunpack.c.l.b16 %v995
        %v3847 = vunpack.c.h.b16 %v995
        %v3848 = vunpack.c.l.b16 %v996
        %v3849 = vunpack.c.h.b16 %v996
        %v3850 = vunpack.c.l.b16 %v997
        %v3851 = vunpack.c.h.b16 %v997
        %v3852 = vunpack.c.l.b16 %v998
        %v3853 = vunpack.c.h.b16 %v998
        %v3854 = vunpack.c.l.b16 %v999
        %v3855 = vunpack.c.h.b16 %v999
        %v3856 = vunpack.c.l.b16 %v1000
        %v3857 = vunpack.c.h.b16 %v1000
        %v3858 = vunpack.c.l.b16 %v1001
        %v3859 = vunpack.c.h.b16 %v1001
        %v3860 = vunpack.c.l.b16 %v1002
        %v3861 = vunpack.c.h.b16 %v1002
        %v3862 = vunpack.c.l.b16 %v1003
        %v3863 = vunpack.c.h.b16 %v1003
        %v3864 = vunpack.c.l.b16 %v1004
        %v3865 = vunpack.c.h.b16 %v1004
        %v3866 = vunpack.c.l.b16 %v1005
        %v3867 = vunpack.c.h.b16 %v1005
        %v3868 = vunpack.c.l.b16 %v1006
        %v3869 = vunpack.c.h.b16 %v1006
        %v3870 = vunpack.c.l.b16 %v1007
        %v3871 = vunpack.c.h.b16 %v1007
        %v3872 = vunpack.c.l.b16 %v1008
        %v3873 = vunpack.c.h.b16 %v1008
        %v3874 = vunpack.c.l.b16 %v1009
        %v3875 = vunpack.c.h.b16 %v1009
        %v3876 = vunpack.c.l.b16 %v1010
        %v3877 = vunpack.c.h.b16 %v1010
        %v3878 = vunpack.c.l.b16 %v1011
        %v3879 = vunpack.c.h.b16 %v1011
        %v3880 = vpack.c.b16 %v3502, %v3496
        %v3881 = vpack.c.b16 %v3503, %v3497
        %v3882 = vpack.c.b16 %v3504, %v3498
        %v3883 = vpack.c.b16 %v3505, %v3499
        %v3884 = vpack.c.b16 %v3506, %v3500
        %v3885 = vpack.c.b16 %v3507, %v3501
        %v3886 = vpack.c.b16 %v3514, %v3508
        %v3887 = vpack.c.b16 %v3515, %v3509
        %v3888 = vpack.c.b16 %v3516, %v3510
        %v3889 = vpack.c.b16 %v3517, %v3511
        %v3890 = vpack.c.b16 %v3518, %v3512
        %v3891 = vpack.c.b16 %v3519, %v3513
        %v3892 = vpack.c.b16 %v3526, %v3520
        %v3893 = vpack.c.b16 %v3527, %v3521
        %v3894 = vpack.c.b16 %v3528, %v3522
        %v3895 = vpack.c.b16 %v3529, %v3523
        %v3896 = vpack.c.b16 %v3530, %v3524
        %v3897 = vpack.c.b16 %v3531, %v3525
        %v3898 = vpack.c.b16 %v3538, %v3532
        %v3899 = vpack.c.b16 %v3539, %v3533
        %v3900 = vpack.c.b16 %v3540, %v3534
        %v3901 = vpack.c.b16 %v3541, %v3535
        %v3902 = vpack.c.b16 %v3542, %v3536
        %v3903 = vpack.c.b16 %v3543, %v3537
        %v3904 = vpack.c.b16 %v3550, %v3544
        %v3905 = vpack.c.b16 %v3551, %v3545
        %v3906 = vpack.c.b16 %v3552, %v3546
        %v3907 = vpack.c.b16 %v3553, %v3547
        %v3908 = vpack.c.b16 %v3554, %v3548
        %v3909 = vpack.c.b16 %v3555, %v3549
        %v3910 = vpack.c.b16 %v3562, %v3556
        %v3911 = vpack.c.b16 %v3563, %v3557
        %v3912 = vpack.c.b16 %v3564, %v3558
        %v3913 = vpack.c.b16 %v3565, %v3559
        %v3914 = vpack.c.b16 %v3566, %v3560
        %v3915 = vpack.c.b16 %v3567, %v3561
        %v3916 = vpack.c.b16 %v3574, %v3568
        %v3917 = vpack.c.b16 %v3575, %v3569
        %v3918 = vpack.c.b16 %v3576, %v3570
        %v3919 = vpack.c.b16 %v3577, %v3571
        %v3920 = vpack.c.b16 %v3578, %v3572
        %v3921 = vpack.c.b16 %v3579, %v3573
        %v3922 = vpack.c.b16 %v3586, %v3580
        %v3923 = vpack.c.b16 %v3587, %v3581
        %v3924 = vpack.c.b16 %v3588, %v3582
        %v3925 = vpack.c.b16 %v3589, %v3583
        %v3926 = vpack.c.b16 %v3590, %v3584
        %v3927 = vpack.c.b16 %v3591, %v3585
        %v3928 = vpack.c.b16 %v3598, %v3592
        %v3929 = vpack.c.b16 %v3599, %v3593
        %v3930 = vpack.c.b16 %v3600, %v3594
        %v3931 = vpack.c.b16 %v3601, %v3595
        %v3932 = vpack.c.b16 %v3602, %v3596
        %v3933 = vpack.c.b16 %v3603, %v3597
        %v3934 = vpack.c.b16 %v3610, %v3604
        %v3935 = vpack.c.b16 %v3611, %v3605
        %v3936 = vpack.c.b16 %v3612, %v3606
        %v3937 = vpack.c.b16 %v3613, %v3607
        %v3938 = vpack.c.b16 %v3614, %v3608
        %v3939 = vpack.c.b16 %v3615, %v3609
        %v3940 = vpack.c.b16 %v3622, %v3616
        %v3941 = vpack.c.b16 %v3623, %v3617
        %v3942 = vpack.c.b16 %v3624, %v3618
        %v3943 = vpack.c.b16 %v3625, %v3619
        %v3944 = vpack.c.b16 %v3626, %v3620
        %v3945 = vpack.c.b16 %v3627, %v3621
        %v3946 = vpack.c.b16 %v3634, %v3628
        %v3947 = vpack.c.b16 %v3635, %v3629
        %v3948 = vpack.c.b16 %v3636, %v3630
        %v3949 = vpack.c.b16 %v3637, %v3631
        %v3950 = vpack.c.b16 %v3638, %v3632
        %v3951 = vpack.c.b16 %v3639, %v3633
        %v3952 = vpack.c.b16 %v3646, %v3640
        %v3953 = vpack.c.b16 %v3647, %v3641
        %v3954 = vpack.c.b16 %v3648, %v3642
        %v3955 = vpack.c.b16 %v3649, %v3643
        %v3956 = vpack.c.b16 %v3650, %v3644
        %v3957 = vpack.c.b16 %v3651, %v3645
        %v3958 = vpack.c.b16 %v3658, %v3652
        %v3959 = vpack.c.b16 %v3659, %v3653
        %v3960 = vpack.c.b16 %v3660, %v3654
        %v3961 = vpack.c.b16 %v3661, %v3655
        %v3962 = vpack.c.b16 %v3662, %v3656
        %v3963 = vpack.c.b16 %v3663, %v3657
        %v3964 = vpack.c.b16 %v3670, %v3664
        %v3965 = vpack.c.b16 %v3671, %v3665
        %v3966 = vpack.c.b16 %v3672, %v3666
        %v3967 = vpack.c.b16 %v3673, %v3667
        %v3968 = vpack.c.b16 %v3674, %v3668
        %v3969 = vpack.c.b16 %v3675, %v3669
        %v3970 = vpack.c.b16 %v3682, %v3676
        %v3971 = vpack.c.b16 %v3683, %v3677
        %v3972 = vpack.c.b16 %v3684, %v3678
        %v3973 = vpack.c.b16 %v3685, %v3679
        %v3974 = vpack.c.b16 %v3686, %v3680
        %v3975 = vpack.c.b16 %v3687, %v3681
        %v3976 = vpack.c.b16 %v3694, %v3688
        %v3977 = vpack.c.b16 %v3695, %v3689
        %v3978 = vpack.c.b16 %v3696, %v3690
        %v3979 = vpack.c.b16 %v3697, %v3691
        %v3980 = vpack.c.b16 %v3698, %v3692
        %v3981 = vpack.c.b16 %v3699, %v3693
        %v3982 = vpack.c.b16 %v3706, %v3700
        %v3983 = vpack.c.b16 %v3707, %v3701
        %v3984 = vpack.c.b16 %v3708, %v3702
        %v3985 = vpack.c.b16 %v3709, %v3703
        %v3986 = vpack.c.b16 %v3710, %v3704
        %v3987 = vpack.c.b16 %v3711, %v3705
        %v3988 = vpack.c.b16 %v3718, %v3712
        %v3989 = vpack.c.b16 %v3719, %v3713
        %v3990 = vpack.c.b16 %v3720, %v3714
        %v3991 = vpack.c.b16 %v3721, %v3715
        %v3992 = vpack.c.b16 %v3722, %v3716
        %v3993 = vpack.c.b16 %v3723, %v3717
        %v3994 = vpack.c.b16 %v3730, %v3724
        %v3995 = vpack.c.b16 %v3731, %v3725
        %v3996 = vpack.c.b16 %v3732, %v3726
        %v3997 = vpack.c.b16 %v3733, %v3727
        %v3998 = vpack.c.b16 %v3734, %v3728
        %v3999 = vpack.c.b16 %v3735, %v3729
        %v4000 = vpack.c.b16 %v3742, %v3736
        %v4001 = vpack.c.b16 %v3743, %v3737
        %v4002 = vpack.c.b16 %v3744, %v3738
        %v4003 = vpack.c.b16 %v3745, %v3739
        %v4004 = vpack.c.b16 %v3746, %v3740
        %v4005 = vpack.c.b16 %v3747, %v3741
        %v4006 = vpack.c.b16 %v3754, %v3748
        %v4007 = vpack.c.b16 %v3755, %v3749
        %v4008 = vpack.c.b16 %v3756, %v3750
        %v4009 = vpack.c.b16 %v3757, %v3751
        %v4010 = vpack.c.b16 %v3758, %v3752
        %v4011 = vpack.c.b16 %v3759, %v3753
        %v4012 = vpack.c.b16 %v3766, %v3760
        %v4013 = vpack.c.b16 %v3767, %v3761
        %v4014 = vpack.c.b16 %v3768, %v3762
        %v4015 = vpack.c.b16 %v3769, %v3763
        %v4016 = vpack.c.b16 %v3770, %v3764
        %v4017 = vpack.c.b16 %v3771, %v3765
        %v4018 = vpack.c.b16 %v3778, %v3772
        %v4019 = vpack.c.b16 %v3779, %v3773
        %v4020 = vpack.c.b16 %v3780, %v3774
        %v4021 = vpack.c.b16 %v3781, %v3775
        %v4022 = vpack.c.b16 %v3782, %v3776
        %v4023 = vpack.c.b16 %v3783, %v3777
        %v4024 = vpack.c.b16 %v3790, %v3784
        %v4025 = vpack.c.b16 %v3791, %v3785
        %v4026 = vpack.c.b16 %v3792, %v3786
        %v4027 = vpack.c.b16 %v3793, %v3787
        %v4028 = vpack.c.b16 %v3794, %v3788
        %v4029 = vpack.c.b16 %v3795, %v3789
        %v4030 = vpack.c.b16 %v3802, %v3796
        %v4031 = vpack.c.b16 %v3803, %v3797
        %v4032 = vpack.c.b16 %v3804, %v3798
        %v4033 = vpack.c.b16 %v3805, %v3799
        %v4034 = vpack.c.b16 %v3806, %v3800
        %v4035 = vpack.c.b16 %v3807, %v3801
        %v4036 = vpack.c.b16 %v3814, %v3808
        %v4037 = vpack.c.b16 %v3815, %v3809
        %v4038 = vpack.c.b16 %v3816, %v3810
        %v4039 = vpack.c.b16 %v3817, %v3811
        %v4040 = vpack.c.b16 %v3818, %v3812
        %v4041 = vpack.c.b16 %v3819, %v3813
        %v4042 = vpack.c.b16 %v3826, %v3820
        %v4043 = vpack.c.b16 %v3827, %v3821
        %v4044 = vpack.c.b16 %v3828, %v3822
        %v4045 = vpack.c.b16 %v3829, %v3823
        %v4046 = vpack.c.b16 %v3830, %v3824
        %v4047 = vpack.c.b16 %v3831, %v3825
        %v4048 = vpack.c.b16 %v3838, %v3832
        %v4049 = vpack.c.b16 %v3839, %v3833
        %v4050 = vpack.c.b16 %v3840, %v3834
        %v4051 = vpack.c.b16 %v3841, %v3835
        %v4052 = vpack.c.b16 %v3842, %v3836
        %v4053 = vpack.c.b16 %v3843, %v3837
        %v4054 = vpack.c.b16 %v3850, %v3844
        %v4055 = vpack.c.b16 %v3851, %v3845
        %v4056 = vpack.c.b16 %v3852, %v3846
        %v4057 = vpack.c.b16 %v3853, %v3847
        %v4058 = vpack.c.b16 %v3854, %v3848
        %v4059 = vpack.c.b16 %v3855, %v3849
        %v4060 = vpack.c.b16 %v3862, %v3856
        %v4061 = vpack.c.b16 %v3863, %v3857
        %v4062 = vpack.c.b16 %v3864, %v3858
        %v4063 = vpack.c.b16 %v3865, %v3859
        %v4064 = vpack.c.b16 %v3866, %v3860
        %v4065 = vpack.c.b16 %v3867, %v3861
        %v4066 = vpack.c.b16 %v3874, %v3868
        %v4067 = vpack.c.b16 %v3875, %v3869
        %v4068 = vpack.c.b16 %v3876, %v3870
        %v4069 = vpack.c.b16 %v3877, %v3871
        %v4070 = vpack.c.b16 %v3878, %v3872
        %v4071 = vpack.c.b16 %v3879, %v3873
        %4264 = vmatprep.subr.bf16.mxu0 %v3881
        %4265 = vmatpush1.bf16.msra.mxu0 %v3880
        %4266 = vmatprep.subr.bf16.mxu0 %v3887
        %4267 = vmatpush1.bf16.msra.mxu0 %v3886
        %4268 = vmatprep.subr.bf16.mxu0 %v3893
        %4269 = vmatpush1.bf16.msra.mxu0 %v3892
        %4270 = vmatprep.subr.bf16.mxu0 %v3899
        %4271 = vmatpush1.bf16.msra.mxu0 %v3898
        %4272 = vmatprep.subr.bf16.mxu0 %v3905
        %4273 = vmatpush1.bf16.msra.mxu0 %v3904
        %4274 = vmatprep.subr.bf16.mxu0 %v3911
        %4275 = vmatpush1.bf16.msra.mxu0 %v3910
        %4276 = vmatprep.subr.bf16.mxu0 %v3917
        %4277 = vmatpush1.bf16.msra.mxu0 %v3916
        %4278 = vmatprep.subr.bf16.mxu0 %v3923
        %4279 = vmatpush1.bf16.msra.mxu0 %v3922
        %4280 = vmatprep.subr.bf16.mxu0 %v3929
        %4281 = vmatpush1.bf16.msra.mxu0 %v3928
        %4282 = vmatprep.subr.bf16.mxu0 %v3935
        %4283 = vmatpush1.bf16.msra.mxu0 %v3934
        %4284 = vmatprep.subr.bf16.mxu0 %v3941
        %4285 = vmatpush1.bf16.msra.mxu0 %v3940
        %4286 = vmatprep.subr.bf16.mxu0 %v3947
        %4287 = vmatpush1.bf16.msra.mxu0 %v3946
        %4288 = vmatprep.subr.bf16.mxu0 %v3953
        %4289 = vmatpush1.bf16.msra.mxu0 %v3952
        %4290 = vmatprep.subr.bf16.mxu0 %v3959
        %4291 = vmatpush1.bf16.msra.mxu0 %v3958
        %4292 = vmatprep.subr.bf16.mxu0 %v3965
        %4293 = vmatpush1.bf16.msra.mxu0 %v3964
        %4294 = vmatprep.subr.bf16.mxu0 %v3971
        %4295 = vmatpush1.bf16.msra.mxu0 %v3970
        %4296 = vmatprep.mubr.bf16.mxu0 %v445
        %4297 = vmatmul.mubr.bf16.gmra.mrb[0].mxu0 %v444
        %v4298 = vpop.f32.mrb[0].mxu0
        %v4299 = vadd.f32 0.0, %v4298
        %v4300 = vpop.f32.mrb[0].mxu0
        %v4301 = vadd.f32 0.0, %v4300
        %v4302 = vpop.f32.mrb[0].mxu0
        %v4303 = vadd.f32 0.0, %v4302
        %v4304 = vpop.f32.mrb[0].mxu0
        %v4305 = vadd.f32 0.0, %v4304
        %4306 = vmatprep.mubr.bf16.mxu0 %v449
        %4307 = vmatmul.mubr.bf16.gmra.mrb[0].mxu0 %v448
        %v4308 = vpop.f32.mrb[0].mxu0
        %v4309 = vadd.f32 0.0, %v4308
        %v4310 = vpop.f32.mrb[0].mxu0
        %v4311 = vadd.f32 0.0, %v4310
        %v4312 = vpop.f32.mrb[0].mxu0
        %v4313 = vadd.f32 0.0, %v4312
        %v4314 = vpop.f32.mrb[0].mxu0
        %v4315 = vadd.f32 0.0, %v4314
        %4316 = vmatprep.mubr.bf16.mxu0 %v453
        %4317 = vmatmul.mubr.bf16.gmra.mrb[0].mxu0 %v452
        %v4318 = vpop.f32.mrb[0].mxu0
        %v4319 = vadd.f32 0.0, %v4318
        %v4320 = vpop.f32.mrb[0].mxu0
        %v4321 = vadd.f32 0.0, %v4320
        %v4322 = vpop.f32.mrb[0].mxu0
        %v4323 = vadd.f32 0.0, %v4322
        %v4324 = vpop.f32.mrb[0].mxu0
        %v4325 = vadd.f32 0.0, %v4324
        %4326 = vmatprep.mubr.bf16.mxu0 %v457
        %4327 = vmatmul.mubr.bf16.gmra.mrb[0].mxu0 %v456
        %v4328 = vpop.f32.mrb[0].mxu0
        %v4329 = vadd.f32 0.0, %v4328
        %v4330 = vpop.f32.mrb[0].mxu0
        %v4331 = vadd.f32 0.0, %v4330
        %v4332 = vpop.f32.mrb[0].mxu0
        %v4333 = vadd.f32 0.0, %v4332
        %v4334 = vpop.f32.mrb[0].mxu0
        %v4335 = vadd.f32 0.0, %v4334
        %4336 = vmatprep.mubr.bf16.mxu0 %v461
        %4337 = vmatmul.mubr.bf16.gmra.mrb[0].mxu0 %v460
        %v4338 = vpop.f32.mrb[0].mxu0
        %v4339 = vadd.f32 0.0, %v4338
        %v4340 = vpop.f32.mrb[0].mxu0
        %v4341 = vadd.f32 0.0, %v4340
        %v4342 = vpop.f32.mrb[0].mxu0
        %v4343 = vadd.f32 0.0, %v4342
        %v4344 = vpop.f32.mrb[0].mxu0
        %v4345 = vadd.f32 0.0, %v4344
        %4346 = vmatprep.mubr.bf16.mxu0 %v465
        %4347 = vmatmul.mubr.bf16.gmra.mrb[0].mxu0 %v464
        %v4348 = vpop.f32.mrb[0].mxu0
        %v4349 = vadd.f32 0.0, %v4348
        %v4350 = vpop.f32.mrb[0].mxu0
        %v4351 = vadd.f32 0.0, %v4350
        %v4352 = vpop.f32.mrb[0].mxu0
        %v4353 = vadd.f32 0.0, %v4352
        %v4354 = vpop.f32.mrb[0].mxu0
        %v4355 = vadd.f32 0.0, %v4354
        %4356 = vmatprep.mubr.bf16.mxu0 %v469
        %4357 = vmatmul.mubr.bf16.gmra.mrb[0].mxu0 %v468
        %v4358 = vpop.f32.mrb[0].mxu0
        %v4359 = vadd.f32 0.0, %v4358
        %v4360 = vpop.f32.mrb[0].mxu0
        %v4361 = vadd.f32 0.0, %v4360
        %v4362 = vpop.f32.mrb[0].mxu0
        %v4363 = vadd.f32 0.0, %v4362
        %v4364 = vpop.f32.mrb[0].mxu0
        %v4365 = vadd.f32 0.0, %v4364
        %4366 = vmatprep.mubr.bf16.mxu0 %v473
        %4367 = vmatmul.mubr.bf16.gmra.mrb[0].mxu0 %v472
        %v4368 = vpop.f32.mrb[0].mxu0
        %v4369 = vadd.f32 0.0, %v4368
        %v4370 = vpop.f32.mrb[0].mxu0
        %v4371 = vadd.f32 0.0, %v4370
        %v4372 = vpop.f32.mrb[0].mxu0
        %v4373 = vpop.f32.mrb[0].mxu0
        %4374 = vdwg.mxu0
        %4375 = vmatprep.subr.bf16.mxu0 %v3977
        %4376 = vmatpush1.bf16.msra.mxu0 %v3976
        %4377 = vmatprep.subr.bf16.mxu0 %v3983
        %4378 = vmatpush1.bf16.msra.mxu0 %v3982
        %4379 = vmatprep.subr.bf16.mxu0 %v3989
        %4380 = vmatpush1.bf16.msra.mxu0 %v3988
        %4381 = vmatprep.subr.bf16.mxu0 %v3995
        %4382 = vmatpush1.bf16.msra.mxu0 %v3994
        %4383 = vmatprep.subr.bf16.mxu0 %v4001
        %4384 = vmatpush1.bf16.msra.mxu0 %v4000
        %4385 = vmatprep.subr.bf16.mxu0 %v4007
        %4386 = vmatpush1.bf16.msra.mxu0 %v4006
        %4387 = vmatprep.subr.bf16.mxu0 %v4013
        %4388 = vmatpush1.bf16.msra.mxu0 %v4012
        %4389 = vmatprep.subr.bf16.mxu0 %v4019
        %4390 = vmatpush1.bf16.msra.mxu0 %v4018
        %4391 = vmatprep.subr.bf16.mxu0 %v4025
        %4392 = vmatpush1.bf16.msra.mxu0 %v4024
        %4393 = vmatprep.subr.bf16.mxu0 %v4031
        %4394 = vmatpush1.bf16.msra.mxu0 %v4030
        %4395 = vmatprep.subr.bf16.mxu0 %v4037
        %4396 = vmatpush1.bf16.msra.mxu0 %v4036
        %4397 = vmatprep.subr.bf16.mxu0 %v4043
        %4398 = vmatpush1.bf16.msra.mxu0 %v4042
        %4399 = vmatprep.subr.bf16.mxu0 %v4049
        %4400 = vmatpush1.bf16.msra.mxu0 %v4048
        %4401 = vmatprep.subr.bf16.mxu0 %v4055
        %4402 = vmatpush1.bf16.msra.mxu0 %v4054
        %4403 = vmatprep.subr.bf16.mxu0 %v4061
        %4404 = vmatpush1.bf16.msra.mxu0 %v4060
        %4405 = vmatprep.subr.bf16.mxu0 %v4067
        %4406 = vmatpush1.bf16.msra.mxu0 %v4066
        %4407 = vmatprep.mubr.bf16.mxu0 %v447
        %4408 = vmatmul.mubr.bf16.gmra.mrb[0].mxu0 %v446
        %v4409 = vpop.f32.mrb[0].mxu0
        %v4410 = vadd.f32 %v4299, %v4409
        %v4411 = vpop.f32.mrb[0].mxu0
        %v4412 = vadd.f32 %v4301, %v4411
        %v4413 = vpop.f32.mrb[0].mxu0
        %v4414 = vadd.f32 %v4303, %v4413
        %v4415 = vpop.f32.mrb[0].mxu0
        %v4416 = vadd.f32 %v4305, %v4415
        %4417 = vmatprep.mubr.bf16.mxu0 %v451
        %4418 = vmatmul.mubr.bf16.gmra.mrb[0].mxu0 %v450
        %v4419 = vpop.f32.mrb[0].mxu0
        %v4420 = vadd.f32 %v4309, %v4419
        %v4421 = vpop.f32.mrb[0].mxu0
        %v4422 = vadd.f32 %v4311, %v4421
        %v4423 = vpop.f32.mrb[0].mxu0
        %v4424 = vadd.f32 %v4313, %v4423
        %v4425 = vpop.f32.mrb[0].mxu0
        %v4426 = vadd.f32 %v4315, %v4425
        %4427 = vmatprep.mubr.bf16.mxu0 %v455
        %4428 = vmatmul.mubr.bf16.gmra.mrb[0].mxu0 %v454
        %v4429 = vpop.f32.mrb[0].mxu0
        %v4430 = vadd.f32 %v4319, %v4429
        %v4431 = vpop.f32.mrb[0].mxu0
        %v4432 = vadd.f32 %v4321, %v4431
        %v4433 = vpop.f32.mrb[0].mxu0
        %v4434 = vadd.f32 %v4323, %v4433
        %v4435 = vpop.f32.mrb[0].mxu0
        %v4436 = vadd.f32 %v4325, %v4435
        %4437 = vmatprep.mubr.bf16.mxu0 %v459
        %4438 = vmatmul.mubr.bf16.gmra.mrb[0].mxu0 %v458
        %v4439 = vpop.f32.mrb[0].mxu0
        %v4440 = vadd.f32 %v4329, %v4439
        %v4441 = vpop.f32.mrb[0].mxu0
        %v4442 = vadd.f32 %v4331, %v4441
        %v4443 = vpop.f32.mrb[0].mxu0
        %v4444 = vadd.f32 %v4333, %v4443
        %v4445 = vpop.f32.mrb[0].mxu0
        %v4446 = vadd.f32 %v4335, %v4445
        %4447 = vmatprep.mubr.bf16.mxu0 %v463
        %4448 = vmatmul.mubr.bf16.gmra.mrb[0].mxu0 %v462
        %v4449 = vpop.f32.mrb[0].mxu0
        %v4450 = vadd.f32 %v4339, %v4449
        %v4451 = vpop.f32.mrb[0].mxu0
        %v4452 = vadd.f32 %v4341, %v4451
        %v4453 = vpop.f32.mrb[0].mxu0
        %v4454 = vadd.f32 %v4343, %v4453
        %v4455 = vpop.f32.mrb[0].mxu0
        %v4456 = vadd.f32 %v4345, %v4455
        %4457 = vmatprep.mubr.bf16.mxu0 %v467
        %4458 = vmatmul.mubr.bf16.gmra.mrb[0].mxu0 %v466
        %v4459 = vpop.f32.mrb[0].mxu0
        %v4460 = vadd.f32 %v4349, %v4459
        %v4461 = vpop.f32.mrb[0].mxu0
        %v4462 = vadd.f32 %v4351, %v4461
        %v4463 = vpop.f32.mrb[0].mxu0
        %v4464 = vadd.f32 %v4353, %v4463
        %v4465 = vpop.f32.mrb[0].mxu0
        %v4466 = vadd.f32 %v4355, %v4465
        %4467 = vmatprep.mubr.bf16.mxu0 %v471
        %4468 = vmatmul.mubr.bf16.gmra.mrb[0].mxu0 %v470
        %v4469 = vpop.f32.mrb[0].mxu0
        %v4470 = vadd.f32 %v4359, %v4469
        %v4471 = vpop.f32.mrb[0].mxu0
        %v4472 = vadd.f32 %v4361, %v4471
        %v4473 = vpop.f32.mrb[0].mxu0
        %v4474 = vadd.f32 %v4363, %v4473
        %v4475 = vpop.f32.mrb[0].mxu0
        %v4476 = vadd.f32 %v4365, %v4475
        %4477 = vmatprep.mubr.bf16.mxu0 %v475
        %4478 = vmatmul.mubr.bf16.gmra.mrb[0].mxu0 %v474
        %v4479 = vpop.f32.mrb[0].mxu0
        %v4480 = vadd.f32 %v4369, %v4479
        %v4481 = vpop.f32.mrb[0].mxu0
        %v4482 = vadd.f32 %v4371, %v4481
        %v4483 = vpop.f32.mrb[0].mxu0
        %v4484 = vpop.f32.mrb[0].mxu0
        %4485 = vdwg.mxu0
        %4486 = vmatprep.subr.bf16.mxu0 %v3883
        %4487 = vmatpush1.bf16.msra.mxu0 %v3882
        %4488 = vmatprep.subr.bf16.mxu0 %v3889
        %4489 = vmatpush1.bf16.msra.mxu0 %v3888
        %4490 = vmatprep.subr.bf16.mxu0 %v3895
        %4491 = vmatpush1.bf16.msra.mxu0 %v3894
        %4492 = vmatprep.subr.bf16.mxu0 %v3901
        %4493 = vmatpush1.bf16.msra.mxu0 %v3900
        %4494 = vmatprep.subr.bf16.mxu0 %v3907
        %4495 = vmatpush1.bf16.msra.mxu0 %v3906
        %4496 = vmatprep.subr.bf16.mxu0 %v3913
        %4497 = vmatpush1.bf16.msra.mxu0 %v3912
        %4498 = vmatprep.subr.bf16.mxu0 %v3919
        %4499 = vmatpush1.bf16.msra.mxu0 %v3918
        %4500 = vmatprep.subr.bf16.mxu0 %v3925
        %4501 = vmatpush1.bf16.msra.mxu0 %v3924
        %4502 = vmatprep.subr.bf16.mxu0 %v3931
        %4503 = vmatpush1.bf16.msra.mxu0 %v3930
        %4504 = vmatprep.subr.bf16.mxu0 %v3937
        %4505 = vmatpush1.bf16.msra.mxu0 %v3936
        %4506 = vmatprep.subr.bf16.mxu0 %v3943
        %4507 = vmatpush1.bf16.msra.mxu0 %v3942
        %4508 = vmatprep.subr.bf16.mxu0 %v3949
        %4509 = vmatpush1.bf16.msra.mxu0 %v3948
        %4510 = vmatprep.subr.bf16.mxu0 %v3955
        %4511 = vmatpush1.bf16.msra.mxu0 %v3954
        %4512 = vmatprep.subr.bf16.mxu0 %v3961
        %4513 = vmatpush1.bf16.msra.mxu0 %v3960
        %4514 = vmatprep.subr.bf16.mxu0 %v3967
        %4515 = vmatpush1.bf16.msra.mxu0 %v3966
        %4516 = vmatprep.subr.bf16.mxu0 %v3973
        %4517 = vmatpush1.bf16.msra.mxu0 %v3972
        %4518 = vmatprep.mubr.bf16.mxu0 %v445
        %4519 = vmatmul.mubr.bf16.gmra.mrb[0].mxu0 %v444
        %v4520 = vpop.f32.mrb[0].mxu0
        %v4521 = vadd.f32 0.0, %v4520
        %v4522 = vpop.f32.mrb[0].mxu0
        %v4523 = vadd.f32 0.0, %v4522
        %v4524 = vpop.f32.mrb[0].mxu0
        %v4525 = vadd.f32 0.0, %v4524
        %v4526 = vpop.f32.mrb[0].mxu0
        %v4527 = vadd.f32 0.0, %v4526
        %4528 = vmatprep.mubr.bf16.mxu0 %v449
        %4529 = vmatmul.mubr.bf16.gmra.mrb[0].mxu0 %v448
        %v4530 = vpop.f32.mrb[0].mxu0
        %v4531 = vadd.f32 0.0, %v4530
        %v4532 = vpop.f32.mrb[0].mxu0
        %v4533 = vadd.f32 0.0, %v4532
        %v4534 = vpop.f32.mrb[0].mxu0
        %v4535 = vadd.f32 0.0, %v4534
        %v4536 = vpop.f32.mrb[0].mxu0
        %v4537 = vadd.f32 0.0, %v4536
        %4538 = vmatprep.mubr.bf16.mxu0 %v453
        %4539 = vmatmul.mubr.bf16.gmra.mrb[0].mxu0 %v452
        %v4540 = vpop.f32.mrb[0].mxu0
        %v4541 = vadd.f32 0.0, %v4540
        %v4542 = vpop.f32.mrb[0].mxu0
        %v4543 = vadd.f32 0.0, %v4542
        %v4544 = vpop.f32.mrb[0].mxu0
        %v4545 = vadd.f32 0.0, %v4544
        %v4546 = vpop.f32.mrb[0].mxu0
        %v4547 = vadd.f32 0.0, %v4546
        %4548 = vmatprep.mubr.bf16.mxu0 %v457
        %4549 = vmatmul.mubr.bf16.gmra.mrb[0].mxu0 %v456
        %v4550 = vpop.f32.mrb[0].mxu0
        %v4551 = vadd.f32 0.0, %v4550
        %v4552 = vpop.f32.mrb[0].mxu0
        %v4553 = vadd.f32 0.0, %v4552
        %v4554 = vpop.f32.mrb[0].mxu0
        %v4555 = vadd.f32 0.0, %v4554
        %v4556 = vpop.f32.mrb[0].mxu0
        %v4557 = vadd.f32 0.0, %v4556
        %4558 = vmatprep.mubr.bf16.mxu0 %v461
        %4559 = vmatmul.mubr.bf16.gmra.mrb[0].mxu0 %v460
        %v4560 = vpop.f32.mrb[0].mxu0
        %v4561 = vadd.f32 0.0, %v4560
        %v4562 = vpop.f32.mrb[0].mxu0
        %v4563 = vadd.f32 0.0, %v4562
        %v4564 = vpop.f32.mrb[0].mxu0
        %v4565 = vadd.f32 0.0, %v4564
        %v4566 = vpop.f32.mrb[0].mxu0
        %v4567 = vadd.f32 0.0, %v4566
        %4568 = vmatprep.mubr.bf16.mxu0 %v465
        %4569 = vmatmul.mubr.bf16.gmra.mrb[0].mxu0 %v464
        %v4570 = vpop.f32.mrb[0].mxu0
        %v4571 = vadd.f32 0.0, %v4570
        %v4572 = vpop.f32.mrb[0].mxu0
        %v4573 = vadd.f32 0.0, %v4572
        %v4574 = vpop.f32.mrb[0].mxu0
        %v4575 = vadd.f32 0.0, %v4574
        %v4576 = vpop.f32.mrb[0].mxu0
        %v4577 = vadd.f32 0.0, %v4576
        %4578 = vmatprep.mubr.bf16.mxu0 %v469
        %4579 = vmatmul.mubr.bf16.gmra.mrb[0].mxu0 %v468
        %v4580 = vpop.f32.mrb[0].mxu0
        %v4581 = vadd.f32 0.0, %v4580
        %v4582 = vpop.f32.mrb[0].mxu0
        %v4583 = vadd.f32 0.0, %v4582
        %v4584 = vpop.f32.mrb[0].mxu0
        %v4585 = vadd.f32 0.0, %v4584
        %v4586 = vpop.f32.mrb[0].mxu0
        %v4587 = vadd.f32 0.0, %v4586
        %4588 = vmatprep.mubr.bf16.mxu0 %v473
        %4589 = vmatmul.mubr.bf16.gmra.mrb[0].mxu0 %v472
        %v4590 = vpop.f32.mrb[0].mxu0
        %v4591 = vadd.f32 0.0, %v4590
        %v4592 = vpop.f32.mrb[0].mxu0
        %v4593 = vadd.f32 0.0, %v4592
        %v4594 = vpop.f32.mrb[0].mxu0
        %v4595 = vpop.f32.mrb[0].mxu0
        %4596 = vdwg.mxu0
        %4597 = vmatprep.subr.bf16.mxu0 %v3979
        %4598 = vmatpush1.bf16.msra.mxu0 %v3978
        %4599 = vmatprep.subr.bf16.mxu0 %v3985
        %4600 = vmatpush1.bf16.msra.mxu0 %v3984
        %4601 = vmatprep.subr.bf16.mxu0 %v3991
        %4602 = vmatpush1.bf16.msra.mxu0 %v3990
        %4603 = vmatprep.subr.bf16.mxu0 %v3997
        %4604 = vmatpush1.bf16.msra.mxu0 %v3996
        %4605 = vmatprep.subr.bf16.mxu0 %v4003
        %4606 = vmatpush1.bf16.msra.mxu0 %v4002
        %4607 = vmatprep.subr.bf16.mxu0 %v4009
        %4608 = vmatpush1.bf16.msra.mxu0 %v4008
        %4609 = vmatprep.subr.bf16.mxu0 %v4015
        %4610 = vmatpush1.bf16.msra.mxu0 %v4014
        %4611 = vmatprep.subr.bf16.mxu0 %v4021
        %4612 = vmatpush1.bf16.msra.mxu0 %v4020
        %4613 = vmatprep.subr.bf16.mxu0 %v4027
        %4614 = vmatpush1.bf16.msra.mxu0 %v4026
        %4615 = vmatprep.subr.bf16.mxu0 %v4033
        %4616 = vmatpush1.bf16.msra.mxu0 %v4032
        %4617 = vmatprep.subr.bf16.mxu0 %v4039
        %4618 = vmatpush1.bf16.msra.mxu0 %v4038
        %4619 = vmatprep.subr.bf16.mxu0 %v4045
        %4620 = vmatpush1.bf16.msra.mxu0 %v4044
        %4621 = vmatprep.subr.bf16.mxu0 %v4051
        %4622 = vmatpush1.bf16.msra.mxu0 %v4050
        %4623 = vmatprep.subr.bf16.mxu0 %v4057
        %4624 = vmatpush1.bf16.msra.mxu0 %v4056
        %4625 = vmatprep.subr.bf16.mxu0 %v4063
        %4626 = vmatpush1.bf16.msra.mxu0 %v4062
        %4627 = vmatprep.subr.bf16.mxu0 %v4069
        %4628 = vmatpush1.bf16.msra.mxu0 %v4068
        %4629 = vmatprep.mubr.bf16.mxu0 %v447
        %4630 = vmatmul.mubr.bf16.gmra.mrb[0].mxu0 %v446
        %v4631 = vpop.f32.mrb[0].mxu0
        %v4632 = vadd.f32 %v4521, %v4631
        %v4633 = vpop.f32.mrb[0].mxu0
        %v4634 = vadd.f32 %v4523, %v4633
        %v4635 = vpop.f32.mrb[0].mxu0
        %v4636 = vadd.f32 %v4525, %v4635
        %v4637 = vpop.f32.mrb[0].mxu0
        %v4638 = vadd.f32 %v4527, %v4637
        %4639 = vmatprep.mubr.bf16.mxu0 %v451
        %4640 = vmatmul.mubr.bf16.gmra.mrb[0].mxu0 %v450
        %v4641 = vpop.f32.mrb[0].mxu0
        %v4642 = vadd.f32 %v4531, %v4641
        %v4643 = vpop.f32.mrb[0].mxu0
        %v4644 = vadd.f32 %v4533, %v4643
        %v4645 = vpop.f32.mrb[0].mxu0
        %v4646 = vadd.f32 %v4535, %v4645
        %v4647 = vpop.f32.mrb[0].mxu0
        %v4648 = vadd.f32 %v4537, %v4647
        %4649 = vmatprep.mubr.bf16.mxu0 %v455
        %4650 = vmatmul.mubr.bf16.gmra.mrb[0].mxu0 %v454
        %v4651 = vpop.f32.mrb[0].mxu0
        %v4652 = vadd.f32 %v4541, %v4651
        %v4653 = vpop.f32.mrb[0].mxu0
        %v4654 = vadd.f32 %v4543, %v4653
        %v4655 = vpop.f32.mrb[0].mxu0
        %v4656 = vadd.f32 %v4545, %v4655
        %v4657 = vpop.f32.mrb[0].mxu0
        %v4658 = vadd.f32 %v4547, %v4657
        %4659 = vmatprep.mubr.bf16.mxu0 %v459
        %4660 = vmatmul.mubr.bf16.gmra.mrb[0].mxu0 %v458
        %v4661 = vpop.f32.mrb[0].mxu0
        %v4662 = vadd.f32 %v4551, %v4661
        %v4663 = vpop.f32.mrb[0].mxu0
        %v4664 = vadd.f32 %v4553, %v4663
        %v4665 = vpop.f32.mrb[0].mxu0
        %v4666 = vadd.f32 %v4555, %v4665
        %v4667 = vpop.f32.mrb[0].mxu0
        %v4668 = vadd.f32 %v4557, %v4667
        %4669 = vmatprep.mubr.bf16.mxu0 %v463
        %4670 = vmatmul.mubr.bf16.gmra.mrb[0].mxu0 %v462
        %v4671 = vpop.f32.mrb[0].mxu0
        %v4672 = vadd.f32 %v4561, %v4671
        %v4673 = vpop.f32.mrb[0].mxu0
        %v4674 = vadd.f32 %v4563, %v4673
        %v4675 = vpop.f32.mrb[0].mxu0
        %v4676 = vadd.f32 %v4565, %v4675
        %v4677 = vpop.f32.mrb[0].mxu0
        %v4678 = vadd.f32 %v4567, %v4677
        %4679 = vmatprep.mubr.bf16.mxu0 %v467
        %4680 = vmatmul.mubr.bf16.gmra.mrb[0].mxu0 %v466
        %v4681 = vpop.f32.mrb[0].mxu0
        %v4682 = vadd.f32 %v4571, %v4681
        %v4683 = vpop.f32.mrb[0].mxu0
        %v4684 = vadd.f32 %v4573, %v4683
        %v4685 = vpop.f32.mrb[0].mxu0
        %v4686 = vadd.f32 %v4575, %v4685
        %v4687 = vpop.f32.mrb[0].mxu0
        %v4688 = vadd.f32 %v4577, %v4687
        %4689 = vmatprep.mubr.bf16.mxu0 %v471
        %4690 = vmatmul.mubr.bf16.gmra.mrb[0].mxu0 %v470
        %v4691 = vpop.f32.mrb[0].mxu0
        %v4692 = vadd.f32 %v4581, %v4691
        %v4693 = vpop.f32.mrb[0].mxu0
        %v4694 = vadd.f32 %v4583, %v4693
        %v4695 = vpop.f32.mrb[0].mxu0
        %v4696 = vadd.f32 %v4585, %v4695
        %v4697 = vpop.f32.mrb[0].mxu0
        %v4698 = vadd.f32 %v4587, %v4697
        %4699 = vmatprep.mubr.bf16.mxu0 %v475
        %4700 = vmatmul.mubr.bf16.gmra.mrb[0].mxu0 %v474
        %v4701 = vpop.f32.mrb[0].mxu0
        %v4702 = vadd.f32 %v4591, %v4701
        %v4703 = vpop.f32.mrb[0].mxu0
        %v4704 = vadd.f32 %v4593, %v4703
        %v4705 = vpop.f32.mrb[0].mxu0
        %v4706 = vpop.f32.mrb[0].mxu0
        %4707 = vdwg.mxu0
        %4708 = vmatprep.subr.bf16.mxu0 %v3885
        %4709 = vmatpush1.bf16.msra.mxu0 %v3884
        %4710 = vmatprep.subr.bf16.mxu0 %v3891
        %4711 = vmatpush1.bf16.msra.mxu0 %v3890
        %4712 = vmatprep.subr.bf16.mxu0 %v3897
        %4713 = vmatpush1.bf16.msra.mxu0 %v3896
        %4714 = vmatprep.subr.bf16.mxu0 %v3903
        %4715 = vmatpush1.bf16.msra.mxu0 %v3902
        %4716 = vmatprep.subr.bf16.mxu0 %v3909
        %4717 = vmatpush1.bf16.msra.mxu0 %v3908
        %4718 = vmatprep.subr.bf16.mxu0 %v3915
        %4719 = vmatpush1.bf16.msra.mxu0 %v3914
        %4720 = vmatprep.subr.bf16.mxu0 %v3921
        %4721 = vmatpush1.bf16.msra.mxu0 %v3920
        %4722 = vmatprep.subr.bf16.mxu0 %v3927
        %4723 = vmatpush1.bf16.msra.mxu0 %v3926
        %4724 = vmatprep.subr.bf16.mxu0 %v3933
        %4725 = vmatpush1.bf16.msra.mxu0 %v3932
        %4726 = vmatprep.subr.bf16.mxu0 %v3939
        %4727 = vmatpush1.bf16.msra.mxu0 %v3938
        %4728 = vmatprep.subr.bf16.mxu0 %v3945
        %4729 = vmatpush1.bf16.msra.mxu0 %v3944
        %4730 = vmatprep.subr.bf16.mxu0 %v3951
        %4731 = vmatpush1.bf16.msra.mxu0 %v3950
        %4732 = vmatprep.subr.bf16.mxu0 %v3957
        %4733 = vmatpush1.bf16.msra.mxu0 %v3956
        %4734 = vmatprep.subr.bf16.mxu0 %v3963
        %4735 = vmatpush1.bf16.msra.mxu0 %v3962
        %4736 = vmatprep.subr.bf16.mxu0 %v3969
        %4737 = vmatpush1.bf16.msra.mxu0 %v3968
        %4738 = vmatprep.subr.bf16.mxu0 %v3975
        %4739 = vmatpush1.bf16.msra.mxu0 %v3974
        %4740 = vmatprep.mubr.bf16.mxu0 %v445
        %4741 = vmatmul.mubr.bf16.gmra.mrb[0].mxu0 %v444
        %v4742 = vpop.f32.mrb[0].mxu0
        %v4743 = vadd.f32 0.0, %v4742
        %v4744 = vpop.f32.mrb[0].mxu0
        %v4745 = vadd.f32 0.0, %v4744
        %v4746 = vpop.f32.mrb[0].mxu0
        %v4747 = vadd.f32 0.0, %v4746
        %v4748 = vpop.f32.mrb[0].mxu0
        %v4749 = vadd.f32 0.0, %v4748
        %4750 = vmatprep.mubr.bf16.mxu0 %v449
        %4751 = vmatmul.mubr.bf16.gmra.mrb[0].mxu0 %v448
        %v4752 = vpop.f32.mrb[0].mxu0
        %v4753 = vadd.f32 0.0, %v4752
        %v4754 = vpop.f32.mrb[0].mxu0
        %v4755 = vadd.f32 0.0, %v4754
        %v4756 = vpop.f32.mrb[0].mxu0
        %v4757 = vadd.f32 0.0, %v4756
        %v4758 = vpop.f32.mrb[0].mxu0
        %v4759 = vadd.f32 0.0, %v4758
        %4760 = vmatprep.mubr.bf16.mxu0 %v453
        %4761 = vmatmul.mubr.bf16.gmra.mrb[0].mxu0 %v452
        %v4762 = vpop.f32.mrb[0].mxu0
        %v4763 = vadd.f32 0.0, %v4762
        %v4764 = vpop.f32.mrb[0].mxu0
        %v4765 = vadd.f32 0.0, %v4764
        %v4766 = vpop.f32.mrb[0].mxu0
        %v4767 = vadd.f32 0.0, %v4766
        %v4768 = vpop.f32.mrb[0].mxu0
        %v4769 = vadd.f32 0.0, %v4768
        %4770 = vmatprep.mubr.bf16.mxu0 %v457
        %4771 = vmatmul.mubr.bf16.gmra.mrb[0].mxu0 %v456
        %v4772 = vpop.f32.mrb[0].mxu0
        %v4773 = vadd.f32 0.0, %v4772
        %v4774 = vpop.f32.mrb[0].mxu0
        %v4775 = vadd.f32 0.0, %v4774
        %v4776 = vpop.f32.mrb[0].mxu0
        %v4777 = vadd.f32 0.0, %v4776
        %v4778 = vpop.f32.mrb[0].mxu0
        %v4779 = vadd.f32 0.0, %v4778
        %4780 = vmatprep.mubr.bf16.mxu0 %v461
        %4781 = vmatmul.mubr.bf16.gmra.mrb[0].mxu0 %v460
        %v4782 = vpop.f32.mrb[0].mxu0
        %v4783 = vadd.f32 0.0, %v4782
        %v4784 = vpop.f32.mrb[0].mxu0
        %v4785 = vadd.f32 0.0, %v4784
        %v4786 = vpop.f32.mrb[0].mxu0
        %v4787 = vadd.f32 0.0, %v4786
        %v4788 = vpop.f32.mrb[0].mxu0
        %v4789 = vadd.f32 0.0, %v4788
        %4790 = vmatprep.mubr.bf16.mxu0 %v465
        %4791 = vmatmul.mubr.bf16.gmra.mrb[0].mxu0 %v464
        %v4792 = vpop.f32.mrb[0].mxu0
        %v4793 = vadd.f32 0.0, %v4792
        %v4794 = vpop.f32.mrb[0].mxu0
        %v4795 = vadd.f32 0.0, %v4794
        %v4796 = vpop.f32.mrb[0].mxu0
        %v4797 = vadd.f32 0.0, %v4796
        %v4798 = vpop.f32.mrb[0].mxu0
        %v4799 = vadd.f32 0.0, %v4798
        %4800 = vmatprep.mubr.bf16.mxu0 %v469
        %4801 = vmatmul.mubr.bf16.gmra.mrb[0].mxu0 %v468
        %v4802 = vpop.f32.mrb[0].mxu0
        %v4803 = vadd.f32 0.0, %v4802
        %v4804 = vpop.f32.mrb[0].mxu0
        %v4805 = vadd.f32 0.0, %v4804
        %v4806 = vpop.f32.mrb[0].mxu0
        %v4807 = vadd.f32 0.0, %v4806
        %v4808 = vpop.f32.mrb[0].mxu0
        %v4809 = vadd.f32 0.0, %v4808
        %4810 = vmatprep.mubr.bf16.mxu0 %v473
        %4811 = vmatmul.mubr.bf16.gmra.mrb[0].mxu0 %v472
        %v4812 = vpop.f32.mrb[0].mxu0
        %v4813 = vadd.f32 0.0, %v4812
        %v4814 = vpop.f32.mrb[0].mxu0
        %v4815 = vadd.f32 0.0, %v4814
        %v4816 = vpop.f32.mrb[0].mxu0
        %v4817 = vpop.f32.mrb[0].mxu0
        %4818 = vdwg.mxu0
        %4819 = vmatprep.subr.bf16.mxu0 %v3981
        %4820 = vmatpush1.bf16.msra.mxu0 %v3980
        %4821 = vmatprep.subr.bf16.mxu0 %v3987
        %4822 = vmatpush1.bf16.msra.mxu0 %v3986
        %4823 = vmatprep.subr.bf16.mxu0 %v3993
        %4824 = vmatpush1.bf16.msra.mxu0 %v3992
        %4825 = vmatprep.subr.bf16.mxu0 %v3999
        %4826 = vmatpush1.bf16.msra.mxu0 %v3998
        %4827 = vmatprep.subr.bf16.mxu0 %v4005
        %4828 = vmatpush1.bf16.msra.mxu0 %v4004
        %4829 = vmatprep.subr.bf16.mxu0 %v4011
        %4830 = vmatpush1.bf16.msra.mxu0 %v4010
        %4831 = vmatprep.subr.bf16.mxu0 %v4017
        %4832 = vmatpush1.bf16.msra.mxu0 %v4016
        %4833 = vmatprep.subr.bf16.mxu0 %v4023
        %4834 = vmatpush1.bf16.msra.mxu0 %v4022
        %4835 = vmatprep.subr.bf16.mxu0 %v4029
        %4836 = vmatpush1.bf16.msra.mxu0 %v4028
        %4837 = vmatprep.subr.bf16.mxu0 %v4035
        %4838 = vmatpush1.bf16.msra.mxu0 %v4034
        %4839 = vmatprep.subr.bf16.mxu0 %v4041
        %4840 = vmatpush1.bf16.msra.mxu0 %v4040
        %4841 = vmatprep.subr.bf16.mxu0 %v4047
        %4842 = vmatpush1.bf16.msra.mxu0 %v4046
        %4843 = vmatprep.subr.bf16.mxu0 %v4053
        %4844 = vmatpush1.bf16.msra.mxu0 %v4052
        %4845 = vmatprep.subr.bf16.mxu0 %v4059
        %4846 = vmatpush1.bf16.msra.mxu0 %v4058
        %4847 = vmatprep.subr.bf16.mxu0 %v4065
        %4848 = vmatpush1.bf16.msra.mxu0 %v4064
        %4849 = vmatprep.subr.bf16.mxu0 %v4071
        %4850 = vmatpush1.bf16.msra.mxu0 %v4070
        %4851 = vmatprep.mubr.bf16.mxu0 %v447
        %4852 = vmatmul.mubr.bf16.gmra.mrb[0].mxu0 %v446
        %v4853 = vpop.f32.mrb[0].mxu0
        %v4854 = vadd.f32 %v4743, %v4853
        %v4855 = vpop.f32.mrb[0].mxu0
        %v4856 = vadd.f32 %v4745, %v4855
        %v4857 = vpop.f32.mrb[0].mxu0
        %v4858 = vadd.f32 %v4747, %v4857
        %v4859 = vpop.f32.mrb[0].mxu0
        %v4860 = vadd.f32 %v4749, %v4859
        %4861 = vmatprep.mubr.bf16.mxu0 %v451
        %4862 = vmatmul.mubr.bf16.gmra.mrb[0].mxu0 %v450
        %v4863 = vpop.f32.mrb[0].mxu0
        %v4864 = vadd.f32 %v4753, %v4863
        %v4865 = vpop.f32.mrb[0].mxu0
        %v4866 = vadd.f32 %v4755, %v4865
        %v4867 = vpop.f32.mrb[0].mxu0
        %v4868 = vadd.f32 %v4757, %v4867
        %v4869 = vpop.f32.mrb[0].mxu0
        %v4870 = vadd.f32 %v4759, %v4869
        %4871 = vmatprep.mubr.bf16.mxu0 %v455
        %4872 = vmatmul.mubr.bf16.gmra.mrb[0].mxu0 %v454
        %v4873 = vpop.f32.mrb[0].mxu0
        %v4874 = vadd.f32 %v4763, %v4873
        %v4875 = vpop.f32.mrb[0].mxu0
        %v4876 = vadd.f32 %v4765, %v4875
        %v4877 = vpop.f32.mrb[0].mxu0
        %v4878 = vadd.f32 %v4767, %v4877
        %v4879 = vpop.f32.mrb[0].mxu0
        %v4880 = vadd.f32 %v4769, %v4879
        %4881 = vmatprep.mubr.bf16.mxu0 %v459
        %4882 = vmatmul.mubr.bf16.gmra.mrb[0].mxu0 %v458
        %v4883 = vpop.f32.mrb[0].mxu0
        %v4884 = vadd.f32 %v4773, %v4883
        %v4885 = vpop.f32.mrb[0].mxu0
        %v4886 = vadd.f32 %v4775, %v4885
        %v4887 = vpop.f32.mrb[0].mxu0
        %v4888 = vadd.f32 %v4777, %v4887
        %v4889 = vpop.f32.mrb[0].mxu0
        %v4890 = vadd.f32 %v4779, %v4889
        %4891 = vmatprep.mubr.bf16.mxu0 %v463
        %4892 = vmatmul.mubr.bf16.gmra.mrb[0].mxu0 %v462
        %v4893 = vpop.f32.mrb[0].mxu0
        %v4894 = vadd.f32 %v4783, %v4893
        %v4895 = vpop.f32.mrb[0].mxu0
        %v4896 = vadd.f32 %v4785, %v4895
        %v4897 = vpop.f32.mrb[0].mxu0
        %v4898 = vadd.f32 %v4787, %v4897
        %v4899 = vpop.f32.mrb[0].mxu0
        %v4900 = vadd.f32 %v4789, %v4899
        %4901 = vmatprep.mubr.bf16.mxu0 %v467
        %4902 = vmatmul.mubr.bf16.gmra.mrb[0].mxu0 %v466
        %v4903 = vpop.f32.mrb[0].mxu0
        %v4904 = vadd.f32 %v4793, %v4903
        %v4905 = vpop.f32.mrb[0].mxu0
        %v4906 = vadd.f32 %v4795, %v4905
        %v4907 = vpop.f32.mrb[0].mxu0
        %v4908 = vadd.f32 %v4797, %v4907
        %v4909 = vpop.f32.mrb[0].mxu0
        %v4910 = vadd.f32 %v4799, %v4909
        %4911 = vmatprep.mubr.bf16.mxu0 %v471
        %4912 = vmatmul.mubr.bf16.gmra.mrb[0].mxu0 %v470
        %v4913 = vpop.f32.mrb[0].mxu0
        %v4914 = vadd.f32 %v4803, %v4913
        %v4915 = vpop.f32.mrb[0].mxu0
        %v4916 = vadd.f32 %v4805, %v4915
        %v4917 = vpop.f32.mrb[0].mxu0
        %v4918 = vadd.f32 %v4807, %v4917
        %v4919 = vpop.f32.mrb[0].mxu0
        %v4920 = vadd.f32 %v4809, %v4919
        %4921 = vmatprep.mubr.bf16.mxu0 %v475
        %4922 = vmatmul.mubr.bf16.gmra.mrb[0].mxu0 %v474
        %v4923 = vpop.f32.mrb[0].mxu0
        %v4924 = vadd.f32 %v4813, %v4923
        %v4925 = vpop.f32.mrb[0].mxu0
        %v4926 = vadd.f32 %v4815, %v4925
        %v4927 = vpop.f32.mrb[0].mxu0
        %v4928 = vpop.f32.mrb[0].mxu0
        %4929 = vdwg.mxu0
        %v4930 = vadd.f32 %v2784, %v4410
        %v4931 = vadd.f32 %v2786, %v4412
        %v4932 = vadd.f32 %v3006, %v4632
        %v4933 = vadd.f32 %v3008, %v4634
        %v4934 = vadd.f32 %v3228, %v4854
        %v4935 = vadd.f32 %v3230, %v4856
        %v4936 = vadd.f32 %v2788, %v4414
        %v4937 = vadd.f32 %v2790, %v4416
        %v4938 = vadd.f32 %v3010, %v4636
        %v4939 = vadd.f32 %v3012, %v4638
        %v4940 = vadd.f32 %v3232, %v4858
        %v4941 = vadd.f32 %v3234, %v4860
        %v4942 = vadd.f32 %v2794, %v4420
        %v4943 = vadd.f32 %v2796, %v4422
        %v4944 = vadd.f32 %v3016, %v4642
        %v4945 = vadd.f32 %v3018, %v4644
        %v4946 = vadd.f32 %v3238, %v4864
        %v4947 = vadd.f32 %v3240, %v4866
        %v4948 = vadd.f32 %v2798, %v4424
        %v4949 = vadd.f32 %v2800, %v4426
        %v4950 = vadd.f32 %v3020, %v4646
        %v4951 = vadd.f32 %v3022, %v4648
        %v4952 = vadd.f32 %v3242, %v4868
        %v4953 = vadd.f32 %v3244, %v4870
        %v4954 = vadd.f32 %v2804, %v4430
        %v4955 = vadd.f32 %v2806, %v4432
        %v4956 = vadd.f32 %v3026, %v4652
        %v4957 = vadd.f32 %v3028, %v4654
        %v4958 = vadd.f32 %v3248, %v4874
        %v4959 = vadd.f32 %v3250, %v4876
        %v4960 = vadd.f32 %v2808, %v4434
        %v4961 = vadd.f32 %v2810, %v4436
        %v4962 = vadd.f32 %v3030, %v4656
        %v4963 = vadd.f32 %v3032, %v4658
        %v4964 = vadd.f32 %v3252, %v4878
        %v4965 = vadd.f32 %v3254, %v4880
        %v4966 = vadd.f32 %v2814, %v4440
        %v4967 = vadd.f32 %v2816, %v4442
        %v4968 = vadd.f32 %v3036, %v4662
        %v4969 = vadd.f32 %v3038, %v4664
        %v4970 = vadd.f32 %v3258, %v4884
        %v4971 = vadd.f32 %v3260, %v4886
        %v4972 = vadd.f32 %v2818, %v4444
        %v4973 = vadd.f32 %v2820, %v4446
        %v4974 = vadd.f32 %v3040, %v4666
        %v4975 = vadd.f32 %v3042, %v4668
        %v4976 = vadd.f32 %v3262, %v4888
        %v4977 = vadd.f32 %v3264, %v4890
        %v4978 = vadd.f32 %v2824, %v4450
        %v4979 = vadd.f32 %v2826, %v4452
        %v4980 = vadd.f32 %v3046, %v4672
        %v4981 = vadd.f32 %v3048, %v4674
        %v4982 = vadd.f32 %v3268, %v4894
        %v4983 = vadd.f32 %v3270, %v4896
        %v4984 = vadd.f32 %v2828, %v4454
        %v4985 = vadd.f32 %v2830, %v4456
        %v4986 = vadd.f32 %v3050, %v4676
        %v4987 = vadd.f32 %v3052, %v4678
        %v4988 = vadd.f32 %v3272, %v4898
        %v4989 = vadd.f32 %v3274, %v4900
        %v4990 = vadd.f32 %v2834, %v4460
        %v4991 = vadd.f32 %v2836, %v4462
        %v4992 = vadd.f32 %v3056, %v4682
        %v4993 = vadd.f32 %v3058, %v4684
        %v4994 = vadd.f32 %v3278, %v4904
        %v4995 = vadd.f32 %v3280, %v4906
        %v4996 = vadd.f32 %v2838, %v4464
        %v4997 = vadd.f32 %v2840, %v4466
        %v4998 = vadd.f32 %v3060, %v4686
        %v4999 = vadd.f32 %v3062, %v4688
        %v5000 = vadd.f32 %v3282, %v4908
        %v5001 = vadd.f32 %v3284, %v4910
        %v5002 = vadd.f32 %v2844, %v4470
        %v5003 = vadd.f32 %v2846, %v4472
        %v5004 = vadd.f32 %v3066, %v4692
        %v5005 = vadd.f32 %v3068, %v4694
        %v5006 = vadd.f32 %v3288, %v4914
        %v5007 = vadd.f32 %v3290, %v4916
        %v5008 = vadd.f32 %v2848, %v4474
        %v5009 = vadd.f32 %v2850, %v4476
        %v5010 = vadd.f32 %v3070, %v4696
        %v5011 = vadd.f32 %v3072, %v4698
        %v5012 = vadd.f32 %v3292, %v4918
        %v5013 = vadd.f32 %v3294, %v4920
        %v5014 = vadd.f32 %v2854, %v4480
        %v5015 = vadd.f32 %v2856, %v4482
        %v5016 = vadd.f32 %v3076, %v4702
        %v5017 = vadd.f32 %v3078, %v4704
        %v5018 = vadd.f32 %v3298, %v4924
        %v5019 = vadd.f32 %v3300, %v4926
        %v5020 = vmul.f32 %v4930, %v4930
        %v5021 = vmul.f32 %v4931, %v4931
        %v5022 = vmul.f32 %v4932, %v4932
        %v5023 = vmul.f32 %v4936, %v4936
        %v5024 = vmul.f32 %v4937, %v4937
        %v5025 = vmul.f32 %v4938, %v4938
        %v5026 = vmul.f32 %v4942, %v4942
        %v5027 = vmul.f32 %v4943, %v4943
        %v5028 = vmul.f32 %v4944, %v4944
        %v5029 = vmul.f32 %v4948, %v4948
        %v5030 = vmul.f32 %v4949, %v4949
        %v5031 = vmul.f32 %v4950, %v4950
        %v5032 = vmul.f32 %v4954, %v4954
        %v5033 = vmul.f32 %v4955, %v4955
        %v5034 = vmul.f32 %v4956, %v4956
        %v5035 = vmul.f32 %v4960, %v4960
        %v5036 = vmul.f32 %v4961, %v4961
        %v5037 = vmul.f32 %v4962, %v4962
        %v5038 = vmul.f32 %v4966, %v4966
        %v5039 = vmul.f32 %v4967, %v4967
        %v5040 = vmul.f32 %v4968, %v4968
        %v5041 = vmul.f32 %v4972, %v4972
        %v5042 = vmul.f32 %v4973, %v4973
        %v5043 = vmul.f32 %v4974, %v4974
        %v5044 = vmul.f32 %v4978, %v4978
        %v5045 = vmul.f32 %v4979, %v4979
        %v5046 = vmul.f32 %v4980, %v4980
        %v5047 = vmul.f32 %v4984, %v4984
        %v5048 = vmul.f32 %v4985, %v4985
        %v5049 = vmul.f32 %v4986, %v4986
        %v5050 = vmul.f32 %v4990, %v4990
        %v5051 = vmul.f32 %v4991, %v4991
        %v5052 = vmul.f32 %v4992, %v4992
        %v5053 = vmul.f32 %v4996, %v4996
        %v5054 = vmul.f32 %v4997, %v4997
        %v5055 = vmul.f32 %v4998, %v4998
        %v5056 = vmul.f32 %v5002, %v5002
        %v5057 = vmul.f32 %v5003, %v5003
        %v5058 = vmul.f32 %v5004, %v5004
        %v5059 = vmul.f32 %v5008, %v5008
        %v5060 = vmul.f32 %v5009, %v5009
        %v5061 = vmul.f32 %v5010, %v5010
        %v5062 = vmul.f32 %v5014, %v5014
        %v5063 = vmul.f32 %v5015, %v5015
        %v5064 = vmul.f32 %v5016, %v5016
        %v5065 = vmul.f32 %v4933, %v4933
        %v5066 = vmul.f32 %v4934, %v4934
        %v5067 = vmul.f32 %v4935, %v4935
        %v5068 = vmul.f32 %v4939, %v4939
        %v5069 = vmul.f32 %v4940, %v4940
        %v5070 = vmul.f32 %v4941, %v4941
        %v5071 = vmul.f32 %v4945, %v4945
        %v5072 = vmul.f32 %v4946, %v4946
        %v5073 = vmul.f32 %v4947, %v4947
        %v5074 = vmul.f32 %v4951, %v4951
        %v5075 = vmul.f32 %v4952, %v4952
        %v5076 = vmul.f32 %v4953, %v4953
        %v5077 = vmul.f32 %v4957, %v4957
        %v5078 = vmul.f32 %v4958, %v4958
        %v5079 = vmul.f32 %v4959, %v4959
        %v5080 = vmul.f32 %v4963, %v4963
        %v5081 = vmul.f32 %v4964, %v4964
        %v5082 = vmul.f32 %v4965, %v4965
        %v5083 = vmul.f32 %v4969, %v4969
        %v5084 = vmul.f32 %v4970, %v4970
        %v5085 = vmul.f32 %v4971, %v4971
        %v5086 = vmul.f32 %v4975, %v4975
        %v5087 = vmul.f32 %v4976, %v4976
        %v5088 = vmul.f32 %v4977, %v4977
        %v5089 = vmul.f32 %v4981, %v4981
        %v5090 = vmul.f32 %v4982, %v4982
        %v5091 = vmul.f32 %v4983, %v4983
        %v5092 = vmul.f32 %v4987, %v4987
        %v5093 = vmul.f32 %v4988, %v4988
        %v5094 = vmul.f32 %v4989, %v4989
        %v5095 = vmul.f32 %v4993, %v4993
        %v5096 = vmul.f32 %v4994, %v4994
        %v5097 = vmul.f32 %v4995, %v4995
        %v5098 = vmul.f32 %v4999, %v4999
        %v5099 = vmul.f32 %v5000, %v5000
        %v5100 = vmul.f32 %v5001, %v5001
        %v5101 = vmul.f32 %v5005, %v5005
        %v5102 = vmul.f32 %v5006, %v5006
        %v5103 = vmul.f32 %v5007, %v5007
        %v5104 = vmul.f32 %v5011, %v5011
        %v5105 = vmul.f32 %v5012, %v5012
        %v5106 = vmul.f32 %v5013, %v5013
        %v5107 = vmul.f32 %v5017, %v5017
        %v5108 = vmul.f32 %v5018, %v5018
        %v5109 = vmul.f32 %v5019, %v5019
        %v5110 = vadd.f32 %v5020, %v5065
        %v5111 = vadd.f32 %v5021, %v5066
        %v5112 = vadd.f32 %v5022, %v5067
        %v5113 = vadd.f32 %v5023, %v5068
        %v5114 = vadd.f32 %v5024, %v5069
        %v5115 = vadd.f32 %v5025, %v5070
        %v5116 = vadd.f32 %v5026, %v5071
        %v5117 = vadd.f32 %v5027, %v5072
        %v5118 = vadd.f32 %v5028, %v5073
        %v5119 = vadd.f32 %v5029, %v5074
        %v5120 = vadd.f32 %v5030, %v5075
        %v5121 = vadd.f32 %v5031, %v5076
        %v5122 = vadd.f32 %v5032, %v5077
        %v5123 = vadd.f32 %v5033, %v5078
        %v5124 = vadd.f32 %v5034, %v5079
        %v5125 = vadd.f32 %v5035, %v5080
        %v5126 = vadd.f32 %v5036, %v5081
        %v5127 = vadd.f32 %v5037, %v5082
        %v5128 = vadd.f32 %v5038, %v5083
        %v5129 = vadd.f32 %v5039, %v5084
        %v5130 = vadd.f32 %v5040, %v5085
        %v5131 = vadd.f32 %v5041, %v5086
        %v5132 = vadd.f32 %v5042, %v5087
        %v5133 = vadd.f32 %v5043, %v5088
        %v5134 = vadd.f32 %v5044, %v5089
        %v5135 = vadd.f32 %v5045, %v5090
        %v5136 = vadd.f32 %v5046, %v5091
        %v5137 = vadd.f32 %v5047, %v5092
        %v5138 = vadd.f32 %v5048, %v5093
        %v5139 = vadd.f32 %v5049, %v5094
        %v5140 = vadd.f32 %v5050, %v5095
        %v5141 = vadd.f32 %v5051, %v5096
        %v5142 = vadd.f32 %v5052, %v5097
        %v5143 = vadd.f32 %v5053, %v5098
        %v5144 = vadd.f32 %v5054, %v5099
        %v5145 = vadd.f32 %v5055, %v5100
        %v5146 = vadd.f32 %v5056, %v5101
        %v5147 = vadd.f32 %v5057, %v5102
        %v5148 = vadd.f32 %v5058, %v5103
        %v5149 = vadd.f32 %v5059, %v5104
        %v5150 = vadd.f32 %v5060, %v5105
        %v5151 = vadd.f32 %v5061, %v5106
        %v5152 = vadd.f32 %v5062, %v5107
        %v5153 = vadd.f32 %v5063, %v5108
        %v5154 = vadd.f32 %v5064, %v5109
        %v5155 = vld [vmem:[#allocation10] sm:$0xff]
        %v5156 = vld [vmem:[#allocation10 + $0x8] sm:$0xff]
        %v5157 = vld [vmem:[#allocation10 + $0x10] sm:$0xff]
        %v5158 = vld [vmem:[#allocation10 + $0x18] sm:$0xff]
        %v5159 = vld [vmem:[#allocation10 + $0x20] sm:$0xff]
        %v5160 = vld [vmem:[#allocation10 + $0x28] sm:$0xff]
        %v5161 = vld [vmem:[#allocation10 + $0x30] sm:$0xff]
        %v5162 = vld [vmem:[#allocation10 + $0x38] sm:$0xff]
        %v5163 = vld [vmem:[#allocation10 + $0x40] sm:$0xff]
        %v5164 = vld [vmem:[#allocation10 + $0x48] sm:$0xff]
        %v5165 = vld [vmem:[#allocation10 + $0x50] sm:$0xff]
        %v5166 = vld [vmem:[#allocation10 + $0x58] sm:$0xff]
        %v5167 = vld [vmem:[#allocation10 + $0x60] sm:$0xff]
        %v5168 = vld [vmem:[#allocation10 + $0x68] sm:$0xff]
        %v5169 = vld [vmem:[#allocation10 + $0x70] sm:$0xff]
        %v5170 = vld [vmem:[#allocation10 + $0x78] sm:$0xff]
        %v5171 = vld [vmem:[#allocation10 + $0x80] sm:$0xff]
        %v5172 = vld [vmem:[#allocation10 + $0x88] sm:$0xff]
        %v5173 = vld [vmem:[#allocation10 + $0x90] sm:$0xff]
        %v5174 = vld [vmem:[#allocation10 + $0x98] sm:$0xff]
        %v5175 = vld [vmem:[#allocation10 + $0xa0] sm:$0xff]
        %v5176 = vld [vmem:[#allocation10 + $0xa8] sm:$0xff]
        %v5177 = vld [vmem:[#allocation10 + $0xb0] sm:$0xff]
        %v5178 = vld [vmem:[#allocation10 + $0xb8] sm:$0xff]
        %v5179 = vld [vmem:[#allocation10 + $0xc0] sm:$0xff]
        %v5180 = vld [vmem:[#allocation10 + $0xc8] sm:$0xff]
        %v5181 = vld [vmem:[#allocation10 + $0xd0] sm:$0xff]
        %v5182 = vld [vmem:[#allocation10 + $0xd8] sm:$0xff]
        %v5183 = vld [vmem:[#allocation10 + $0xe0] sm:$0xff]
        %v5184 = vld [vmem:[#allocation10 + $0xe8] sm:$0xff]
        %v5185 = vld [vmem:[#allocation10 + $0xf0] sm:$0xff]
        %v5186 = vld [vmem:[#allocation10 + $0xf8] sm:$0xff]
        %v5187 = vld [vmem:[#allocation10 + $0x100] sm:$0xff]
        %v5188 = vld [vmem:[#allocation10 + $0x108] sm:$0xff]
        %v5189 = vld [vmem:[#allocation10 + $0x110] sm:$0xff]
        %v5190 = vld [vmem:[#allocation10 + $0x118] sm:$0xff]
        %v5191 = vld [vmem:[#allocation10 + $0x120] sm:$0xff]
        %v5192 = vld [vmem:[#allocation10 + $0x128] sm:$0xff]
        %v5193 = vld [vmem:[#allocation10 + $0x130] sm:$0xff]
        %v5194 = vld [vmem:[#allocation10 + $0x138] sm:$0xff]
        %v5195 = vld [vmem:[#allocation10 + $0x140] sm:$0xff]
        %v5196 = vld [vmem:[#allocation10 + $0x148] sm:$0xff]
        %v5197 = vld [vmem:[#allocation10 + $0x150] sm:$0xff]
        %v5198 = vld [vmem:[#allocation10 + $0x158] sm:$0xff]
        %v5199 = vld [vmem:[#allocation10 + $0x160] sm:$0xff]
        %v5200 = vld [vmem:[#allocation10 + $0x168] sm:$0xff]
        %v5201 = vld [vmem:[#allocation10 + $0x170] sm:$0xff]
        %v5202 = vld [vmem:[#allocation10 + $0x178] sm:$0xff]
        %5203 = vmatprep.subr.mxu0 0.0
        %5204 = vmatpush1.msra.mxu0 %v5155
        %5205 = vmatprep.subr.mxu0 0.0
        %5206 = vmatpush1.msra.mxu0 %v5156
        %5207 = vmatprep.subr.mxu0 0.0
        %5208 = vmatpush1.msra.mxu0 %v5157
        %5209 = vmatprep.subr.mxu0 0.0
        %5210 = vmatpush1.msra.mxu0 %v5158
        %5211 = vmatprep.subr.mxu0 0.0
        %5212 = vmatpush1.msra.mxu0 %v5159
        %5213 = vmatprep.subr.mxu0 0.0
        %5214 = vmatpush1.msra.mxu0 %v5160
        %5215 = vmatprep.subr.mxu0 0.0
        %5216 = vmatpush1.msra.mxu0 %v5161
        %5217 = vmatprep.subr.mxu0 0.0
        %5218 = vmatpush1.msra.mxu0 %v5162
        %5219 = vmatprep.subr.mxu0 0.0
        %5220 = vmatpush1.msra.mxu0 %v5163
        %5221 = vmatprep.subr.mxu0 0.0
        %5222 = vmatpush1.msra.mxu0 %v5164
        %5223 = vmatprep.subr.mxu0 0.0
        %5224 = vmatpush1.msra.mxu0 %v5165
        %5225 = vmatprep.subr.mxu0 0.0
        %5226 = vmatpush1.msra.mxu0 %v5166
        %5227 = vmatprep.subr.mxu0 0.0
        %5228 = vmatpush1.msra.mxu0 %v5167
        %5229 = vmatprep.subr.mxu0 0.0
        %5230 = vmatpush1.msra.mxu0 %v5168
        %5231 = vmatprep.subr.mxu0 0.0
        %5232 = vmatpush1.msra.mxu0 %v5169
        %5233 = vmatprep.subr.mxu0 0.0
        %5234 = vmatpush1.msra.mxu0 %v5170
        %5235 = vmatprep.subr.mxu0 0.0
        %5236 = vmatpush1.msra.mxu0 %v5171
        %5237 = vmatprep.subr.mxu0 0.0
        %5238 = vmatpush1.msra.mxu0 %v5172
        %5239 = vmatprep.subr.mxu0 0.0
        %5240 = vmatpush1.msra.mxu0 %v5173
        %5241 = vmatprep.subr.mxu0 0.0
        %5242 = vmatpush1.msra.mxu0 %v5174
        %5243 = vmatprep.subr.mxu0 0.0
        %5244 = vmatpush1.msra.mxu0 %v5175
        %5245 = vmatprep.subr.mxu0 0.0
        %5246 = vmatpush1.msra.mxu0 %v5176
        %5247 = vmatprep.subr.mxu0 0.0
        %5248 = vmatpush1.msra.mxu0 %v5177
        %5249 = vmatprep.subr.mxu0 0.0
        %5250 = vmatpush1.msra.mxu0 %v5178
        %5251 = vmatprep.subr.mxu0 0.0
        %5252 = vmatpush1.msra.mxu0 %v5179
        %5253 = vmatprep.subr.mxu0 0.0
        %5254 = vmatpush1.msra.mxu0 %v5180
        %5255 = vmatprep.subr.mxu0 0.0
        %5256 = vmatpush1.msra.mxu0 %v5181
        %5257 = vmatprep.subr.mxu0 0.0
        %5258 = vmatpush1.msra.mxu0 %v5182
        %5259 = vmatprep.subr.mxu0 0.0
        %5260 = vmatpush1.msra.mxu0 %v5183
        %5261 = vmatprep.subr.mxu0 0.0
        %5262 = vmatpush1.msra.mxu0 %v5184
        %5263 = vmatprep.subr.mxu0 0.0
        %5264 = vmatpush1.msra.mxu0 %v5185
        %5265 = vmatprep.subr.mxu0 0.0
        %5266 = vmatpush1.msra.mxu0 %v5186
        %5267 = vmatprep.mubr.f32.mxu0 %v5111
        %5268 = vmatmul.mubr.f32.gmra.mrb[0].mxu0 %v5110
        %v5269 = vpop.f32.mrb[0].mxu0
        %v5270 = vadd.f32 0.0, %v5269
        %v5271 = vpop.f32.mrb[0].mxu0
        %5272 = vmatprep.mubr.f32.mxu0 %v5114
        %5273 = vmatmul.mubr.f32.gmra.mrb[0].mxu0 %v5113
        %v5274 = vpop.f32.mrb[0].mxu0
        %v5275 = vadd.f32 0.0, %v5274
        %v5276 = vpop.f32.mrb[0].mxu0
        %5277 = vmatprep.mubr.f32.mxu0 %v5117
        %5278 = vmatmul.mubr.f32.gmra.mrb[0].mxu0 %v5116
        %v5279 = vpop.f32.mrb[0].mxu0
        %v5280 = vadd.f32 0.0, %v5279
        %v5281 = vpop.f32.mrb[0].mxu0
        %5282 = vmatprep.mubr.f32.mxu0 %v5120
        %5283 = vmatmul.mubr.f32.gmra.mrb[0].mxu0 %v5119
        %v5284 = vpop.f32.mrb[0].mxu0
        %v5285 = vadd.f32 0.0, %v5284
        %v5286 = vpop.f32.mrb[0].mxu0
        %5287 = vmatprep.mubr.f32.mxu0 %v5123
        %5288 = vmatmul.mubr.f32.gmra.mrb[0].mxu0 %v5122
        %v5289 = vpop.f32.mrb[0].mxu0
        %v5290 = vadd.f32 0.0, %v5289
        %v5291 = vpop.f32.mrb[0].mxu0
        %5292 = vmatprep.mubr.f32.mxu0 %v5126
        %5293 = vmatmul.mubr.f32.gmra.mrb[0].mxu0 %v5125
        %v5294 = vpop.f32.mrb[0].mxu0
        %v5295 = vadd.f32 0.0, %v5294
        %v5296 = vpop.f32.mrb[0].mxu0
        %5297 = vmatprep.mubr.f32.mxu0 %v5129
        %5298 = vmatmul.mubr.f32.gmra.mrb[0].mxu0 %v5128
        %v5299 = vpop.f32.mrb[0].mxu0
        %v5300 = vadd.f32 0.0, %v5299
        %v5301 = vpop.f32.mrb[0].mxu0
        %5302 = vmatprep.mubr.f32.mxu0 %v5132
        %5303 = vmatmul.mubr.f32.gmra.mrb[0].mxu0 %v5131
        %v5304 = vpop.f32.mrb[0].mxu0
        %v5305 = vadd.f32 0.0, %v5304
        %v5306 = vpop.f32.mrb[0].mxu0
        %5307 = vmatprep.mubr.f32.mxu0 %v5135
        %5308 = vmatmul.mubr.f32.gmra.mrb[0].mxu0 %v5134
        %v5309 = vpop.f32.mrb[0].mxu0
        %v5310 = vadd.f32 0.0, %v5309
        %v5311 = vpop.f32.mrb[0].mxu0
        %5312 = vmatprep.mubr.f32.mxu0 %v5138
        %5313 = vmatmul.mubr.f32.gmra.mrb[0].mxu0 %v5137
        %v5314 = vpop.f32.mrb[0].mxu0
        %v5315 = vadd.f32 0.0, %v5314
        %v5316 = vpop.f32.mrb[0].mxu0
        %5317 = vmatprep.mubr.f32.mxu0 %v5141
        %5318 = vmatmul.mubr.f32.gmra.mrb[0].mxu0 %v5140
        %v5319 = vpop.f32.mrb[0].mxu0
        %v5320 = vadd.f32 0.0, %v5319
        %v5321 = vpop.f32.mrb[0].mxu0
        %5322 = vmatprep.mubr.f32.mxu0 %v5144
        %5323 = vmatmul.mubr.f32.gmra.mrb[0].mxu0 %v5143
        %v5324 = vpop.f32.mrb[0].mxu0
        %v5325 = vadd.f32 0.0, %v5324
        %v5326 = vpop.f32.mrb[0].mxu0
        %5327 = vmatprep.mubr.f32.mxu0 %v5147
        %5328 = vmatmul.mubr.f32.gmra.mrb[0].mxu0 %v5146
        %v5329 = vpop.f32.mrb[0].mxu0
        %v5330 = vadd.f32 0.0, %v5329
        %v5331 = vpop.f32.mrb[0].mxu0
        %5332 = vmatprep.mubr.f32.mxu0 %v5150
        %5333 = vmatmul.mubr.f32.gmra.mrb[0].mxu0 %v5149
        %v5334 = vpop.f32.mrb[0].mxu0
        %v5335 = vadd.f32 0.0, %v5334
        %v5336 = vpop.f32.mrb[0].mxu0
        %5337 = vmatprep.mubr.f32.mxu0 %v5153
        %5338 = vmatmul.mubr.f32.gmra.mrb[0].mxu0 %v5152
        %v5339 = vpop.f32.mrb[0].mxu0
        %v5340 = vadd.f32 0.0, %v5339
        %v5341 = vpop.f32.mrb[0].mxu0
        %5342 = vdwg.mxu0
        %5343 = vmatprep.subr.mxu0 0.0
        %5344 = vmatpush1.msra.mxu0 %v5187
        %5345 = vmatprep.subr.mxu0 0.0
        %5346 = vmatpush1.msra.mxu0 %v5188
        %5347 = vmatprep.subr.mxu0 0.0
        %5348 = vmatpush1.msra.mxu0 %v5189
        %5349 = vmatprep.subr.mxu0 0.0
        %5350 = vmatpush1.msra.mxu0 %v5190
        %5351 = vmatprep.subr.mxu0 0.0
        %5352 = vmatpush1.msra.mxu0 %v5191
        %5353 = vmatprep.subr.mxu0 0.0
        %5354 = vmatpush1.msra.mxu0 %v5192
        %5355 = vmatprep.subr.mxu0 0.0
        %5356 = vmatpush1.msra.mxu0 %v5193
        %5357 = vmatprep.subr.mxu0 0.0
        %5358 = vmatpush1.msra.mxu0 %v5194
        %5359 = vmatprep.subr.mxu0 0.0
        %5360 = vmatpush1.msra.mxu0 %v5195
        %5361 = vmatprep.subr.mxu0 0.0
        %5362 = vmatpush1.msra.mxu0 %v5196
        %5363 = vmatprep.subr.mxu0 0.0
        %5364 = vmatpush1.msra.mxu0 %v5197
        %5365 = vmatprep.subr.mxu0 0.0
        %5366 = vmatpush1.msra.mxu0 %v5198
        %5367 = vmatprep.subr.mxu0 0.0
        %5368 = vmatpush1.msra.mxu0 %v5199
        %5369 = vmatprep.subr.mxu0 0.0
        %5370 = vmatpush1.msra.mxu0 %v5200
        %5371 = vmatprep.subr.mxu0 0.0
        %5372 = vmatpush1.msra.mxu0 %v5201
        %5373 = vmatprep.subr.mxu0 0.0
        %5374 = vmatpush1.msra.mxu0 %v5202
        %5375 = vmatprep.subr.mxu0 0.0
        %5376 = vmatpush1.msra.mxu0 0.0
        %5377 = vmatprep.subr.mxu0 0.0
        %5378 = vmatpush1.msra.mxu0 0.0
        %5379 = vmatprep.subr.mxu0 0.0
        %5380 = vmatpush1.msra.mxu0 0.0
        %5381 = vmatprep.subr.mxu0 0.0
        %5382 = vmatpush1.msra.mxu0 0.0
        %5383 = vmatprep.subr.mxu0 0.0
        %5384 = vmatpush1.msra.mxu0 0.0
        %5385 = vmatprep.subr.mxu0 0.0
        %5386 = vmatpush1.msra.mxu0 0.0
        %5387 = vmatprep.subr.mxu0 0.0
        %5388 = vmatpush1.msra.mxu0 0.0
        %5389 = vmatprep.subr.mxu0 0.0
        %5390 = vmatpush1.msra.mxu0 0.0
        %5391 = vmatprep.subr.mxu0 0.0
        %5392 = vmatpush1.msra.mxu0 0.0
        %5393 = vmatprep.subr.mxu0 0.0
        %5394 = vmatpush1.msra.mxu0 0.0
        %5395 = vmatprep.subr.mxu0 0.0
        %5396 = vmatpush1.msra.mxu0 0.0
        %5397 = vmatprep.subr.mxu0 0.0
        %5398 = vmatpush1.msra.mxu0 0.0
        %5399 = vmatprep.subr.mxu0 0.0
        %5400 = vmatpush1.msra.mxu0 0.0
        %5401 = vmatprep.subr.mxu0 0.0
        %5402 = vmatpush1.msra.mxu0 0.0
        %5403 = vmatprep.subr.mxu0 0.0
        %5404 = vmatpush1.msra.mxu0 0.0
        %5405 = vmatprep.subr.mxu0 0.0
        %5406 = vmatpush1.msra.mxu0 0.0
        %5407 = vmatprep.mubr.f32.mxu0 0.0
        %5408 = vmatmul.mubr.f32.gmra.mrb[0].mxu0 %v5112
        %v5409 = vpop.f32.mrb[0].mxu0
        %v5410 = vadd.f32 %v5270, %v5409
        %v5411 = vpop.f32.mrb[0].mxu0
        %5412 = vmatprep.mubr.f32.mxu0 0.0
        %5413 = vmatmul.mubr.f32.gmra.mrb[0].mxu0 %v5115
        %v5414 = vpop.f32.mrb[0].mxu0
        %v5415 = vadd.f32 %v5275, %v5414
        %v5416 = vpop.f32.mrb[0].mxu0
        %5417 = vmatprep.mubr.f32.mxu0 0.0
        %5418 = vmatmul.mubr.f32.gmra.mrb[0].mxu0 %v5118
        %v5419 = vpop.f32.mrb[0].mxu0
        %v5420 = vadd.f32 %v5280, %v5419
        %v5421 = vpop.f32.mrb[0].mxu0
        %5422 = vmatprep.mubr.f32.mxu0 0.0
        %5423 = vmatmul.mubr.f32.gmra.mrb[0].mxu0 %v5121
        %v5424 = vpop.f32.mrb[0].mxu0
        %v5425 = vadd.f32 %v5285, %v5424
        %v5426 = vpop.f32.mrb[0].mxu0
        %5427 = vmatprep.mubr.f32.mxu0 0.0
        %5428 = vmatmul.mubr.f32.gmra.mrb[0].mxu0 %v5124
        %v5429 = vpop.f32.mrb[0].mxu0
        %v5430 = vadd.f32 %v5290, %v5429
        %v5431 = vpop.f32.mrb[0].mxu0
        %5432 = vmatprep.mubr.f32.mxu0 0.0
        %5433 = vmatmul.mubr.f32.gmra.mrb[0].mxu0 %v5127
        %v5434 = vpop.f32.mrb[0].mxu0
        %v5435 = vadd.f32 %v5295, %v5434
        %v5436 = vpop.f32.mrb[0].mxu0
        %5437 = vmatprep.mubr.f32.mxu0 0.0
        %5438 = vmatmul.mubr.f32.gmra.mrb[0].mxu0 %v5130
        %v5439 = vpop.f32.mrb[0].mxu0
        %v5440 = vadd.f32 %v5300, %v5439
        %v5441 = vpop.f32.mrb[0].mxu0
        %5442 = vmatprep.mubr.f32.mxu0 0.0
        %5443 = vmatmul.mubr.f32.gmra.mrb[0].mxu0 %v5133
        %v5444 = vpop.f32.mrb[0].mxu0
        %v5445 = vadd.f32 %v5305, %v5444
        %v5446 = vpop.f32.mrb[0].mxu0
        %5447 = vmatprep.mubr.f32.mxu0 0.0
        %5448 = vmatmul.mubr.f32.gmra.mrb[0].mxu0 %v5136
        %v5449 = vpop.f32.mrb[0].mxu0
        %v5450 = vadd.f32 %v5310, %v5449
        %v5451 = vpop.f32.mrb[0].mxu0
        %5452 = vmatprep.mubr.f32.mxu0 0.0
        %5453 = vmatmul.mubr.f32.gmra.mrb[0].mxu0 %v5139
        %v5454 = vpop.f32.mrb[0].mxu0
        %v5455 = vadd.f32 %v5315, %v5454
        %v5456 = vpop.f32.mrb[0].mxu0
        %5457 = vmatprep.mubr.f32.mxu0 0.0
        %5458 = vmatmul.mubr.f32.gmra.mrb[0].mxu0 %v5142
        %v5459 = vpop.f32.mrb[0].mxu0
        %v5460 = vadd.f32 %v5320, %v5459
        %v5461 = vpop.f32.mrb[0].mxu0
        %5462 = vmatprep.mubr.f32.mxu0 0.0
        %5463 = vmatmul.mubr.f32.gmra.mrb[0].mxu0 %v5145
        %v5464 = vpop.f32.mrb[0].mxu0
        %v5465 = vadd.f32 %v5325, %v5464
        %v5466 = vpop.f32.mrb[0].mxu0
        %5467 = vmatprep.mubr.f32.mxu0 0.0
        %5468 = vmatmul.mubr.f32.gmra.mrb[0].mxu0 %v5148
        %v5469 = vpop.f32.mrb[0].mxu0
        %v5470 = vadd.f32 %v5330, %v5469
        %v5471 = vpop.f32.mrb[0].mxu0
        %5472 = vmatprep.mubr.f32.mxu0 0.0
        %5473 = vmatmul.mubr.f32.gmra.mrb[0].mxu0 %v5151
        %v5474 = vpop.f32.mrb[0].mxu0
        %v5475 = vadd.f32 %v5335, %v5474
        %v5476 = vpop.f32.mrb[0].mxu0
        %5477 = vmatprep.mubr.f32.mxu0 0.0
        %5478 = vmatmul.mubr.f32.gmra.mrb[0].mxu0 %v5154
        %v5479 = vpop.f32.mrb[0].mxu0
        %v5480 = vadd.f32 %v5340, %v5479
        %v5481 = vpop.f32.mrb[0].mxu0
        %5482 = vdwg.mxu0
        %v5483 = vmax.f32 %v5410, 1e-10
        %v5484 = vmax.f32 %v5415, 1e-10
        %v5485 = vmax.f32 %v5420, 1e-10
        %v5486 = vmax.f32 %v5425, 1e-10
        %v5487 = vmax.f32 %v5430, 1e-10
        %v5488 = vmax.f32 %v5435, 1e-10
        %v5489 = vmax.f32 %v5440, 1e-10
        %v5490 = vmax.f32 %v5445, 1e-10
        %v5491 = vmax.f32 %v5450, 1e-10
        %v5492 = vmax.f32 %v5455, 1e-10
        %v5493 = vmax.f32 %v5460, 1e-10
        %v5494 = vmax.f32 %v5465, 1e-10
        %v5495 = vmax.f32 %v5470, 1e-10
        %v5496 = vmax.f32 %v5475, 1e-10
        %v5497 = vmax.f32 %v5480, 1e-10
        %v5498 = vlog2.pop %v5483
        %v5499 = vmul.f32 %v5498, 0.6931472
        %v5500 = vlog2.pop %v5484
        %v5501 = vmul.f32 %v5500, 0.6931472
        %v5502 = vlog2.pop %v5485
        %v5503 = vmul.f32 %v5502, 0.6931472
        %v5504 = vlog2.pop %v5486
        %v5505 = vmul.f32 %v5504, 0.6931472
        %v5506 = vlog2.pop %v5487
        %v5507 = vmul.f32 %v5506, 0.6931472
        %v5508 = vlog2.pop %v5488
        %v5509 = vmul.f32 %v5508, 0.6931472
        %v5510 = vlog2.pop %v5489
        %v5511 = vmul.f32 %v5510, 0.6931472
        %v5512 = vlog2.pop %v5490
        %v5513 = vmul.f32 %v5512, 0.6931472
        %v5514 = vlog2.pop %v5491
        %v5515 = vmul.f32 %v5514, 0.6931472
        %v5516 = vlog2.pop %v5492
        %v5517 = vmul.f32 %v5516, 0.6931472
        %v5518 = vlog2.pop %v5493
        %v5519 = vmul.f32 %v5518, 0.6931472
        %v5520 = vlog2.pop %v5494
        %v5521 = vmul.f32 %v5520, 0.6931472
        %v5522 = vlog2.pop %v5495
        %v5523 = vmul.f32 %v5522, 0.6931472
        %v5524 = vlog2.pop %v5496
        %v5525 = vmul.f32 %v5524, 0.6931472
        %v5526 = vlog2.pop %v5497
        %v5527 = vmul.f32 %v5526, 0.6931472
        %v5528 = vmul.f32 %v5499, 4.3429446
        %v5529 = vmul.f32 %v5501, 4.3429446
        %v5530 = vmul.f32 %v5503, 4.3429446
        %v5531 = vmul.f32 %v5505, 4.3429446
        %v5532 = vmul.f32 %v5507, 4.3429446
        %v5533 = vmul.f32 %v5509, 4.3429446
        %v5534 = vmul.f32 %v5511, 4.3429446
        %v5535 = vmul.f32 %v5513, 4.3429446
        %v5536 = vmul.f32 %v5515, 4.3429446
        %v5537 = vmul.f32 %v5517, 4.3429446
        %v5538 = vmul.f32 %v5519, 4.3429446
        %v5539 = vmul.f32 %v5521, 4.3429446
        %v5540 = vmul.f32 %v5523, 4.3429446
        %v5541 = vmul.f32 %v5525, 4.3429446
        %v5542 = vmul.f32 %v5527, 4.3429446
        %v5543 = vmul.f32 %v5528, 0.999995
        %v5544 = vmul.f32 %v5529, 0.999995
        %v5545 = vmul.f32 %v5530, 0.999995
        %v5546 = vmul.f32 %v5531, 0.999995
        %v5547 = vmul.f32 %v5532, 0.999995
        %v5548 = vmul.f32 %v5533, 0.999995
        %v5549 = vmul.f32 %v5534, 0.999995
        %v5550 = vmul.f32 %v5535, 0.999995
        %v5551 = vmul.f32 %v5536, 0.999995
        %v5552 = vmul.f32 %v5537, 0.999995
        %v5553 = vmul.f32 %v5538, 0.999995
        %v5554 = vmul.f32 %v5539, 0.999995
        %v5555 = vmul.f32 %v5540, 0.999995
        %v5556 = vmul.f32 %v5541, 0.999995
        %v5557 = vmul.f32 %v5542, 0.999995
        %5558 = vst [vmem:[%s299] sm:$0xff] %v5543
        %5559 = vst [vmem:[%s299 + $0x8] sm:$0xff] %v5544
        %5560 = vst [vmem:[%s299 + $0x10] sm:$0xff] %v5545
        %5561 = vst [vmem:[%s299 + $0x18] sm:$0xff] %v5546
        %5562 = vst [vmem:[%s299 + $0x20] sm:$0xff] %v5547
        %5563 = vst [vmem:[%s299 + $0x28] sm:$0xff] %v5548
        %5564 = vst [vmem:[%s299 + $0x30] sm:$0xff] %v5549
        %5565 = vst [vmem:[%s299 + $0x38] sm:$0xff] %v5550
        %5566 = vst [vmem:[%s299 + $0x40] sm:$0xff] %v5551
        %5567 = vst [vmem:[%s299 + $0x48] sm:$0xff] %v5552
        %5568 = vst [vmem:[%s299 + $0x50] sm:$0xff] %v5553
        %5569 = vst [vmem:[%s299 + $0x58] sm:$0xff] %v5554
        %5570 = vst [vmem:[%s299 + $0x60] sm:$0xff] %v5555
        %5571 = vst [vmem:[%s299 + $0x68] sm:$0xff] %v5556
        %5572 = vst [vmem:[%s299 + $0x70] sm:$0xff] %v5557
        %s5573 = sand.u32 %s142, 1
        %s5574 = scalar_lea.sflag [#allocation4], %s5573
        %s5575 = sand.u32 %s142, 1
        %s5576 = smul.addr %s5575, 120
        %s5577 = scalar_lea.vmem [#allocation11], %s5576
        // Predicated region
        $region61: #{tpu_custom_call.1} parent=39 // pred_check
          %p5578 = pneg %p152
        $region62: #{tpu_custom_call.1} parent=39 // pred_check_branch
          %5580 = sbr.rel (%p5578) target = $region64
        $region63: #{tpu_custom_call.1} parent=39 // pred_region
          %s5581 = smul.u32 15, %s24
          %s5583 = ssub.s32 1920, 1920
          %5584 = vsyncadd %s5574, %s5583
          %s5585 = smul.addr %s5581, 128
          %s5586 = scalar_lea.hbm %s5, %s5585
          %s5587 = sshll.u32 %s5577, 4
          %s5588 = int_to_ptr.vmem [resolvable:$true] %s5587
          %5593 = dma.vmem_to_hbm [thread:$0]  %s5588, 1920, %s5586, %s5574, 128, 128, 8
        $region64: #{tpu_custom_call.1} parent=39 // pred_fallthru
          _
      $region40: #{tpu_custom_call.1} parent=5 // pred_fallthru
        _
      %p5594 = scmp.le.s32.totalorder 2, %s19
      // Predicated region
      $region65: #{tpu_custom_call.1} parent=5 // pred_check
        %p5595 = pneg %p5594
      $region66: #{tpu_custom_call.1} parent=5 // pred_check_branch
        %5597 = sbr.rel (%p5595) target = $region68
      $region67: #{tpu_custom_call.1} parent=5 // pred_region
        %s5598 = ssub.s32 %s19, 2
        // Predicated region
        $region69: #{tpu_custom_call.1} parent=67 // pred_check
          %p5599 = pneg %p158
        $region70: #{tpu_custom_call.1} parent=67 // pred_check_branch
          %5601 = sbr.rel (%p5599) target = $region72
        $region71: #{tpu_custom_call.1} parent=67 // pred_region
          %s5602 = sand.u32 %s143, 1
          %s5603 = scalar_lea.sflag [#allocation4], %s5602
          %s5604 = sand.u32 %s143, 1
          %s5605 = smul.addr %s5604, 120
          %s5606 = scalar_lea.vmem [#allocation11], %s5605
          %5607 = dma.done %s5603, 1920
        $region72: #{tpu_custom_call.1} parent=67 // pred_fallthru
          _
      $region68: #{tpu_custom_call.1} parent=5 // pred_fallthru
        _
    $region6: #{tpu_custom_call.1} parent=1 // loop_footer
      %s23 = sadd.s32 1, %s19
    $region7: #{tpu_custom_call.1} parent=1 // loop_footer_branch
      %18 = sbr.rel target = $region3
    $region8: #{tpu_custom_call.1} parent=1 // loop_exit
      _
    %5608 = vsyncpa [#allocation3], 1
    %s5609 = scalar_lea.sflag [#allocation3], 1
    %5610 = vsyncpa %s5609, 1
    %5611 = vsyncpa [#allocation6], 1
    %5612 = vsyncpa [#allocation9], 1
    %5613 = vsyncpa [#allocation4], 1
    %s5614 = scalar_lea.sflag [#allocation4], 1
    %5615 = vsyncpa %s5614, 1

</llo_original>
